<compile_context>
chip_gen: v5e
topology: v5e:2x2
jax: 0.10.0
libtpu: 0.0.40
codegen_flags: <defaults>
</compile_context>

<pallas_src>
import functools

import jax
import jax.numpy as jnp
from jax.experimental import pallas as pl
from jax.experimental.pallas import tpu as pltpu

FEATURE = 64
EPS = 1e-5
_HALO = 128        # lane-aligned zero halo (>= W + 1) so concat offsets stay aligned
_CIN_ALIGN = 16    # pad input channels to a multiple of 16 (bf16 sublane tile)


def _resblock_kernel(x_ref, w1_ref, w2_ref, w3_ref, w4_ref, w5x_ref, w5r_ref,
                     b5_ref, o_ref, *, H, W):
    """Fused ResBlock for one batch element.

    x_ref  : (1, Cin_pad, H*W)  bf16  channels on sublanes, flat spatial on lanes
    w*_ref : (Cout, 9*Cin)      bf16  im2col-packed conv weights (tap-major, ch-minor)
    b5_ref : (Cout, 1)          f32   conv5 bias
    o_ref  : (1, Cout, H*W)     f32   lane-dense output
    """
    HW = H * W
    col = jax.lax.broadcasted_iota(jnp.int32, (1, HW), 1) % W
    m_left = col >= 1           # column (w - 1) exists
    m_right = col <= W - 2      # column (w + 1) exists

    def im2col(a):
        """(C, HW) bf16 -> (9*C, HW) bf16 packed 3x3 patches (zero padding = 1)."""
        c = a.shape[0]
        halo = jnp.zeros((c, _HALO), a.dtype)
        ap = jnp.concatenate([halo, a, halo], axis=1)     # lane-aligned concat
        taps = []
        for dy in (-1, 0, 1):
            for dx in (-1, 0, 1):
                s = dy * W + dx
                t = ap[:, _HALO + s:_HALO + s + HW]       # shift along flat spatial
                if dx == -1:
                    t = jnp.where(m_left, t, jnp.zeros_like(t))
                elif dx == 1:
                    t = jnp.where(m_right, t, jnp.zeros_like(t))
                taps.append(t)
        return jnp.concatenate(taps, axis=0)              # sublane-aligned concat

    def conv(patches, w_ref):
        # (Cout, K) @ (K, HW): bf16 operands, f32 accumulation on the MXU.
        return jax.lax.dot_general(
            w_ref[...], patches,
            dimension_numbers=(((1,), (0,)), ((), ())),
            preferred_element_type=jnp.float32)

    def inst_norm_relu(y):
        # InstanceNorm2d: per-channel stats over the spatial (lane) axis, one pass, f32.
        mean = jnp.mean(y, axis=1, keepdims=True)
        var = jnp.maximum(jnp.mean(y * y, axis=1, keepdims=True) - mean * mean, 0.0)
        y = (y - mean) * jax.lax.rsqrt(var + EPS)
        return jnp.maximum(y, 0.0).astype(jnp.bfloat16)

    x = x_ref[0]                                          # (Cin_pad, HW) bf16
    px = im2col(x)                                        # reused by conv1 and conv5
    # conv1..conv4 biases omitted: a per-channel bias cancels in InstanceNorm.
    r = inst_norm_relu(conv(px, w1_ref))
    r = inst_norm_relu(conv(im2col(r), w2_ref))
    r = inst_norm_relu(conv(im2col(r), w3_ref))
    r = inst_norm_relu(conv(im2col(r), w4_ref))
    # conv5(concat([x, r])) == conv5_x(x) + conv5_r(r): no HBM concat needed.
    out = conv(px, w5x_ref) + conv(im2col(r), w5r_ref) + b5_ref[...]
    o_ref[0] = out.astype(o_ref.dtype)


def _pack_weight(w_hwio, cin_pad=None):
    """(3, 3, Cin, Cout) f32 -> (Cout, 9*Cin_pad) bf16, tap-major / channel-minor."""
    _, _, cin, cout = w_hwio.shape
    if cin_pad is not None and cin_pad > cin:
        w_hwio = jnp.pad(w_hwio, ((0, 0), (0, 0), (0, cin_pad - cin), (0, 0)))
        cin = cin_pad
    return jnp.transpose(w_hwio, (3, 0, 1, 2)).reshape(cout, 9 * cin).astype(jnp.bfloat16)


def init_params(key, channel_in, channel_out):
    """Deterministic PyTorch-like Conv2d init (uniform +/- 1/sqrt(fan_in)), HWIO f32."""
    params = {}
    shapes = [
        ("conv1", channel_in, FEATURE),
        ("conv2", FEATURE, FEATURE),
        ("conv3", FEATURE, FEATURE),
        ("conv4", FEATURE, FEATURE),
        ("conv5", FEATURE + channel_in, channel_out),
    ]
    for name, cin, cout in shapes:
        key, kw, kb = jax.random.split(key, 3)
        bound = 1.0 / jnp.sqrt(cin * 9.0)
        params[name] = {
            "w": jax.random.uniform(kw, (3, 3, cin, cout), jnp.float32, -bound, bound),
            "b": jax.random.uniform(kb, (cout,), jnp.float32, -bound, bound),
        }
    return params


@jax.jit
def resblock_forward(params, x_nchw):
    N, cin, H, W = x_nchw.shape
    assert W + 1 <= _HALO
    HW = H * W
    cin_pad = ((cin + _CIN_ALIGN - 1) // _CIN_ALIGN) * _CIN_ALIGN
    cout = params["conv5"]["w"].shape[-1]

    # NCHW is natively (C, H*W)-major: just flatten spatial and zero-pad channels.
    x = x_nchw.astype(jnp.float32).reshape(N, cin, HW)
    x = jnp.pad(x, ((0, 0), (0, cin_pad - cin), (0, 0))).astype(jnp.bfloat16)

    w1 = _pack_weight(params["conv1"]["w"], cin_pad)
    w2 = _pack_weight(params["conv2"]["w"])
    w3 = _pack_weight(params["conv3"]["w"])
    w4 = _pack_weight(params["conv4"]["w"])
    w5 = params["conv5"]["w"]
    w5x = _pack_weight(w5[:, :, :cin, :], cin_pad)   # torch.cat puts x first
    w5r = _pack_weight(w5[:, :, cin:, :])
    b5 = params["conv5"]["b"].reshape(cout, 1).astype(jnp.float32)

    def _full(a):
        return pl.BlockSpec(a.shape, lambda n: (0,) * a.ndim)

    out = pl.pallas_call(
        functools.partial(_resblock_kernel, H=H, W=W),
        out_shape=jax.ShapeDtypeStruct((N, cout, HW), jnp.float32),
        grid=(N,),
        in_specs=[
            pl.BlockSpec((1, cin_pad, HW), lambda n: (n, 0, 0)),
            _full(w1), _full(w2), _full(w3), _full(w4),
            _full(w5x), _full(w5r), _full(b5),
        ],
        out_specs=pl.BlockSpec((1, cout, HW), lambda n: (n, 0, 0)),
        compiler_params=pltpu.CompilerParams(
            dimension_semantics=("parallel",)),      # split batch across v7x TCs
    )(x, w1, w2, w3, w4, w5x, w5r, b5)
    return out.reshape(N, cout, H, W)


def _reference_forward(params, x_nchw):
    """Pure-JAX f32 reference (XLA convs, explicit concat + biases) for cross-check."""
    x = jnp.transpose(x_nchw, (0, 2, 3, 1)).astype(jnp.float32)

    def conv(h, w, b):
        y = jax.lax.conv_general_dilated(
            h, w, window_strides=(1, 1), padding=((1, 1), (1, 1)),
            dimension_numbers=("NHWC", "HWIO", "NHWC"))
        return y + b[None, None, None, :]

    def block(h, name):
        y = conv(h, params[name]["w"], params[name]["b"])
        mean = jnp.mean(y, axis=(1, 2), keepdims=True)
        var = jnp.mean((y - mean) ** 2, axis=(1, 2), keepdims=True)
        y = (y - mean) * jax.lax.rsqrt(var + EPS)
        return jnp.maximum(y, 0.0)

    r = block(x, "conv1")
    r = block(r, "conv2")
    r = block(r, "conv3")
    r = block(r, "conv4")
    cat = jnp.concatenate([x, r], axis=-1)
    out = conv(cat, params["conv5"]["w"], params["conv5"]["b"])
    return jnp.transpose(out, (0, 3, 1, 2))


if __name__ == "__main__":
    key = jax.random.PRNGKey(0)
    k_params, k_x = jax.random.split(key)

    channel_in, channel_out = 4, 4
    N, H, W = 2, 16, 16

    params = init_params(k_params, channel_in, channel_out)
    x = jax.random.normal(k_x, (N, channel_in, H, W), jnp.float32)

    out = jax.block_until_ready(resblock_forward(params, x))
    assert out.shape == (N, channel_out, H, W), out.shape

    ref = jax.block_until_ready(_reference_forward(params, x))
    # bf16 MXU operands vs the f32 reference give ~1% relative error after 5 convs /
    # 4 InstanceNorms; thresholds leave ~4-5x margin while still catching structural
    # bugs (wrong shift / mask / weight packing), which would be O(1).
    max_err = float(jnp.max(jnp.abs(out - ref)))
    rel_err = float(jnp.linalg.norm((out - ref).ravel())
                    / jnp.linalg.norm(ref.ravel()))
    assert max_err < 0.08 and rel_err < 0.05, (max_err, rel_err)

    print("KERNEL_OK")
</pallas_src>

<mosaic_0001>
module attributes {stable_mosaic.version = 11 : i64} {
  func.func @_resblock_kernel(%arg0: i32, %arg1: memref<1x16x256xbf16, #tpu.memory_space<vmem>>, %arg2: memref<64x144xbf16, #tpu.memory_space<vmem>>, %arg3: memref<64x576xbf16, #tpu.memory_space<vmem>>, %arg4: memref<64x576xbf16, #tpu.memory_space<vmem>>, %arg5: memref<64x576xbf16, #tpu.memory_space<vmem>>, %arg6: memref<4x144xbf16, #tpu.memory_space<vmem>>, %arg7: memref<4x576xbf16, #tpu.memory_space<vmem>>, %arg8: memref<4x1xf32, #tpu.memory_space<vmem>>, %arg9: memref<1x4x256xf32, #tpu.memory_space<vmem>>) attributes {dimension_semantics = [#tpu.dimension_semantics<parallel>], iteration_bounds = array<i64: 2>, scalar_prefetch = 0 : i64, scratch_operands = 0 : i64, tpu.core_type = #tpu.core_type<tc>, window_params = [{transform_indices = @transform_0, window_bounds = array<i64: 1, 16, 256>}, {pipeline_mode = #tpu.pipeline_mode<synchronous>, transform_indices = @transform_1, window_bounds = array<i64: 64, 144>}, {pipeline_mode = #tpu.pipeline_mode<synchronous>, transform_indices = @transform_2, window_bounds = array<i64: 64, 576>}, {pipeline_mode = #tpu.pipeline_mode<synchronous>, transform_indices = @transform_3, window_bounds = array<i64: 64, 576>}, {pipeline_mode = #tpu.pipeline_mode<synchronous>, transform_indices = @transform_4, window_bounds = array<i64: 64, 576>}, {pipeline_mode = #tpu.pipeline_mode<synchronous>, transform_indices = @transform_5, window_bounds = array<i64: 4, 144>}, {pipeline_mode = #tpu.pipeline_mode<synchronous>, transform_indices = @transform_6, window_bounds = array<i64: 4, 576>}, {pipeline_mode = #tpu.pipeline_mode<synchronous>, transform_indices = @transform_7, window_bounds = array<i64: 4, 1>}, {transform_indices = @transform_8, window_bounds = array<i64: 1, 4, 256>}]} {
    %0 = tpu.iota {dimensions = array<i32: 1>} : vector<1x256xi32>
    %c16_i32 = arith.constant 16 : i32
    %c0_i32 = arith.constant 0 : i32
    %1 = arith.cmpi eq, %c16_i32, %c0_i32 : i32
    %c1_i32 = arith.constant 1 : i32
    %2 = arith.select %1, %c1_i32, %c16_i32 : i32
    %3 = vector.broadcast %2 : i32 to vector<1x256xi32>
    %4 = arith.remsi %0, %3 : vector<1x256xi32>
    %c0_i32_0 = arith.constant 0 : i32
    %5 = vector.broadcast %c0_i32_0 : i32 to vector<1x256xi32>
    %6 = arith.cmpi ne, %4, %5 : vector<1x256xi32>
    %c0_i32_1 = arith.constant 0 : i32
    %7 = vector.broadcast %c0_i32_1 : i32 to vector<1x256xi32>
    %8 = arith.cmpi slt, %4, %7 : vector<1x256xi32>
    %c0_i32_2 = arith.constant 0 : i32
    %9 = arith.cmpi slt, %2, %c0_i32_2 : i32
    %10 = vector.broadcast %9 : i1 to vector<1x256xi1>
    %11 = vector.broadcast %10 : vector<1x256xi1> to vector<1x256xi1>
    %12 = arith.xori %8, %11 : vector<1x256xi1>
    %13 = arith.andi %12, %6 : vector<1x256xi1>
    %14 = vector.broadcast %2 : i32 to vector<1x256xi32>
    %15 = arith.addi %4, %14 : vector<1x256xi32>
    %16 = arith.select %13, %15, %4 : vector<1x256xi1>, vector<1x256xi32>
    %c1_i32_3 = arith.constant 1 : i32
    %17 = vector.broadcast %c1_i32_3 : i32 to vector<1x256xi32>
    %18 = arith.cmpi sge, %16, %17 : vector<1x256xi32>
    %c14_i32 = arith.constant 14 : i32
    %19 = vector.broadcast %c14_i32 : i32 to vector<1x256xi32>
    %20 = arith.cmpi sle, %16, %19 : vector<1x256xi32>
    %c0 = arith.constant 0 : index
    %c0_4 = arith.constant 0 : index
    %c0_5 = arith.constant 0 : index
    %21 = vector.load %arg1[%c0, %c0_4, %c0_5] : memref<1x16x256xbf16, #tpu.memory_space<vmem>>, vector<1x16x256xbf16>
    %22 = vector.shape_cast %21 : vector<1x16x256xbf16> to vector<16x256xbf16>
    %cst = arith.constant 0.000000e+00 : bf16
    %23 = vector.broadcast %cst : bf16 to vector<16x128xbf16>
    %24 = tpu.concatenate %23, %22, %23 in 1 : vector<16x128xbf16>, vector<16x256xbf16>, vector<16x128xbf16> -> vector<16x512xbf16>
    %25 = vector.extract_strided_slice %24 {offsets = [0, 111], sizes = [16, 256], strides = [1, 1]} : vector<16x512xbf16> to vector<16x256xbf16>
    %cst_6 = arith.constant 0.000000e+00 : bf16
    %26 = vector.broadcast %cst_6 : bf16 to vector<16x256xbf16>
    %27 = vector.shape_cast %18 : vector<1x256xi1> to vector<1x256xi1>
    %28 = vector.broadcast %27 : vector<1x256xi1> to vector<16x256xi1>
    %29 = arith.select %28, %25, %26 : vector<16x256xi1>, vector<16x256xbf16>
    %30 = vector.extract_strided_slice %24 {offsets = [0, 112], sizes = [16, 256], strides = [1, 1]} : vector<16x512xbf16> to vector<16x256xbf16>
    %31 = vector.extract_strided_slice %24 {offsets = [0, 113], sizes = [16, 256], strides = [1, 1]} : vector<16x512xbf16> to vector<16x256xbf16>
    %cst_7 = arith.constant 0.000000e+00 : bf16
    %32 = vector.broadcast %cst_7 : bf16 to vector<16x256xbf16>
    %33 = vector.shape_cast %20 : vector<1x256xi1> to vector<1x256xi1>
    %34 = vector.broadcast %33 : vector<1x256xi1> to vector<16x256xi1>
    %35 = arith.select %34, %31, %32 : vector<16x256xi1>, vector<16x256xbf16>
    %36 = vector.extract_strided_slice %24 {offsets = [0, 127], sizes = [16, 256], strides = [1, 1]} : vector<16x512xbf16> to vector<16x256xbf16>
    %cst_8 = arith.constant 0.000000e+00 : bf16
    %37 = vector.broadcast %cst_8 : bf16 to vector<16x256xbf16>
    %38 = vector.shape_cast %18 : vector<1x256xi1> to vector<1x256xi1>
    %39 = vector.broadcast %38 : vector<1x256xi1> to vector<16x256xi1>
    %40 = arith.select %39, %36, %37 : vector<16x256xi1>, vector<16x256xbf16>
    %41 = vector.extract_strided_slice %24 {offsets = [0, 128], sizes = [16, 256], strides = [1, 1]} : vector<16x512xbf16> to vector<16x256xbf16>
    %42 = vector.extract_strided_slice %24 {offsets = [0, 129], sizes = [16, 256], strides = [1, 1]} : vector<16x512xbf16> to vector<16x256xbf16>
    %cst_9 = arith.constant 0.000000e+00 : bf16
    %43 = vector.broadcast %cst_9 : bf16 to vector<16x256xbf16>
    %44 = vector.shape_cast %20 : vector<1x256xi1> to vector<1x256xi1>
    %45 = vector.broadcast %44 : vector<1x256xi1> to vector<16x256xi1>
    %46 = arith.select %45, %42, %43 : vector<16x256xi1>, vector<16x256xbf16>
    %47 = vector.extract_strided_slice %24 {offsets = [0, 143], sizes = [16, 256], strides = [1, 1]} : vector<16x512xbf16> to vector<16x256xbf16>
    %cst_10 = arith.constant 0.000000e+00 : bf16
    %48 = vector.broadcast %cst_10 : bf16 to vector<16x256xbf16>
    %49 = vector.shape_cast %18 : vector<1x256xi1> to vector<1x256xi1>
    %50 = vector.broadcast %49 : vector<1x256xi1> to vector<16x256xi1>
    %51 = arith.select %50, %47, %48 : vector<16x256xi1>, vector<16x256xbf16>
    %52 = vector.extract_strided_slice %24 {offsets = [0, 144], sizes = [16, 256], strides = [1, 1]} : vector<16x512xbf16> to vector<16x256xbf16>
    %53 = vector.extract_strided_slice %24 {offsets = [0, 145], sizes = [16, 256], strides = [1, 1]} : vector<16x512xbf16> to vector<16x256xbf16>
    %cst_11 = arith.constant 0.000000e+00 : bf16
    %54 = vector.broadcast %cst_11 : bf16 to vector<16x256xbf16>
    %55 = vector.shape_cast %20 : vector<1x256xi1> to vector<1x256xi1>
    %56 = vector.broadcast %55 : vector<1x256xi1> to vector<16x256xi1>
    %57 = arith.select %56, %53, %54 : vector<16x256xi1>, vector<16x256xbf16>
    %58 = tpu.concatenate %29, %30, %35, %40, %41, %46, %51, %52, %57 in 0 : vector<16x256xbf16>, vector<16x256xbf16>, vector<16x256xbf16>, vector<16x256xbf16>, vector<16x256xbf16>, vector<16x256xbf16>, vector<16x256xbf16>, vector<16x256xbf16>, vector<16x256xbf16> -> vector<144x256xbf16>
    %c0_12 = arith.constant 0 : index
    %c0_13 = arith.constant 0 : index
    %59 = vector.load %arg2[%c0_12, %c0_13] : memref<64x144xbf16, #tpu.memory_space<vmem>>, vector<64x144xbf16>
    %cst_14 = arith.constant dense<0.000000e+00> : vector<64x256xf32>
    %60 = tpu.matmul %59, %58, %cst_14 {dimension_numbers = #tpu.dot_dimension_numbers<[1], [0], [0], [1], [0, 0, 1, 1], [], []>} : vector<64x144xbf16>, vector<144x256xbf16>, vector<64x256xf32> -> vector<64x256xf32>
    %cst_15 = arith.constant dense<0.000000e+00> : vector<64xf32>
    %61 = vector.multi_reduction <add>, %60, %cst_15 [1] : vector<64x256xf32> to vector<64xf32>
    %62 = vector.shape_cast %61 : vector<64xf32> to vector<64x1xf32>
    %cst_16 = arith.constant 2.560000e+02 : f32
    %63 = vector.broadcast %cst_16 : f32 to vector<64x1xf32>
    %64 = arith.divf %62, %63 : vector<64x1xf32>
    %65 = arith.mulf %60, %60 : vector<64x256xf32>
    %cst_17 = arith.constant dense<0.000000e+00> : vector<64xf32>
    %66 = vector.multi_reduction <add>, %65, %cst_17 [1] : vector<64x256xf32> to vector<64xf32>
    %67 = vector.shape_cast %66 : vector<64xf32> to vector<64x1xf32>
    %cst_18 = arith.constant 2.560000e+02 : f32
    %68 = vector.broadcast %cst_18 : f32 to vector<64x1xf32>
    %69 = arith.divf %67, %68 : vector<64x1xf32>
    %70 = arith.mulf %64, %64 : vector<64x1xf32>
    %71 = arith.subf %69, %70 : vector<64x1xf32>
    %cst_19 = arith.constant 0.000000e+00 : f32
    %72 = vector.broadcast %cst_19 : f32 to vector<64x1xf32>
    %73 = arith.maximumf %71, %72 : vector<64x1xf32>
    %74 = vector.broadcast %64 : vector<64x1xf32> to vector<64x256xf32>
    %75 = arith.subf %60, %74 : vector<64x256xf32>
    %cst_20 = arith.constant 9.99999974E-6 : f32
    %76 = vector.broadcast %cst_20 : f32 to vector<64x1xf32>
    %77 = arith.addf %73, %76 : vector<64x1xf32>
    %78 = math.rsqrt %77 : vector<64x1xf32>
    %79 = vector.broadcast %78 : vector<64x1xf32> to vector<64x256xf32>
    %80 = arith.mulf %75, %79 : vector<64x256xf32>
    %cst_21 = arith.constant 0.000000e+00 : f32
    %81 = vector.broadcast %cst_21 : f32 to vector<64x256xf32>
    %82 = arith.maximumf %80, %81 : vector<64x256xf32>
    %83 = arith.truncf %82 : vector<64x256xf32> to vector<64x256xbf16>
    %cst_22 = arith.constant 0.000000e+00 : bf16
    %84 = vector.broadcast %cst_22 : bf16 to vector<64x128xbf16>
    %85 = tpu.concatenate %84, %83, %84 in 1 : vector<64x128xbf16>, vector<64x256xbf16>, vector<64x128xbf16> -> vector<64x512xbf16>
    %86 = vector.extract_strided_slice %85 {offsets = [0, 111], sizes = [64, 256], strides = [1, 1]} : vector<64x512xbf16> to vector<64x256xbf16>
    %cst_23 = arith.constant 0.000000e+00 : bf16
    %87 = vector.broadcast %cst_23 : bf16 to vector<64x256xbf16>
    %88 = vector.shape_cast %18 : vector<1x256xi1> to vector<1x256xi1>
    %89 = vector.broadcast %88 : vector<1x256xi1> to vector<64x256xi1>
    %90 = arith.select %89, %86, %87 : vector<64x256xi1>, vector<64x256xbf16>
    %91 = vector.extract_strided_slice %85 {offsets = [0, 112], sizes = [64, 256], strides = [1, 1]} : vector<64x512xbf16> to vector<64x256xbf16>
    %92 = vector.extract_strided_slice %85 {offsets = [0, 113], sizes = [64, 256], strides = [1, 1]} : vector<64x512xbf16> to vector<64x256xbf16>
    %cst_24 = arith.constant 0.000000e+00 : bf16
    %93 = vector.broadcast %cst_24 : bf16 to vector<64x256xbf16>
    %94 = vector.shape_cast %20 : vector<1x256xi1> to vector<1x256xi1>
    %95 = vector.broadcast %94 : vector<1x256xi1> to vector<64x256xi1>
    %96 = arith.select %95, %92, %93 : vector<64x256xi1>, vector<64x256xbf16>
    %97 = vector.extract_strided_slice %85 {offsets = [0, 127], sizes = [64, 256], strides = [1, 1]} : vector<64x512xbf16> to vector<64x256xbf16>
    %cst_25 = arith.constant 0.000000e+00 : bf16
    %98 = vector.broadcast %cst_25 : bf16 to vector<64x256xbf16>
    %99 = vector.shape_cast %18 : vector<1x256xi1> to vector<1x256xi1>
    %100 = vector.broadcast %99 : vector<1x256xi1> to vector<64x256xi1>
    %101 = arith.select %100, %97, %98 : vector<64x256xi1>, vector<64x256xbf16>
    %102 = vector.extract_strided_slice %85 {offsets = [0, 128], sizes = [64, 256], strides = [1, 1]} : vector<64x512xbf16> to vector<64x256xbf16>
    %103 = vector.extract_strided_slice %85 {offsets = [0, 129], sizes = [64, 256], strides = [1, 1]} : vector<64x512xbf16> to vector<64x256xbf16>
    %cst_26 = arith.constant 0.000000e+00 : bf16
    %104 = vector.broadcast %cst_26 : bf16 to vector<64x256xbf16>
    %105 = vector.shape_cast %20 : vector<1x256xi1> to vector<1x256xi1>
    %106 = vector.broadcast %105 : vector<1x256xi1> to vector<64x256xi1>
    %107 = arith.select %106, %103, %104 : vector<64x256xi1>, vector<64x256xbf16>
    %108 = vector.extract_strided_slice %85 {offsets = [0, 143], sizes = [64, 256], strides = [1, 1]} : vector<64x512xbf16> to vector<64x256xbf16>
    %cst_27 = arith.constant 0.000000e+00 : bf16
    %109 = vector.broadcast %cst_27 : bf16 to vector<64x256xbf16>
    %110 = vector.shape_cast %18 : vector<1x256xi1> to vector<1x256xi1>
    %111 = vector.broadcast %110 : vector<1x256xi1> to vector<64x256xi1>
    %112 = arith.select %111, %108, %109 : vector<64x256xi1>, vector<64x256xbf16>
    %113 = vector.extract_strided_slice %85 {offsets = [0, 144], sizes = [64, 256], strides = [1, 1]} : vector<64x512xbf16> to vector<64x256xbf16>
    %114 = vector.extract_strided_slice %85 {offsets = [0, 145], sizes = [64, 256], strides = [1, 1]} : vector<64x512xbf16> to vector<64x256xbf16>
    %cst_28 = arith.constant 0.000000e+00 : bf16
    %115 = vector.broadcast %cst_28 : bf16 to vector<64x256xbf16>
    %116 = vector.shape_cast %20 : vector<1x256xi1> to vector<1x256xi1>
    %117 = vector.broadcast %116 : vector<1x256xi1> to vector<64x256xi1>
    %118 = arith.select %117, %114, %115 : vector<64x256xi1>, vector<64x256xbf16>
    %119 = tpu.concatenate %90, %91, %96, %101, %102, %107, %112, %113, %118 in 0 : vector<64x256xbf16>, vector<64x256xbf16>, vector<64x256xbf16>, vector<64x256xbf16>, vector<64x256xbf16>, vector<64x256xbf16>, vector<64x256xbf16>, vector<64x256xbf16>, vector<64x256xbf16> -> vector<576x256xbf16>
    %c0_29 = arith.constant 0 : index
    %c0_30 = arith.constant 0 : index
    %120 = vector.load %arg3[%c0_29, %c0_30] : memref<64x576xbf16, #tpu.memory_space<vmem>>, vector<64x576xbf16>
    %cst_31 = arith.constant dense<0.000000e+00> : vector<64x256xf32>
    %121 = tpu.matmul %120, %119, %cst_31 {dimension_numbers = #tpu.dot_dimension_numbers<[1], [0], [0], [1], [0, 0, 1, 1], [], []>} : vector<64x576xbf16>, vector<576x256xbf16>, vector<64x256xf32> -> vector<64x256xf32>
    %cst_32 = arith.constant dense<0.000000e+00> : vector<64xf32>
    %122 = vector.multi_reduction <add>, %121, %cst_32 [1] : vector<64x256xf32> to vector<64xf32>
    %123 = vector.shape_cast %122 : vector<64xf32> to vector<64x1xf32>
    %cst_33 = arith.constant 2.560000e+02 : f32
    %124 = vector.broadcast %cst_33 : f32 to vector<64x1xf32>
    %125 = arith.divf %123, %124 : vector<64x1xf32>
    %126 = arith.mulf %121, %121 : vector<64x256xf32>
    %cst_34 = arith.constant dense<0.000000e+00> : vector<64xf32>
    %127 = vector.multi_reduction <add>, %126, %cst_34 [1] : vector<64x256xf32> to vector<64xf32>
    %128 = vector.shape_cast %127 : vector<64xf32> to vector<64x1xf32>
    %cst_35 = arith.constant 2.560000e+02 : f32
    %129 = vector.broadcast %cst_35 : f32 to vector<64x1xf32>
    %130 = arith.divf %128, %129 : vector<64x1xf32>
    %131 = arith.mulf %125, %125 : vector<64x1xf32>
    %132 = arith.subf %130, %131 : vector<64x1xf32>
    %cst_36 = arith.constant 0.000000e+00 : f32
    %133 = vector.broadcast %cst_36 : f32 to vector<64x1xf32>
    %134 = arith.maximumf %132, %133 : vector<64x1xf32>
    %135 = vector.broadcast %125 : vector<64x1xf32> to vector<64x256xf32>
    %136 = arith.subf %121, %135 : vector<64x256xf32>
    %cst_37 = arith.constant 9.99999974E-6 : f32
    %137 = vector.broadcast %cst_37 : f32 to vector<64x1xf32>
    %138 = arith.addf %134, %137 : vector<64x1xf32>
    %139 = math.rsqrt %138 : vector<64x1xf32>
    %140 = vector.broadcast %139 : vector<64x1xf32> to vector<64x256xf32>
    %141 = arith.mulf %136, %140 : vector<64x256xf32>
    %cst_38 = arith.constant 0.000000e+00 : f32
    %142 = vector.broadcast %cst_38 : f32 to vector<64x256xf32>
    %143 = arith.maximumf %141, %142 : vector<64x256xf32>
    %144 = arith.truncf %143 : vector<64x256xf32> to vector<64x256xbf16>
    %cst_39 = arith.constant 0.000000e+00 : bf16
    %145 = vector.broadcast %cst_39 : bf16 to vector<64x128xbf16>
    %146 = tpu.concatenate %145, %144, %145 in 1 : vector<64x128xbf16>, vector<64x256xbf16>, vector<64x128xbf16> -> vector<64x512xbf16>
    %147 = vector.extract_strided_slice %146 {offsets = [0, 111], sizes = [64, 256], strides = [1, 1]} : vector<64x512xbf16> to vector<64x256xbf16>
    %cst_40 = arith.constant 0.000000e+00 : bf16
    %148 = vector.broadcast %cst_40 : bf16 to vector<64x256xbf16>
    %149 = vector.shape_cast %18 : vector<1x256xi1> to vector<1x256xi1>
    %150 = vector.broadcast %149 : vector<1x256xi1> to vector<64x256xi1>
    %151 = arith.select %150, %147, %148 : vector<64x256xi1>, vector<64x256xbf16>
    %152 = vector.extract_strided_slice %146 {offsets = [0, 112], sizes = [64, 256], strides = [1, 1]} : vector<64x512xbf16> to vector<64x256xbf16>
    %153 = vector.extract_strided_slice %146 {offsets = [0, 113], sizes = [64, 256], strides = [1, 1]} : vector<64x512xbf16> to vector<64x256xbf16>
    %cst_41 = arith.constant 0.000000e+00 : bf16
    %154 = vector.broadcast %cst_41 : bf16 to vector<64x256xbf16>
    %155 = vector.shape_cast %20 : vector<1x256xi1> to vector<1x256xi1>
    %156 = vector.broadcast %155 : vector<1x256xi1> to vector<64x256xi1>
    %157 = arith.select %156, %153, %154 : vector<64x256xi1>, vector<64x256xbf16>
    %158 = vector.extract_strided_slice %146 {offsets = [0, 127], sizes = [64, 256], strides = [1, 1]} : vector<64x512xbf16> to vector<64x256xbf16>
    %cst_42 = arith.constant 0.000000e+00 : bf16
    %159 = vector.broadcast %cst_42 : bf16 to vector<64x256xbf16>
    %160 = vector.shape_cast %18 : vector<1x256xi1> to vector<1x256xi1>
    %161 = vector.broadcast %160 : vector<1x256xi1> to vector<64x256xi1>
    %162 = arith.select %161, %158, %159 : vector<64x256xi1>, vector<64x256xbf16>
    %163 = vector.extract_strided_slice %146 {offsets = [0, 128], sizes = [64, 256], strides = [1, 1]} : vector<64x512xbf16> to vector<64x256xbf16>
    %164 = vector.extract_strided_slice %146 {offsets = [0, 129], sizes = [64, 256], strides = [1, 1]} : vector<64x512xbf16> to vector<64x256xbf16>
    %cst_43 = arith.constant 0.000000e+00 : bf16
    %165 = vector.broadcast %cst_43 : bf16 to vector<64x256xbf16>
    %166 = vector.shape_cast %20 : vector<1x256xi1> to vector<1x256xi1>
    %167 = vector.broadcast %166 : vector<1x256xi1> to vector<64x256xi1>
    %168 = arith.select %167, %164, %165 : vector<64x256xi1>, vector<64x256xbf16>
    %169 = vector.extract_strided_slice %146 {offsets = [0, 143], sizes = [64, 256], strides = [1, 1]} : vector<64x512xbf16> to vector<64x256xbf16>
    %cst_44 = arith.constant 0.000000e+00 : bf16
    %170 = vector.broadcast %cst_44 : bf16 to vector<64x256xbf16>
    %171 = vector.shape_cast %18 : vector<1x256xi1> to vector<1x256xi1>
    %172 = vector.broadcast %171 : vector<1x256xi1> to vector<64x256xi1>
    %173 = arith.select %172, %169, %170 : vector<64x256xi1>, vector<64x256xbf16>
    %174 = vector.extract_strided_slice %146 {offsets = [0, 144], sizes = [64, 256], strides = [1, 1]} : vector<64x512xbf16> to vector<64x256xbf16>
    %175 = vector.extract_strided_slice %146 {offsets = [0, 145], sizes = [64, 256], strides = [1, 1]} : vector<64x512xbf16> to vector<64x256xbf16>
    %cst_45 = arith.constant 0.000000e+00 : bf16
    %176 = vector.broadcast %cst_45 : bf16 to vector<64x256xbf16>
    %177 = vector.shape_cast %20 : vector<1x256xi1> to vector<1x256xi1>
    %178 = vector.broadcast %177 : vector<1x256xi1> to vector<64x256xi1>
    %179 = arith.select %178, %175, %176 : vector<64x256xi1>, vector<64x256xbf16>
    %180 = tpu.concatenate %151, %152, %157, %162, %163, %168, %173, %174, %179 in 0 : vector<64x256xbf16>, vector<64x256xbf16>, vector<64x256xbf16>, vector<64x256xbf16>, vector<64x256xbf16>, vector<64x256xbf16>, vector<64x256xbf16>, vector<64x256xbf16>, vector<64x256xbf16> -> vector<576x256xbf16>
    %c0_46 = arith.constant 0 : index
    %c0_47 = arith.constant 0 : index
    %181 = vector.load %arg4[%c0_46, %c0_47] : memref<64x576xbf16, #tpu.memory_space<vmem>>, vector<64x576xbf16>
    %cst_48 = arith.constant dense<0.000000e+00> : vector<64x256xf32>
    %182 = tpu.matmul %181, %180, %cst_48 {dimension_numbers = #tpu.dot_dimension_numbers<[1], [0], [0], [1], [0, 0, 1, 1], [], []>} : vector<64x576xbf16>, vector<576x256xbf16>, vector<64x256xf32> -> vector<64x256xf32>
    %cst_49 = arith.constant dense<0.000000e+00> : vector<64xf32>
    %183 = vector.multi_reduction <add>, %182, %cst_49 [1] : vector<64x256xf32> to vector<64xf32>
    %184 = vector.shape_cast %183 : vector<64xf32> to vector<64x1xf32>
    %cst_50 = arith.constant 2.560000e+02 : f32
    %185 = vector.broadcast %cst_50 : f32 to vector<64x1xf32>
    %186 = arith.divf %184, %185 : vector<64x1xf32>
    %187 = arith.mulf %182, %182 : vector<64x256xf32>
    %cst_51 = arith.constant dense<0.000000e+00> : vector<64xf32>
    %188 = vector.multi_reduction <add>, %187, %cst_51 [1] : vector<64x256xf32> to vector<64xf32>
    %189 = vector.shape_cast %188 : vector<64xf32> to vector<64x1xf32>
    %cst_52 = arith.constant 2.560000e+02 : f32
    %190 = vector.broadcast %cst_52 : f32 to vector<64x1xf32>
    %191 = arith.divf %189, %190 : vector<64x1xf32>
    %192 = arith.mulf %186, %186 : vector<64x1xf32>
    %193 = arith.subf %191, %192 : vector<64x1xf32>
    %cst_53 = arith.constant 0.000000e+00 : f32
    %194 = vector.broadcast %cst_53 : f32 to vector<64x1xf32>
    %195 = arith.maximumf %193, %194 : vector<64x1xf32>
    %196 = vector.broadcast %186 : vector<64x1xf32> to vector<64x256xf32>
    %197 = arith.subf %182, %196 : vector<64x256xf32>
    %cst_54 = arith.constant 9.99999974E-6 : f32
    %198 = vector.broadcast %cst_54 : f32 to vector<64x1xf32>
    %199 = arith.addf %195, %198 : vector<64x1xf32>
    %200 = math.rsqrt %199 : vector<64x1xf32>
    %201 = vector.broadcast %200 : vector<64x1xf32> to vector<64x256xf32>
    %202 = arith.mulf %197, %201 : vector<64x256xf32>
    %cst_55 = arith.constant 0.000000e+00 : f32
    %203 = vector.broadcast %cst_55 : f32 to vector<64x256xf32>
    %204 = arith.maximumf %202, %203 : vector<64x256xf32>
    %205 = arith.truncf %204 : vector<64x256xf32> to vector<64x256xbf16>
    %cst_56 = arith.constant 0.000000e+00 : bf16
    %206 = vector.broadcast %cst_56 : bf16 to vector<64x128xbf16>
    %207 = tpu.concatenate %206, %205, %206 in 1 : vector<64x128xbf16>, vector<64x256xbf16>, vector<64x128xbf16> -> vector<64x512xbf16>
    %208 = vector.extract_strided_slice %207 {offsets = [0, 111], sizes = [64, 256], strides = [1, 1]} : vector<64x512xbf16> to vector<64x256xbf16>
    %cst_57 = arith.constant 0.000000e+00 : bf16
    %209 = vector.broadcast %cst_57 : bf16 to vector<64x256xbf16>
    %210 = vector.shape_cast %18 : vector<1x256xi1> to vector<1x256xi1>
    %211 = vector.broadcast %210 : vector<1x256xi1> to vector<64x256xi1>
    %212 = arith.select %211, %208, %209 : vector<64x256xi1>, vector<64x256xbf16>
    %213 = vector.extract_strided_slice %207 {offsets = [0, 112], sizes = [64, 256], strides = [1, 1]} : vector<64x512xbf16> to vector<64x256xbf16>
    %214 = vector.extract_strided_slice %207 {offsets = [0, 113], sizes = [64, 256], strides = [1, 1]} : vector<64x512xbf16> to vector<64x256xbf16>
    %cst_58 = arith.constant 0.000000e+00 : bf16
    %215 = vector.broadcast %cst_58 : bf16 to vector<64x256xbf16>
    %216 = vector.shape_cast %20 : vector<1x256xi1> to vector<1x256xi1>
    %217 = vector.broadcast %216 : vector<1x256xi1> to vector<64x256xi1>
    %218 = arith.select %217, %214, %215 : vector<64x256xi1>, vector<64x256xbf16>
    %219 = vector.extract_strided_slice %207 {offsets = [0, 127], sizes = [64, 256], strides = [1, 1]} : vector<64x512xbf16> to vector<64x256xbf16>
    %cst_59 = arith.constant 0.000000e+00 : bf16
    %220 = vector.broadcast %cst_59 : bf16 to vector<64x256xbf16>
    %221 = vector.shape_cast %18 : vector<1x256xi1> to vector<1x256xi1>
    %222 = vector.broadcast %221 : vector<1x256xi1> to vector<64x256xi1>
    %223 = arith.select %222, %219, %220 : vector<64x256xi1>, vector<64x256xbf16>
    %224 = vector.extract_strided_slice %207 {offsets = [0, 128], sizes = [64, 256], strides = [1, 1]} : vector<64x512xbf16> to vector<64x256xbf16>
    %225 = vector.extract_strided_slice %207 {offsets = [0, 129], sizes = [64, 256], strides = [1, 1]} : vector<64x512xbf16> to vector<64x256xbf16>
    %cst_60 = arith.constant 0.000000e+00 : bf16
    %226 = vector.broadcast %cst_60 : bf16 to vector<64x256xbf16>
    %227 = vector.shape_cast %20 : vector<1x256xi1> to vector<1x256xi1>
    %228 = vector.broadcast %227 : vector<1x256xi1> to vector<64x256xi1>
    %229 = arith.select %228, %225, %226 : vector<64x256xi1>, vector<64x256xbf16>
    %230 = vector.extract_strided_slice %207 {offsets = [0, 143], sizes = [64, 256], strides = [1, 1]} : vector<64x512xbf16> to vector<64x256xbf16>
    %cst_61 = arith.constant 0.000000e+00 : bf16
    %231 = vector.broadcast %cst_61 : bf16 to vector<64x256xbf16>
    %232 = vector.shape_cast %18 : vector<1x256xi1> to vector<1x256xi1>
    %233 = vector.broadcast %232 : vector<1x256xi1> to vector<64x256xi1>
    %234 = arith.select %233, %230, %231 : vector<64x256xi1>, vector<64x256xbf16>
    %235 = vector.extract_strided_slice %207 {offsets = [0, 144], sizes = [64, 256], strides = [1, 1]} : vector<64x512xbf16> to vector<64x256xbf16>
    %236 = vector.extract_strided_slice %207 {offsets = [0, 145], sizes = [64, 256], strides = [1, 1]} : vector<64x512xbf16> to vector<64x256xbf16>
    %cst_62 = arith.constant 0.000000e+00 : bf16
    %237 = vector.broadcast %cst_62 : bf16 to vector<64x256xbf16>
    %238 = vector.shape_cast %20 : vector<1x256xi1> to vector<1x256xi1>
    %239 = vector.broadcast %238 : vector<1x256xi1> to vector<64x256xi1>
    %240 = arith.select %239, %236, %237 : vector<64x256xi1>, vector<64x256xbf16>
    %241 = tpu.concatenate %212, %213, %218, %223, %224, %229, %234, %235, %240 in 0 : vector<64x256xbf16>, vector<64x256xbf16>, vector<64x256xbf16>, vector<64x256xbf16>, vector<64x256xbf16>, vector<64x256xbf16>, vector<64x256xbf16>, vector<64x256xbf16>, vector<64x256xbf16> -> vector<576x256xbf16>
    %c0_63 = arith.constant 0 : index
    %c0_64 = arith.constant 0 : index
    %242 = vector.load %arg5[%c0_63, %c0_64] : memref<64x576xbf16, #tpu.memory_space<vmem>>, vector<64x576xbf16>
    %cst_65 = arith.constant dense<0.000000e+00> : vector<64x256xf32>
    %243 = tpu.matmul %242, %241, %cst_65 {dimension_numbers = #tpu.dot_dimension_numbers<[1], [0], [0], [1], [0, 0, 1, 1], [], []>} : vector<64x576xbf16>, vector<576x256xbf16>, vector<64x256xf32> -> vector<64x256xf32>
    %cst_66 = arith.constant dense<0.000000e+00> : vector<64xf32>
    %244 = vector.multi_reduction <add>, %243, %cst_66 [1] : vector<64x256xf32> to vector<64xf32>
    %245 = vector.shape_cast %244 : vector<64xf32> to vector<64x1xf32>
    %cst_67 = arith.constant 2.560000e+02 : f32
    %246 = vector.broadcast %cst_67 : f32 to vector<64x1xf32>
    %247 = arith.divf %245, %246 : vector<64x1xf32>
    %248 = arith.mulf %243, %243 : vector<64x256xf32>
    %cst_68 = arith.constant dense<0.000000e+00> : vector<64xf32>
    %249 = vector.multi_reduction <add>, %248, %cst_68 [1] : vector<64x256xf32> to vector<64xf32>
    %250 = vector.shape_cast %249 : vector<64xf32> to vector<64x1xf32>
    %cst_69 = arith.constant 2.560000e+02 : f32
    %251 = vector.broadcast %cst_69 : f32 to vector<64x1xf32>
    %252 = arith.divf %250, %251 : vector<64x1xf32>
    %253 = arith.mulf %247, %247 : vector<64x1xf32>
    %254 = arith.subf %252, %253 : vector<64x1xf32>
    %cst_70 = arith.constant 0.000000e+00 : f32
    %255 = vector.broadcast %cst_70 : f32 to vector<64x1xf32>
    %256 = arith.maximumf %254, %255 : vector<64x1xf32>
    %257 = vector.broadcast %247 : vector<64x1xf32> to vector<64x256xf32>
    %258 = arith.subf %243, %257 : vector<64x256xf32>
    %cst_71 = arith.constant 9.99999974E-6 : f32
    %259 = vector.broadcast %cst_71 : f32 to vector<64x1xf32>
    %260 = arith.addf %256, %259 : vector<64x1xf32>
    %261 = math.rsqrt %260 : vector<64x1xf32>
    %262 = vector.broadcast %261 : vector<64x1xf32> to vector<64x256xf32>
    %263 = arith.mulf %258, %262 : vector<64x256xf32>
    %cst_72 = arith.constant 0.000000e+00 : f32
    %264 = vector.broadcast %cst_72 : f32 to vector<64x256xf32>
    %265 = arith.maximumf %263, %264 : vector<64x256xf32>
    %266 = arith.truncf %265 : vector<64x256xf32> to vector<64x256xbf16>
    %c0_73 = arith.constant 0 : index
    %c0_74 = arith.constant 0 : index
    %267 = vector.load %arg6[%c0_73, %c0_74] : memref<4x144xbf16, #tpu.memory_space<vmem>>, vector<4x144xbf16>
    %cst_75 = arith.constant dense<0.000000e+00> : vector<4x256xf32>
    %268 = tpu.matmul %267, %58, %cst_75 {dimension_numbers = #tpu.dot_dimension_numbers<[1], [0], [0], [1], [0, 0, 1, 1], [], []>} : vector<4x144xbf16>, vector<144x256xbf16>, vector<4x256xf32> -> vector<4x256xf32>
    %cst_76 = arith.constant 0.000000e+00 : bf16
    %269 = vector.broadcast %cst_76 : bf16 to vector<64x128xbf16>
    %270 = tpu.concatenate %269, %266, %269 in 1 : vector<64x128xbf16>, vector<64x256xbf16>, vector<64x128xbf16> -> vector<64x512xbf16>
    %271 = vector.extract_strided_slice %270 {offsets = [0, 111], sizes = [64, 256], strides = [1, 1]} : vector<64x512xbf16> to vector<64x256xbf16>
    %cst_77 = arith.constant 0.000000e+00 : bf16
    %272 = vector.broadcast %cst_77 : bf16 to vector<64x256xbf16>
    %273 = vector.shape_cast %18 : vector<1x256xi1> to vector<1x256xi1>
    %274 = vector.broadcast %273 : vector<1x256xi1> to vector<64x256xi1>
    %275 = arith.select %274, %271, %272 : vector<64x256xi1>, vector<64x256xbf16>
    %276 = vector.extract_strided_slice %270 {offsets = [0, 112], sizes = [64, 256], strides = [1, 1]} : vector<64x512xbf16> to vector<64x256xbf16>
    %277 = vector.extract_strided_slice %270 {offsets = [0, 113], sizes = [64, 256], strides = [1, 1]} : vector<64x512xbf16> to vector<64x256xbf16>
    %cst_78 = arith.constant 0.000000e+00 : bf16
    %278 = vector.broadcast %cst_78 : bf16 to vector<64x256xbf16>
    %279 = vector.shape_cast %20 : vector<1x256xi1> to vector<1x256xi1>
    %280 = vector.broadcast %279 : vector<1x256xi1> to vector<64x256xi1>
    %281 = arith.select %280, %277, %278 : vector<64x256xi1>, vector<64x256xbf16>
    %282 = vector.extract_strided_slice %270 {offsets = [0, 127], sizes = [64, 256], strides = [1, 1]} : vector<64x512xbf16> to vector<64x256xbf16>
    %cst_79 = arith.constant 0.000000e+00 : bf16
    %283 = vector.broadcast %cst_79 : bf16 to vector<64x256xbf16>
    %284 = vector.shape_cast %18 : vector<1x256xi1> to vector<1x256xi1>
    %285 = vector.broadcast %284 : vector<1x256xi1> to vector<64x256xi1>
    %286 = arith.select %285, %282, %283 : vector<64x256xi1>, vector<64x256xbf16>
    %287 = vector.extract_strided_slice %270 {offsets = [0, 128], sizes = [64, 256], strides = [1, 1]} : vector<64x512xbf16> to vector<64x256xbf16>
    %288 = vector.extract_strided_slice %270 {offsets = [0, 129], sizes = [64, 256], strides = [1, 1]} : vector<64x512xbf16> to vector<64x256xbf16>
    %cst_80 = arith.constant 0.000000e+00 : bf16
    %289 = vector.broadcast %cst_80 : bf16 to vector<64x256xbf16>
    %290 = vector.shape_cast %20 : vector<1x256xi1> to vector<1x256xi1>
    %291 = vector.broadcast %290 : vector<1x256xi1> to vector<64x256xi1>
    %292 = arith.select %291, %288, %289 : vector<64x256xi1>, vector<64x256xbf16>
    %293 = vector.extract_strided_slice %270 {offsets = [0, 143], sizes = [64, 256], strides = [1, 1]} : vector<64x512xbf16> to vector<64x256xbf16>
    %cst_81 = arith.constant 0.000000e+00 : bf16
    %294 = vector.broadcast %cst_81 : bf16 to vector<64x256xbf16>
    %295 = vector.shape_cast %18 : vector<1x256xi1> to vector<1x256xi1>
    %296 = vector.broadcast %295 : vector<1x256xi1> to vector<64x256xi1>
    %297 = arith.select %296, %293, %294 : vector<64x256xi1>, vector<64x256xbf16>
    %298 = vector.extract_strided_slice %270 {offsets = [0, 144], sizes = [64, 256], strides = [1, 1]} : vector<64x512xbf16> to vector<64x256xbf16>
    %299 = vector.extract_strided_slice %270 {offsets = [0, 145], sizes = [64, 256], strides = [1, 1]} : vector<64x512xbf16> to vector<64x256xbf16>
    %cst_82 = arith.constant 0.000000e+00 : bf16
    %300 = vector.broadcast %cst_82 : bf16 to vector<64x256xbf16>
    %301 = vector.shape_cast %20 : vector<1x256xi1> to vector<1x256xi1>
    %302 = vector.broadcast %301 : vector<1x256xi1> to vector<64x256xi1>
    %303 = arith.select %302, %299, %300 : vector<64x256xi1>, vector<64x256xbf16>
    %304 = tpu.concatenate %275, %276, %281, %286, %287, %292, %297, %298, %303 in 0 : vector<64x256xbf16>, vector<64x256xbf16>, vector<64x256xbf16>, vector<64x256xbf16>, vector<64x256xbf16>, vector<64x256xbf16>, vector<64x256xbf16>, vector<64x256xbf16>, vector<64x256xbf16> -> vector<576x256xbf16>
    %c0_83 = arith.constant 0 : index
    %c0_84 = arith.constant 0 : index
    %305 = vector.load %arg7[%c0_83, %c0_84] : memref<4x576xbf16, #tpu.memory_space<vmem>>, vector<4x576xbf16>
    %cst_85 = arith.constant dense<0.000000e+00> : vector<4x256xf32>
    %306 = tpu.matmul %305, %304, %cst_85 {dimension_numbers = #tpu.dot_dimension_numbers<[1], [0], [0], [1], [0, 0, 1, 1], [], []>} : vector<4x576xbf16>, vector<576x256xbf16>, vector<4x256xf32> -> vector<4x256xf32>
    %307 = arith.addf %268, %306 : vector<4x256xf32>
    %c0_86 = arith.constant 0 : index
    %c0_87 = arith.constant 0 : index
    %308 = vector.load %arg8[%c0_86, %c0_87] : memref<4x1xf32, #tpu.memory_space<vmem>>, vector<4x1xf32>
    %309 = vector.broadcast %308 : vector<4x1xf32> to vector<4x256xf32>
    %310 = arith.addf %307, %309 : vector<4x256xf32>
    %c0_88 = arith.constant 0 : index
    %c0_89 = arith.constant 0 : index
    %c0_90 = arith.constant 0 : index
    %311 = vector.load %arg9[%c0_88, %c0_89, %c0_90] : memref<1x4x256xf32, #tpu.memory_space<vmem>>, vector<1x4x256xf32>
    %312 = vector.shape_cast %311 : vector<1x4x256xf32> to vector<4x256xf32>
    %313 = vector.shape_cast %310 : vector<4x256xf32> to vector<1x4x256xf32>
    tpu.vector_store %arg9[%c0_88, %c0_89, %c0_90], %313 {strides = array<i32>} : memref<1x4x256xf32, #tpu.memory_space<vmem>>, vector<1x4x256xf32>,
    return
  }
  func.func @transform_0(%arg0: i32) -> (i32, i32, i32) {
    %c0_i32 = arith.constant 0 : i32
    %c0_i32_0 = arith.constant 0 : i32
    %c0_i32_1 = arith.constant 0 : i32
    return %arg0, %c0_i32, %c0_i32_0 : i32, i32, i32
  }
  func.func @transform_1(%arg0: i32) -> (i32, i32) {
    %c0_i32 = arith.constant 0 : i32
    %c0_i32_0 = arith.constant 0 : i32
    %c0_i32_1 = arith.constant 0 : i32
    return %c0_i32, %c0_i32_0 : i32, i32
  }
  func.func @transform_2(%arg0: i32) -> (i32, i32) {
    %c0_i32 = arith.constant 0 : i32
    %c0_i32_0 = arith.constant 0 : i32
    %c0_i32_1 = arith.constant 0 : i32
    return %c0_i32, %c0_i32_0 : i32, i32
  }
  func.func @transform_3(%arg0: i32) -> (i32, i32) {
    %c0_i32 = arith.constant 0 : i32
    %c0_i32_0 = arith.constant 0 : i32
    %c0_i32_1 = arith.constant 0 : i32
    return %c0_i32, %c0_i32_0 : i32, i32
  }
  func.func @transform_4(%arg0: i32) -> (i32, i32) {
    %c0_i32 = arith.constant 0 : i32
    %c0_i32_0 = arith.constant 0 : i32
    %c0_i32_1 = arith.constant 0 : i32
    return %c0_i32, %c0_i32_0 : i32, i32
  }
  func.func @transform_5(%arg0: i32) -> (i32, i32) {
    %c0_i32 = arith.constant 0 : i32
    %c0_i32_0 = arith.constant 0 : i32
    %c0_i32_1 = arith.constant 0 : i32
    return %c0_i32, %c0_i32_0 : i32, i32
  }
  func.func @transform_6(%arg0: i32) -> (i32, i32) {
    %c0_i32 = arith.constant 0 : i32
    %c0_i32_0 = arith.constant 0 : i32
    %c0_i32_1 = arith.constant 0 : i32
    return %c0_i32, %c0_i32_0 : i32, i32
  }
  func.func @transform_7(%arg0: i32) -> (i32, i32) {
    %c0_i32 = arith.constant 0 : i32
    %c0_i32_0 = arith.constant 0 : i32
    %c0_i32_1 = arith.constant 0 : i32
    return %c0_i32, %c0_i32_0 : i32, i32
  }
  func.func @transform_8(%arg0: i32) -> (i32, i32, i32) {
    %c0_i32 = arith.constant 0 : i32
    %c0_i32_0 = arith.constant 0 : i32
    %c0_i32_1 = arith.constant 0 : i32
    return %arg0, %c0_i32, %c0_i32_0 : i32, i32, i32
  }
}

</mosaic_0001>

<llo_original>
// kernel: resblock_forward.1
$region0: #{resblock_forward.1}
  #allocation0 [shape = 'u32[]', space=smem, size = 0x4, offset = 0x4, fixed_abs, tag = 'smem constant byte address 0x4 - core index']
  #allocation1 [shape = 'u32[72,128]{1,0:T(1,128)}', space=vmem, size = 0x9000, scoped, tag = 'internal scratch']
  %s0 = inlined_call_operand.vmem [shape: bf16[2,16,256], index: 0, kind: input, shape index: {}]
  %s1 = inlined_call_operand.vmem [shape: bf16[64,144], index: 1, kind: input, shape index: {}]
  %s2 = inlined_call_operand.vmem [shape: bf16[64,576], index: 2, kind: input, shape index: {}]
  %s3 = inlined_call_operand.vmem [shape: bf16[64,576], index: 3, kind: input, shape index: {}]
  %s4 = inlined_call_operand.vmem [shape: bf16[64,576], index: 4, kind: input, shape index: {}]
  %s5 = inlined_call_operand.vmem [shape: bf16[4,144], index: 5, kind: input, shape index: {}]
  %s6 = inlined_call_operand.vmem [shape: bf16[4,576], index: 6, kind: input, shape index: {}]
  %s7 = inlined_call_operand.vmem [shape: f32[4,1], index: 7, kind: input, shape index: {}]
  %s8 = inlined_call_operand.vmem [shape: f32[2,4,256], index: 8, kind: output, shape index: {}]
  %s9 = sld [smem:[#allocation0]]
  $region65: #{resblock_forward.1} parent=0
    _
  %s11 = ssub.s32 1, %s9
  %s12 = scalar_select 0, %s11, %s9
  loop: start=0, step=1, limit=4
  $region2: #{resblock_forward.1} parent=0 // loop_pre_header
    _
  $region3: #{resblock_forward.1} parent=0 // loop_header
    %s14 = sphi 0, %s18
    %p15 = scmp.ge.s32.totalorder %s14, 4
    %s24 = sphi 0, %s26
    %s27 = sphi 0, %s24
    %s28 = sphi 0, %s27
    %s44 = sphi 0, %s28
    %s48 = sphi 0, %s48
    %s50 = sphi 0, %s48
    %s51 = sphi 0, %s50
    %s65 = sphi 0, %s51
    %s69 = sphi 0, %s69
    %s71 = sphi 0, %s69
    %s72 = sphi 0, %s71
    %s86 = sphi 0, %s72
    %s90 = sphi 0, %s90
    %s92 = sphi 0, %s90
    %s93 = sphi 0, %s92
    %s107 = sphi 0, %s93
    %s111 = sphi 0, %s111
    %s113 = sphi 0, %s111
    %s114 = sphi 0, %s113
    %s128 = sphi 0, %s114
    %s132 = sphi 0, %s132
    %s134 = sphi 0, %s132
    %s135 = sphi 0, %s134
    %s149 = sphi 0, %s135
    %s153 = sphi 0, %s153
    %s155 = sphi 0, %s153
    %s156 = sphi 0, %s155
    %s170 = sphi 0, %s156
    %s174 = sphi 0, %s174
    %s176 = sphi 0, %s174
    %s177 = sphi 0, %s176
    %s191 = sphi 0, %s177
    %s197 = sphi 0, %s199
    %s200 = sphi 0, %s197
    %s201 = sphi 0, %s200
    %s217 = sphi 0, %s201
  $region4: #{resblock_forward.1} parent=0 // loop_header_branch
    %17 = sbr.rel (%p15) target = $region8
  $region5: #{resblock_forward.1} parent=0 // loop_body
    %s19 = ssub.s32 %s14, 1
    %s20 = ssub.s32 %s14, 2
    %s21 = sadd.s32 %s14, 1
    %s22 = ssub.s32 %s14, %s21
    %p23 = scmp.eq.s32.totalorder %s22, 0
    %s25 = sadd.s32 %s24, 1
    %s26 = scalar_select %p23, %s24, %s25
    %p29 = pneg %p23
    %p30 = scmp.eq.s32.totalorder %s14, 1
    %p31 = por %p29, %p30
    %p32 = scmp.ne.s32.totalorder %s24, %s27
    %p33 = scmp.eq.s32.totalorder %s14, 0
    %p34 = por %p32, %p33
    %p35 = scmp.ne.s32.totalorder %s24, %s27
    %p36 = scmp.eq.s32.totalorder %s19, 1
    %p37 = por %p35, %p36
    %p38 = scmp.ne.s32.totalorder %s27, %s28
    %p39 = scmp.eq.s32.totalorder %s19, 0
    %p40 = por %p38, %p39
    %p41 = scmp.ne.s32.totalorder %s27, %s28
    %p42 = scmp.eq.s32.totalorder %s20, 1
    %p43 = por %p41, %p42
    %p45 = scmp.ne.s32.totalorder %s28, %s44
    %p46 = scmp.eq.s32.totalorder %s20, 0
    %p47 = por %p45, %p46
    %s49 = sadd.s32 %s48, 1
    %p52 = scmp.eq.s32.totalorder %s14, 1
    %p53 = scmp.ne.s32.totalorder %s48, %s50
    %p54 = scmp.eq.s32.totalorder %s14, 0
    %p55 = por %p53, %p54
    %p56 = scmp.ne.s32.totalorder %s48, %s50
    %p57 = scmp.eq.s32.totalorder %s19, 1
    %p58 = por %p56, %p57
    %p59 = scmp.ne.s32.totalorder %s50, %s51
    %p60 = scmp.eq.s32.totalorder %s19, 0
    %p61 = por %p59, %p60
    %p62 = scmp.ne.s32.totalorder %s50, %s51
    %p63 = scmp.eq.s32.totalorder %s20, 1
    %p64 = por %p62, %p63
    %p66 = scmp.ne.s32.totalorder %s51, %s65
    %p67 = scmp.eq.s32.totalorder %s20, 0
    %p68 = por %p66, %p67
    %s70 = sadd.s32 %s69, 1
    %p73 = scmp.eq.s32.totalorder %s14, 1
    %p74 = scmp.ne.s32.totalorder %s69, %s71
    %p75 = scmp.eq.s32.totalorder %s14, 0
    %p76 = por %p74, %p75
    %p77 = scmp.ne.s32.totalorder %s69, %s71
    %p78 = scmp.eq.s32.totalorder %s19, 1
    %p79 = por %p77, %p78
    %p80 = scmp.ne.s32.totalorder %s71, %s72
    %p81 = scmp.eq.s32.totalorder %s19, 0
    %p82 = por %p80, %p81
    %p83 = scmp.ne.s32.totalorder %s71, %s72
    %p84 = scmp.eq.s32.totalorder %s20, 1
    %p85 = por %p83, %p84
    %p87 = scmp.ne.s32.totalorder %s72, %s86
    %p88 = scmp.eq.s32.totalorder %s20, 0
    %p89 = por %p87, %p88
    %s91 = sadd.s32 %s90, 1
    %p94 = scmp.eq.s32.totalorder %s14, 1
    %p95 = scmp.ne.s32.totalorder %s90, %s92
    %p96 = scmp.eq.s32.totalorder %s14, 0
    %p97 = por %p95, %p96
    %p98 = scmp.ne.s32.totalorder %s90, %s92
    %p99 = scmp.eq.s32.totalorder %s19, 1
    %p100 = por %p98, %p99
    %p101 = scmp.ne.s32.totalorder %s92, %s93
    %p102 = scmp.eq.s32.totalorder %s19, 0
    %p103 = por %p101, %p102
    %p104 = scmp.ne.s32.totalorder %s92, %s93
    %p105 = scmp.eq.s32.totalorder %s20, 1
    %p106 = por %p104, %p105
    %p108 = scmp.ne.s32.totalorder %s93, %s107
    %p109 = scmp.eq.s32.totalorder %s20, 0
    %p110 = por %p108, %p109
    %s112 = sadd.s32 %s111, 1
    %p115 = scmp.eq.s32.totalorder %s14, 1
    %p116 = scmp.ne.s32.totalorder %s111, %s113
    %p117 = scmp.eq.s32.totalorder %s14, 0
    %p118 = por %p116, %p117
    %p119 = scmp.ne.s32.totalorder %s111, %s113
    %p120 = scmp.eq.s32.totalorder %s19, 1
    %p121 = por %p119, %p120
    %p122 = scmp.ne.s32.totalorder %s113, %s114
    %p123 = scmp.eq.s32.totalorder %s19, 0
    %p124 = por %p122, %p123
    %p125 = scmp.ne.s32.totalorder %s113, %s114
    %p126 = scmp.eq.s32.totalorder %s20, 1
    %p127 = por %p125, %p126
    %p129 = scmp.ne.s32.totalorder %s114, %s128
    %p130 = scmp.eq.s32.totalorder %s20, 0
    %p131 = por %p129, %p130
    %s133 = sadd.s32 %s132, 1
    %p136 = scmp.eq.s32.totalorder %s14, 1
    %p137 = scmp.ne.s32.totalorder %s132, %s134
    %p138 = scmp.eq.s32.totalorder %s14, 0
    %p139 = por %p137, %p138
    %p140 = scmp.ne.s32.totalorder %s132, %s134
    %p141 = scmp.eq.s32.totalorder %s19, 1
    %p142 = por %p140, %p141
    %p143 = scmp.ne.s32.totalorder %s134, %s135
    %p144 = scmp.eq.s32.totalorder %s19, 0
    %p145 = por %p143, %p144
    %p146 = scmp.ne.s32.totalorder %s134, %s135
    %p147 = scmp.eq.s32.totalorder %s20, 1
    %p148 = por %p146, %p147
    %p150 = scmp.ne.s32.totalorder %s135, %s149
    %p151 = scmp.eq.s32.totalorder %s20, 0
    %p152 = por %p150, %p151
    %s154 = sadd.s32 %s153, 1
    %p157 = scmp.eq.s32.totalorder %s14, 1
    %p158 = scmp.ne.s32.totalorder %s153, %s155
    %p159 = scmp.eq.s32.totalorder %s14, 0
    %p160 = por %p158, %p159
    %p161 = scmp.ne.s32.totalorder %s153, %s155
    %p162 = scmp.eq.s32.totalorder %s19, 1
    %p163 = por %p161, %p162
    %p164 = scmp.ne.s32.totalorder %s155, %s156
    %p165 = scmp.eq.s32.totalorder %s19, 0
    %p166 = por %p164, %p165
    %p167 = scmp.ne.s32.totalorder %s155, %s156
    %p168 = scmp.eq.s32.totalorder %s20, 1
    %p169 = por %p167, %p168
    %p171 = scmp.ne.s32.totalorder %s156, %s170
    %p172 = scmp.eq.s32.totalorder %s20, 0
    %p173 = por %p171, %p172
    %s175 = sadd.s32 %s174, 1
    %p178 = scmp.eq.s32.totalorder %s14, 1
    %p179 = scmp.ne.s32.totalorder %s174, %s176
    %p180 = scmp.eq.s32.totalorder %s14, 0
    %p181 = por %p179, %p180
    %p182 = scmp.ne.s32.totalorder %s174, %s176
    %p183 = scmp.eq.s32.totalorder %s19, 1
    %p184 = por %p182, %p183
    %p185 = scmp.ne.s32.totalorder %s176, %s177
    %p186 = scmp.eq.s32.totalorder %s19, 0
    %p187 = por %p185, %p186
    %p188 = scmp.ne.s32.totalorder %s176, %s177
    %p189 = scmp.eq.s32.totalorder %s20, 1
    %p190 = por %p188, %p189
    %p192 = scmp.ne.s32.totalorder %s177, %s191
    %p193 = scmp.eq.s32.totalorder %s20, 0
    %p194 = por %p192, %p193
    %s195 = ssub.s32 %s14, %s21
    %p196 = scmp.eq.s32.totalorder %s195, 0
    %s198 = sadd.s32 %s197, 1
    %s199 = scalar_select %p196, %s197, %s198
    %p202 = pneg %p196
    %p203 = scmp.eq.s32.totalorder %s14, 1
    %p204 = por %p202, %p203
    %p205 = scmp.ne.s32.totalorder %s197, %s200
    %p206 = scmp.eq.s32.totalorder %s14, 0
    %p207 = por %p205, %p206
    %p208 = scmp.ne.s32.totalorder %s197, %s200
    %p209 = scmp.eq.s32.totalorder %s19, 1
    %p210 = por %p208, %p209
    %p211 = scmp.ne.s32.totalorder %s200, %s201
    %p212 = scmp.eq.s32.totalorder %s19, 0
    %p213 = por %p211, %p212
    %p214 = scmp.ne.s32.totalorder %s200, %s201
    %p215 = scmp.eq.s32.totalorder %s20, 1
    %p216 = por %p214, %p215
    %p218 = scmp.ne.s32.totalorder %s201, %s217
    %p219 = scmp.eq.s32.totalorder %s20, 0
    %p220 = por %p218, %p219
    %p221 = scmp.le.s32.totalorder 1, %s14
    %p222 = scmp.lt.s32.totalorder %s14, 3
    %p223 = pnand %p221, %p222
    %p224 = pneg %p223
    // Predicated region
    $region9: #{resblock_forward.1} parent=5 // pred_check
      _
    $region10: #{resblock_forward.1} parent=5 // pred_check_branch
      %226 = sbr.rel (%p223) target = $region12
    $region11: #{resblock_forward.1} parent=5 // pred_region
      %s227 = ssub.s32 %s14, 1
      // Predicated region
      $region13: #{resblock_forward.1} parent=11 // pred_check
        %p228 = pneg %p61
      $region14: #{resblock_forward.1} parent=11 // pred_check_branch
        %230 = sbr.rel (%p228) target = $region16
      $region15: #{resblock_forward.1} parent=11 // pred_region
        _
      $region16: #{resblock_forward.1} parent=11 // pred_fallthru
        _
      // Predicated region
      $region17: #{resblock_forward.1} parent=11 // pred_check
        %p231 = pneg %p82
      $region18: #{resblock_forward.1} parent=11 // pred_check_branch
        %233 = sbr.rel (%p231) target = $region20
      $region19: #{resblock_forward.1} parent=11 // pred_region
        _
      $region20: #{resblock_forward.1} parent=11 // pred_fallthru
        _
      // Predicated region
      $region21: #{resblock_forward.1} parent=11 // pred_check
        %p234 = pneg %p103
      $region22: #{resblock_forward.1} parent=11 // pred_check_branch
        %236 = sbr.rel (%p234) target = $region24
      $region23: #{resblock_forward.1} parent=11 // pred_region
        _
      $region24: #{resblock_forward.1} parent=11 // pred_fallthru
        _
      // Predicated region
      $region25: #{resblock_forward.1} parent=11 // pred_check
        %p237 = pneg %p124
      $region26: #{resblock_forward.1} parent=11 // pred_check_branch
        %239 = sbr.rel (%p237) target = $region28
      $region27: #{resblock_forward.1} parent=11 // pred_region
        _
      $region28: #{resblock_forward.1} parent=11 // pred_fallthru
        _
      // Predicated region
      $region29: #{resblock_forward.1} parent=11 // pred_check
        %p240 = pneg %p145
      $region30: #{resblock_forward.1} parent=11 // pred_check_branch
        %242 = sbr.rel (%p240) target = $region32
      $region31: #{resblock_forward.1} parent=11 // pred_region
        _
      $region32: #{resblock_forward.1} parent=11 // pred_fallthru
        _
      // Predicated region
      $region33: #{resblock_forward.1} parent=11 // pred_check
        %p243 = pneg %p166
      $region34: #{resblock_forward.1} parent=11 // pred_check_branch
        %245 = sbr.rel (%p243) target = $region36
      $region35: #{resblock_forward.1} parent=11 // pred_region
        _
      $region36: #{resblock_forward.1} parent=11 // pred_fallthru
        _
      // Predicated region
      $region37: #{resblock_forward.1} parent=11 // pred_check
        %p246 = pneg %p187
      $region38: #{resblock_forward.1} parent=11 // pred_check_branch
        %248 = sbr.rel (%p246) target = $region40
      $region39: #{resblock_forward.1} parent=11 // pred_region
        _
      $region40: #{resblock_forward.1} parent=11 // pred_fallthru
        _
    $region12: #{resblock_forward.1} parent=5 // pred_fallthru
      _
    %p249 = scmp.lt.s32.totalorder %s14, 2
    // Predicated region
    $region41: #{resblock_forward.1} parent=5 // pred_check
      %p250 = pneg %p249
    $region42: #{resblock_forward.1} parent=5 // pred_check_branch
      %252 = sbr.rel (%p250) target = $region44
    $region43: #{resblock_forward.1} parent=5 // pred_region
      // Predicated region
      $region45: #{resblock_forward.1} parent=43 // pred_check
        %p253 = pneg %p34
      $region46: #{resblock_forward.1} parent=43 // pred_check_branch
        %255 = sbr.rel (%p253) target = $region48
      $region47: #{resblock_forward.1} parent=43 // pred_region
        %p256 = scmp.lt.s32.totalorder %s14, 1
        %s257 = scalar_select %p256, %s14, 1
        %s258 = smul.addr %s257, 4
        %s259 = smul.addr %s258, 4
        %s260 = scalar_lea.vmem %s0, %s259
      $region48: #{resblock_forward.1} parent=43 // pred_fallthru
        _
    $region44: #{resblock_forward.1} parent=5 // pred_fallthru
      _
    %p261 = scmp.le.s32.totalorder 1, %s14
    %p262 = scmp.lt.s32.totalorder %s14, 3
    %p263 = pnand %p261, %p262
    %p264 = pneg %p263
    // Predicated region
    $region49: #{resblock_forward.1} parent=5 // pred_check
      _
    $region50: #{resblock_forward.1} parent=5 // pred_check_branch
      %266 = sbr.rel (%p263) target = $region52
    $region51: #{resblock_forward.1} parent=5 // pred_region
      %s267 = ssub.s32 %s14, 1
      %p268 = scmp.lt.s32.totalorder %s19, 1
      %s269 = scalar_select %p268, %s19, 1
      %s270 = smul.addr %s269, 4
      %s271 = smul.addr %s270, 4
      %s272 = scalar_lea.vmem %s0, %s271
      %p273 = pneg %p40
      %p274 = pneg %p37
      %p275 = pneg %p61
      %p276 = pneg %p58
      %p277 = pneg %p82
      %p278 = pneg %p79
      %p279 = pneg %p103
      %p280 = pneg %p100
      %p281 = pneg %p124
      %p282 = pneg %p121
      %p283 = pneg %p145
      %p284 = pneg %p142
      %p285 = pneg %p166
      %p286 = pneg %p163
      %p287 = pneg %p187
      %p288 = pneg %p184
      %p289 = pneg %p213
      %p290 = pneg %p210
      %p291 = scmp.lt.s32.totalorder %s19, 1
      %s292 = scalar_select %p291, %s19, 1
      %s293 = smul.addr %s292, 2
      %s294 = smul.addr %s293, 4
      %s295 = scalar_lea.vmem %s8, %s294
      %p296 = scmp.lt.s32.totalorder %s19, 1
      %s297 = scalar_select %p296, %s19, 1
      %s298 = smul.addr %s297, 4
      %s299 = smul.addr %s298, 4
      %s300 = scalar_lea.vmem %s0, %s299
      %p301 = scmp.lt.s32.totalorder %s19, 1
      %s302 = scalar_select %p301, %s19, 1
      %s303 = smul.addr %s302, 2
      %s304 = smul.addr %s303, 4
      %s305 = scalar_lea.vmem %s8, %s304
      %v309 = vlaneseq
      %v310 = vand.u32 %v309, 127
      %v311 = vadd.s32 %v310, 128
      %vm312 = vcmp.lt.s32.totalorder %v310, 0
      %v313 = vsub.s32 0, %v310
      %v314 = vsel %vm312, %v313, %v310
      %v315 = vshrl.u32 %v314, 4
      %v316 = vand.u32 %v314, 15
      %v317 = vsub.s32 0, %v316
      %v318 = vsel %vm312, %v317, %v316
      %vm319 = vcmp.lt.s32.totalorder %v311, 0
      %v320 = vsub.s32 0, %v311
      %v321 = vsel %vm319, %v320, %v311
      %v322 = vshrl.u32 %v321, 4
      %v323 = vand.u32 %v321, 15
      %v324 = vsub.s32 0, %v323
      %v325 = vsel %vm319, %v324, %v323
      %vm326 = vcmp.ne.s32.totalorder %v318, 0
      %vm327 = vcmp.ne.s32.totalorder %v325, 0
      %vm328 = vcmp.lt.s32.totalorder %v318, 0
      %vm329 = vcmp.lt.s32.totalorder %v325, 0
      %vm330 = vmand %vm328, %vm326
      %vm331 = vmand %vm329, %vm327
      %v332 = vadd.s32 %v318, 16
      %v333 = vadd.s32 %v325, 16
      %v334 = vsel %vm330, %v332, %v318
      %v335 = vsel %vm331, %v333, %v325
      %vm336 = vcmp.ge.s32.totalorder %v334, 1
      %vm337 = vcmp.ge.s32.totalorder %v335, 1
      %vm338 = vcmp.le.s32.totalorder %v334, 14
      %vm339 = vcmp.le.s32.totalorder %v335, 14
      %v340 = vld [vmem:[%s300] sm:$0xff]
      %v341 = vld [vmem:[%s300 + $0x8] sm:$0xff]
      %v344 = vunpack.c.l.b16 %v340
      %v345 = vunpack.c.h.b16 %v340
      %v346 = vunpack.c.l.b16 %v341
      %v347 = vunpack.c.h.b16 %v341
      %v348 = vpack.c.b16 %v346, %v344
      %v349 = vpack.c.b16 %v347, %v345
      %v352 = vsel %vm336, 1, 0
      %v353 = vsel %vm337, 1, 0
      %vm354 = vcmp.eq.s32.totalorder %v352, 1
      %vm355 = vcmp.eq.s32.totalorder %v353, 1
      %vm356 = vmpackc.low %vm355, %vm354
      %v357 = vsel %vm356, 65537, 0
      %v358 = vperm.slane %v357, 0
      %v359 = vperm.slane %v357, 4
      %360 = vrot.lane.b32.xlu0 %v358, 111
      %v361 = vpop.permute.xlu0 %360
      %362 = vrot.lane.b32.xlu0 %v359, 111
      %v363 = vpop.permute.xlu0 %362
      %vm364 = vcmask 908288
      %v365 = vsel %vm364, %v361, %v363
      %v366 = vunpack.c.l.b16 %v365
      %v367 = vunpack.c.h.b16 %v365
      %v368 = vunpack.c.l.b16 0
      %v369 = vunpack.c.h.b16 0
      %vm370 = vcmp.ne.s32.totalorder %v366, %v368
      %vm371 = vcmp.ne.s32.totalorder %v367, %v369
      %vm372 = vmpackc.low %vm371, %vm370
      %v373 = vunpack.c.l.b16 %v363
      %v374 = vunpack.c.h.b16 %v363
      %v375 = vunpack.c.l.b16 0
      %v376 = vunpack.c.h.b16 0
      %vm377 = vcmp.ne.s32.totalorder %v373, %v375
      %vm378 = vcmp.ne.s32.totalorder %v374, %v376
      %vm379 = vmpackc.low %vm378, %vm377
      %v380 = vsel %vm372, %v348, 0
      %v381 = vsel %vm379, %v349, 0
      %v382 = vsel %vm338, 1, 0
      %v383 = vsel %vm339, 1, 0
      %vm384 = vcmp.eq.s32.totalorder %v382, 1
      %vm385 = vcmp.eq.s32.totalorder %v383, 1
      %vm386 = vmpackc.low %vm385, %vm384
      %v387 = vsel %vm386, 65537, 0
      %v388 = vperm.slane %v387, 0
      %v389 = vperm.slane %v387, 4
      %390 = vrot.lane.b32.xlu0 %v388, 113
      %v391 = vpop.permute.xlu0 %390
      %392 = vrot.lane.b32.xlu0 %v389, 113
      %v393 = vpop.permute.xlu0 %392
      %vm394 = vcmask 924672
      %v395 = vsel %vm394, %v391, %v393
      %v396 = vunpack.c.l.b16 %v395
      %v397 = vunpack.c.h.b16 %v395
      %v398 = vunpack.c.l.b16 0
      %v399 = vunpack.c.h.b16 0
      %vm400 = vcmp.ne.s32.totalorder %v396, %v398
      %vm401 = vcmp.ne.s32.totalorder %v397, %v399
      %vm402 = vmpackc.low %vm401, %vm400
      %v403 = vunpack.c.l.b16 %v393
      %v404 = vunpack.c.h.b16 %v393
      %v405 = vunpack.c.l.b16 0
      %v406 = vunpack.c.h.b16 0
      %vm407 = vcmp.ne.s32.totalorder %v403, %v405
      %vm408 = vcmp.ne.s32.totalorder %v404, %v406
      %vm409 = vmpackc.low %vm408, %vm407
      %v410 = vsel %vm402, %v348, 0
      %v411 = vsel %vm409, %v349, 0
      %412 = vrot.lane.b32.xlu0 %v358, 127
      %v413 = vpop.permute.xlu0 %412
      %414 = vrot.lane.b32.xlu0 %v359, 127
      %v415 = vpop.permute.xlu0 %414
      %vm416 = vcmask 1039360
      %v417 = vsel %vm416, %v413, %v415
      %v418 = vunpack.c.l.b16 %v417
      %v419 = vunpack.c.h.b16 %v417
      %v420 = vunpack.c.l.b16 0
      %v421 = vunpack.c.h.b16 0
      %vm422 = vcmp.ne.s32.totalorder %v418, %v420
      %vm423 = vcmp.ne.s32.totalorder %v419, %v421
      %vm424 = vmpackc.low %vm423, %vm422
      %v425 = vunpack.c.l.b16 %v415
      %v426 = vunpack.c.h.b16 %v415
      %v427 = vunpack.c.l.b16 0
      %v428 = vunpack.c.h.b16 0
      %vm429 = vcmp.ne.s32.totalorder %v425, %v427
      %vm430 = vcmp.ne.s32.totalorder %v426, %v428
      %vm431 = vmpackc.low %vm430, %vm429
      %v432 = vsel %vm424, %v348, 0
      %v433 = vsel %vm431, %v349, 0
      %434 = vrot.lane.b32.xlu0 %v388, 1
      %v435 = vpop.permute.xlu0 %434
      %436 = vrot.lane.b32.xlu0 %v389, 1
      %v437 = vpop.permute.xlu0 %436
      %vm438 = vcmask 7168
      %v439 = vsel %vm438, %v435, %v437
      %v440 = vunpack.c.l.b16 %v435
      %v441 = vunpack.c.h.b16 %v435
      %v442 = vunpack.c.l.b16 0
      %v443 = vunpack.c.h.b16 0
      %vm444 = vcmp.ne.s32.totalorder %v440, %v442
      %vm445 = vcmp.ne.s32.totalorder %v441, %v443
      %vm446 = vmpackc.low %vm445, %vm444
      %v447 = vunpack.c.l.b16 %v439
      %v448 = vunpack.c.h.b16 %v439
      %v449 = vunpack.c.l.b16 0
      %v450 = vunpack.c.h.b16 0
      %vm451 = vcmp.ne.s32.totalorder %v447, %v449
      %vm452 = vcmp.ne.s32.totalorder %v448, %v450
      %vm453 = vmpackc.low %vm452, %vm451
      %v454 = vsel %vm446, %v348, 0
      %v455 = vsel %vm453, %v349, 0
      %456 = vrot.lane.b32.xlu0 %v358, 15
      %v457 = vpop.permute.xlu0 %456
      %458 = vrot.lane.b32.xlu0 %v359, 15
      %v459 = vpop.permute.xlu0 %458
      %vm460 = vcmask 121856
      %v461 = vsel %vm460, %v457, %v459
      %v462 = vunpack.c.l.b16 %v457
      %v463 = vunpack.c.h.b16 %v457
      %v464 = vunpack.c.l.b16 0
      %v465 = vunpack.c.h.b16 0
      %vm466 = vcmp.ne.s32.totalorder %v462, %v464
      %vm467 = vcmp.ne.s32.totalorder %v463, %v465
      %vm468 = vmpackc.low %vm467, %vm466
      %v469 = vunpack.c.l.b16 %v461
      %v470 = vunpack.c.h.b16 %v461
      %v471 = vunpack.c.l.b16 0
      %v472 = vunpack.c.h.b16 0
      %vm473 = vcmp.ne.s32.totalorder %v469, %v471
      %vm474 = vcmp.ne.s32.totalorder %v470, %v472
      %vm475 = vmpackc.low %vm474, %vm473
      %v476 = vsel %vm468, %v348, 0
      %v477 = vsel %vm475, %v349, 0
      %478 = vrot.lane.b32.xlu0 %v388, 17
      %v479 = vpop.permute.xlu0 %478
      %480 = vrot.lane.b32.xlu0 %v389, 17
      %v481 = vpop.permute.xlu0 %480
      %vm482 = vcmask 138240
      %v483 = vsel %vm482, %v479, %v481
      %v484 = vunpack.c.l.b16 %v479
      %v485 = vunpack.c.h.b16 %v479
      %v486 = vunpack.c.l.b16 0
      %v487 = vunpack.c.h.b16 0
      %vm488 = vcmp.ne.s32.totalorder %v484, %v486
      %vm489 = vcmp.ne.s32.totalorder %v485, %v487
      %vm490 = vmpackc.low %vm489, %vm488
      %v491 = vunpack.c.l.b16 %v483
      %v492 = vunpack.c.h.b16 %v483
      %v493 = vunpack.c.l.b16 0
      %v494 = vunpack.c.h.b16 0
      %vm495 = vcmp.ne.s32.totalorder %v491, %v493
      %vm496 = vcmp.ne.s32.totalorder %v492, %v494
      %vm497 = vmpackc.low %vm496, %vm495
      %v498 = vsel %vm490, %v348, 0
      %v499 = vsel %vm497, %v349, 0
      %501 = vrot.lane.b32.xlu0 0, 127
      %v502 = vpop.permute.xlu0 %501
      %503 = vrot.lane.b32.xlu0 %v348, 127
      %v504 = vpop.permute.xlu0 %503
      %505 = vrot.lane.b32.xlu0 %v349, 127
      %v506 = vpop.permute.xlu0 %505
      %v507 = vsel %vm416, %v502, %v504
      %v508 = vsel %vm416, %v504, %v506
      %511 = vrot.lane.b32.xlu0 0, 126
      %v512 = vpop.permute.xlu0 %511
      %513 = vrot.lane.b32.xlu0 %v410, 126
      %v514 = vpop.permute.xlu0 %513
      %515 = vrot.lane.b32.xlu0 %v411, 126
      %v516 = vpop.permute.xlu0 %515
      %vm517 = vcmask 1031168
      %v518 = vsel %vm517, %v512, %v514
      %v519 = vsel %vm517, %v514, %v516
      %522 = vrot.lane.b32.xlu0 0, 112
      %v523 = vpop.permute.xlu0 %522
      %524 = vrot.lane.b32.xlu0 %v432, 112
      %v525 = vpop.permute.xlu0 %524
      %526 = vrot.lane.b32.xlu0 %v433, 112
      %v527 = vpop.permute.xlu0 %526
      %vm528 = vcmask 916480
      %v529 = vsel %vm528, %v523, %v525
      %v530 = vsel %vm528, %v525, %v527
      %531 = vrot.lane.b32.xlu0 %v348, 111
      %v532 = vpop.permute.xlu0 %531
      %533 = vrot.lane.b32.xlu0 %v349, 111
      %v534 = vpop.permute.xlu0 %533
      %v535 = vsel %vm364, %v532, %v534
      %538 = vrot.lane.b32.xlu0 %v454, 110
      %v539 = vpop.permute.xlu0 %538
      %540 = vrot.lane.b32.xlu0 %v455, 110
      %v541 = vpop.permute.xlu0 %540
      %542 = vrot.lane.b32.xlu0 0, 110
      %v543 = vpop.permute.xlu0 %542
      %vm544 = vcmask 900096
      %v545 = vsel %vm544, %v539, %v541
      %v546 = vsel %vm544, %v541, %v543
      %549 = vrot.lane.b32.xlu0 %v476, 96
      %v550 = vpop.permute.xlu0 %549
      %551 = vrot.lane.b32.xlu0 %v477, 96
      %v552 = vpop.permute.xlu0 %551
      %553 = vrot.lane.b32.xlu0 0, 96
      %v554 = vpop.permute.xlu0 %553
      %vm555 = vcmask 785408
      %v556 = vsel %vm555, %v550, %v552
      %v557 = vsel %vm555, %v552, %v554
      %558 = vrot.lane.b32.xlu0 %v348, 95
      %v559 = vpop.permute.xlu0 %558
      %560 = vrot.lane.b32.xlu0 %v349, 95
      %v561 = vpop.permute.xlu0 %560
      %562 = vrot.lane.b32.xlu0 0, 95
      %v563 = vpop.permute.xlu0 %562
      %vm564 = vcmask 777216
      %v565 = vsel %vm564, %v559, %v561
      %v566 = vsel %vm564, %v561, %v563
      %569 = vrot.lane.b32.xlu0 %v498, 94
      %v570 = vpop.permute.xlu0 %569
      %571 = vrot.lane.b32.xlu0 %v499, 94
      %v572 = vpop.permute.xlu0 %571
      %573 = vrot.lane.b32.xlu0 0, 94
      %v574 = vpop.permute.xlu0 %573
      %vm575 = vcmask 769024
      %v576 = vsel %vm575, %v570, %v572
      %v577 = vsel %vm575, %v572, %v574
      %v578 = vld [vmem:[%s1] sm:$0xff]
      %v579 = vld [vmem:[%s1 + $0x8] sm:$0xff]
      %v580 = vld [vmem:[%s1 + $0x10] sm:$0xff]
      %v581 = vld [vmem:[%s1 + $0x18] sm:$0xff]
      %v582 = vld [vmem:[%s1 + $0x20] sm:$0xff]
      %v583 = vld [vmem:[%s1 + $0x28] sm:$0xff]
      %v584 = vld [vmem:[%s1 + $0x30] sm:$0xff]
      %v585 = vld [vmem:[%s1 + $0x38] sm:$0xff]
      %v594 = vunpack.c.l.b16 %v578
      %v595 = vunpack.c.h.b16 %v578
      %v596 = vunpack.c.l.b16 %v579
      %v597 = vunpack.c.h.b16 %v579
      %v598 = vunpack.c.l.b16 %v580
      %v599 = vunpack.c.h.b16 %v580
      %v600 = vunpack.c.l.b16 %v581
      %v601 = vunpack.c.h.b16 %v581
      %v602 = vunpack.c.l.b16 %v582
      %v603 = vunpack.c.h.b16 %v582
      %v604 = vunpack.c.l.b16 %v583
      %v605 = vunpack.c.h.b16 %v583
      %v606 = vunpack.c.l.b16 %v584
      %v607 = vunpack.c.h.b16 %v584
      %v608 = vunpack.c.l.b16 %v585
      %v609 = vunpack.c.h.b16 %v585
      %v610 = vpack.c.b16 %v596, %v594
      %v611 = vpack.c.b16 %v597, %v595
      %v612 = vpack.c.b16 %v600, %v598
      %v613 = vpack.c.b16 %v601, %v599
      %v614 = vpack.c.b16 %v604, %v602
      %v615 = vpack.c.b16 %v605, %v603
      %v616 = vpack.c.b16 %v608, %v606
      %v617 = vpack.c.b16 %v609, %v607
      %624 = vrot.lane.b32.xlu0 0, 17
      %v625 = vpop.permute.xlu0 %624
      %626 = vrot.lane.b32.xlu0 %v380, 17
      %v627 = vpop.permute.xlu0 %626
      %628 = vrot.lane.b32.xlu0 %v381, 17
      %v629 = vpop.permute.xlu0 %628
      %630 = vrot.lane.b32.xlu0 %v507, 17
      %v631 = vpop.permute.xlu0 %630
      %632 = vrot.lane.b32.xlu0 %v508, 17
      %v633 = vpop.permute.xlu0 %632
      %634 = vrot.lane.b32.xlu0 %v506, 17
      %v635 = vpop.permute.xlu0 %634
      %636 = vrot.lane.b32.xlu0 %v518, 17
      %v637 = vpop.permute.xlu0 %636
      %638 = vrot.lane.b32.xlu0 %v519, 17
      %v639 = vpop.permute.xlu0 %638
      %640 = vrot.lane.b32.xlu0 %v516, 17
      %v641 = vpop.permute.xlu0 %640
      %642 = vrot.lane.b32.xlu0 %v529, 17
      %v643 = vpop.permute.xlu0 %642
      %644 = vrot.lane.b32.xlu0 %v530, 17
      %v645 = vpop.permute.xlu0 %644
      %646 = vrot.lane.b32.xlu0 %v527, 17
      %v647 = vpop.permute.xlu0 %646
      %648 = vrot.lane.b32.xlu0 %v532, 17
      %v649 = vpop.permute.xlu0 %648
      %650 = vrot.lane.b32.xlu0 %v535, 17
      %v651 = vpop.permute.xlu0 %650
      %652 = vrot.lane.b32.xlu0 %v534, 17
      %v653 = vpop.permute.xlu0 %652
      %654 = vrot.lane.b32.xlu0 %v539, 17
      %v655 = vpop.permute.xlu0 %654
      %656 = vrot.lane.b32.xlu0 %v545, 17
      %v657 = vpop.permute.xlu0 %656
      %658 = vrot.lane.b32.xlu0 %v546, 17
      %v659 = vpop.permute.xlu0 %658
      %660 = vrot.lane.b32.xlu0 %v550, 17
      %v661 = vpop.permute.xlu0 %660
      %662 = vrot.lane.b32.xlu0 %v556, 17
      %v663 = vpop.permute.xlu0 %662
      %664 = vrot.lane.b32.xlu0 %v557, 17
      %v665 = vpop.permute.xlu0 %664
      %666 = vrot.lane.b32.xlu0 %v559, 17
      %v667 = vpop.permute.xlu0 %666
      %668 = vrot.lane.b32.xlu0 %v565, 17
      %v669 = vpop.permute.xlu0 %668
      %670 = vrot.lane.b32.xlu0 %v566, 17
      %v671 = vpop.permute.xlu0 %670
      %672 = vrot.lane.b32.xlu0 %v570, 17
      %v673 = vpop.permute.xlu0 %672
      %674 = vrot.lane.b32.xlu0 %v576, 17
      %v675 = vpop.permute.xlu0 %674
      %676 = vrot.lane.b32.xlu0 %v577, 17
      %v677 = vpop.permute.xlu0 %676
      %v678 = vsel %vm482, %v625, %v627
      %v679 = vsel %vm482, %v627, %v629
      %v680 = vsel %vm482, %v631, %v633
      %v681 = vsel %vm482, %v633, %v635
      %v682 = vsel %vm482, %v637, %v639
      %v683 = vsel %vm482, %v639, %v641
      %v684 = vsel %vm482, %v643, %v645
      %v685 = vsel %vm482, %v645, %v647
      %v686 = vsel %vm482, %v649, %v651
      %v687 = vsel %vm482, %v651, %v653
      %v688 = vsel %vm482, %v655, %v657
      %v689 = vsel %vm482, %v657, %v659
      %v690 = vsel %vm482, %v661, %v663
      %v691 = vsel %vm482, %v663, %v665
      %v692 = vsel %vm482, %v667, %v669
      %v693 = vsel %vm482, %v669, %v671
      %v694 = vsel %vm482, %v673, %v675
      %v695 = vsel %vm482, %v675, %v677
      %vm714 = vcmask 130048
      %v716 = vsel %vm714, %v611, 0
      %v719 = vsel %vm714, %v613, 0
      %v722 = vsel %vm714, %v615, 0
      %v725 = vsel %vm714, %v617, 0
      %727 = vmatpush.bf16.msra.mxu0 %v692
      %728 = vmatpush.bf16.msra.mxu0 %v690
      %729 = vmatpush.bf16.msra.mxu0 %v688
      %730 = vmatpush.bf16.msra.mxu0 %v686
      %731 = vmatpush.bf16.msra.mxu0 %v684
      %732 = vmatpush.bf16.msra.mxu0 %v682
      %733 = vmatpush.bf16.msra.mxu0 %v680
      %734 = vmatpush.bf16.msra.mxu0 %v678
      %735 = vmatmul.bf16.gmra.mxu0 %v610
      %v736 = vpop.f32.mrf.mxu0
      %v737 = vadd.f32 0.0, %v736
      %v738 = vpop.f32.mrf.mxu0
      %v739 = vadd.f32 0.0, %v738
      %740 = vmatmul.bf16.gmra.mxu0 %v612
      %v741 = vpop.f32.mrf.mxu0
      %v742 = vadd.f32 0.0, %v741
      %v743 = vpop.f32.mrf.mxu0
      %v744 = vadd.f32 0.0, %v743
      %745 = vmatmul.bf16.gmra.mxu0 %v614
      %v746 = vpop.f32.mrf.mxu0
      %v747 = vadd.f32 0.0, %v746
      %v748 = vpop.f32.mrf.mxu0
      %v749 = vadd.f32 0.0, %v748
      %750 = vmatmul.bf16.gmra.mxu0 %v616
      %v751 = vpop.f32.mrf.mxu0
      %v752 = vadd.f32 0.0, %v751
      %v753 = vpop.f32.mrf.mxu0
      %v754 = vadd.f32 0.0, %v753
      %755 = vdwg.mxu0
      %756 = vmatpush.bf16.msra.mxu0 0
      %757 = vmatpush.bf16.msra.mxu0 0
      %758 = vmatpush.bf16.msra.mxu0 0
      %759 = vmatpush.bf16.msra.mxu0 0
      %760 = vmatpush.bf16.msra.mxu0 0
      %761 = vmatpush.bf16.msra.mxu0 0
      %762 = vmatpush.bf16.msra.mxu0 0
      %763 = vmatpush.bf16.msra.mxu0 %v694
      %764 = vmatmul.bf16.gmra.mxu0 %v716
      %v765 = vpop.f32.mrf.mxu0
      %v766 = vadd.f32 %v737, %v765
      %v767 = vpop.f32.mrf.mxu0
      %v768 = vadd.f32 %v739, %v767
      %769 = vmatmul.bf16.gmra.mxu0 %v719
      %v770 = vpop.f32.mrf.mxu0
      %v771 = vadd.f32 %v742, %v770
      %v772 = vpop.f32.mrf.mxu0
      %v773 = vadd.f32 %v744, %v772
      %774 = vmatmul.bf16.gmra.mxu0 %v722
      %v775 = vpop.f32.mrf.mxu0
      %v776 = vadd.f32 %v747, %v775
      %v777 = vpop.f32.mrf.mxu0
      %v778 = vadd.f32 %v749, %v777
      %779 = vmatmul.bf16.gmra.mxu0 %v725
      %v780 = vpop.f32.mrf.mxu0
      %v781 = vadd.f32 %v752, %v780
      %v782 = vpop.f32.mrf.mxu0
      %v783 = vadd.f32 %v754, %v782
      %784 = vdwg.mxu0
      %785 = vmatpush.bf16.msra.mxu0 %v693
      %786 = vmatpush.bf16.msra.mxu0 %v691
      %787 = vmatpush.bf16.msra.mxu0 %v689
      %788 = vmatpush.bf16.msra.mxu0 %v687
      %789 = vmatpush.bf16.msra.mxu0 %v685
      %790 = vmatpush.bf16.msra.mxu0 %v683
      %791 = vmatpush.bf16.msra.mxu0 %v681
      %792 = vmatpush.bf16.msra.mxu0 %v679
      %793 = vmatmul.bf16.gmra.mxu0 %v610
      %v794 = vpop.f32.mrf.mxu0
      %v795 = vadd.f32 0.0, %v794
      %v796 = vpop.f32.mrf.mxu0
      %v797 = vadd.f32 0.0, %v796
      %798 = vmatmul.bf16.gmra.mxu0 %v612
      %v799 = vpop.f32.mrf.mxu0
      %v800 = vadd.f32 0.0, %v799
      %v801 = vpop.f32.mrf.mxu0
      %v802 = vadd.f32 0.0, %v801
      %803 = vmatmul.bf16.gmra.mxu0 %v614
      %v804 = vpop.f32.mrf.mxu0
      %v805 = vadd.f32 0.0, %v804
      %v806 = vpop.f32.mrf.mxu0
      %v807 = vadd.f32 0.0, %v806
      %808 = vmatmul.bf16.gmra.mxu0 %v616
      %v809 = vpop.f32.mrf.mxu0
      %v810 = vadd.f32 0.0, %v809
      %v811 = vpop.f32.mrf.mxu0
      %v812 = vadd.f32 0.0, %v811
      %813 = vdwg.mxu0
      %814 = vmatpush.bf16.msra.mxu0 0
      %815 = vmatpush.bf16.msra.mxu0 0
      %816 = vmatpush.bf16.msra.mxu0 0
      %817 = vmatpush.bf16.msra.mxu0 0
      %818 = vmatpush.bf16.msra.mxu0 0
      %819 = vmatpush.bf16.msra.mxu0 0
      %820 = vmatpush.bf16.msra.mxu0 0
      %821 = vmatpush.bf16.msra.mxu0 %v695
      %822 = vmatmul.bf16.gmra.mxu0 %v716
      %v823 = vpop.f32.mrf.mxu0
      %v824 = vadd.f32 %v795, %v823
      %v825 = vpop.f32.mrf.mxu0
      %v826 = vadd.f32 %v797, %v825
      %827 = vmatmul.bf16.gmra.mxu0 %v719
      %v828 = vpop.f32.mrf.mxu0
      %v829 = vadd.f32 %v800, %v828
      %v830 = vpop.f32.mrf.mxu0
      %v831 = vadd.f32 %v802, %v830
      %832 = vmatmul.bf16.gmra.mxu0 %v722
      %v833 = vpop.f32.mrf.mxu0
      %v834 = vadd.f32 %v805, %v833
      %v835 = vpop.f32.mrf.mxu0
      %v836 = vadd.f32 %v807, %v835
      %837 = vmatmul.bf16.gmra.mxu0 %v725
      %v838 = vpop.f32.mrf.mxu0
      %v839 = vadd.f32 %v810, %v838
      %v840 = vpop.f32.mrf.mxu0
      %v841 = vadd.f32 %v812, %v840
      %842 = vdwg.mxu0
      %v843 = vadd.f32 %v766, %v824
      %844 = vadd.xlane.f32.xlu0 %v843
      %v845 = vpop.xlane.xlu0 %844
      %v846 = vadd.f32 %v768, %v826
      %847 = vadd.xlane.f32.xlu0 %v846
      %v848 = vpop.xlane.xlu0 %847
      %v849 = vadd.f32 %v771, %v829
      %850 = vadd.xlane.f32.xlu0 %v849
      %v851 = vpop.xlane.xlu0 %850
      %v852 = vadd.f32 %v773, %v831
      %853 = vadd.xlane.f32.xlu0 %v852
      %v854 = vpop.xlane.xlu0 %853
      %v855 = vadd.f32 %v776, %v834
      %856 = vadd.xlane.f32.xlu0 %v855
      %v857 = vpop.xlane.xlu0 %856
      %v858 = vadd.f32 %v778, %v836
      %859 = vadd.xlane.f32.xlu0 %v858
      %v860 = vpop.xlane.xlu0 %859
      %v861 = vadd.f32 %v781, %v839
      %862 = vadd.xlane.f32.xlu0 %v861
      %v863 = vpop.xlane.xlu0 %862
      %v864 = vadd.f32 %v783, %v841
      %865 = vadd.xlane.f32.xlu0 %v864
      %v866 = vpop.xlane.xlu0 %865
      %v867 = vrcp.pop 256.0
      %v868 = vmul.f32 256.0, %v867
      %v869 = vsub.f32 1.0, %v868
      %v870 = vmul.f32 %v867, %v869
      %v871 = vadd.f32 %v867, %v870
      %vm872 = vweird.f32 %v867
      %v873 = vsel %vm872, %v867, %v871
      %v874 = vmul.f32 %v845, %v873
      %v875 = vmul.f32 %v848, %v873
      %v876 = vmul.f32 %v851, %v873
      %v877 = vmul.f32 %v854, %v873
      %v878 = vmul.f32 %v857, %v873
      %v879 = vmul.f32 %v860, %v873
      %v880 = vmul.f32 %v863, %v873
      %v881 = vmul.f32 %v866, %v873
      %v882 = vmul.f32 %v766, %v766
      %v883 = vmul.f32 %v824, %v824
      %v884 = vmul.f32 %v768, %v768
      %v885 = vmul.f32 %v826, %v826
      %v886 = vmul.f32 %v771, %v771
      %v887 = vmul.f32 %v829, %v829
      %v888 = vmul.f32 %v773, %v773
      %v889 = vmul.f32 %v831, %v831
      %v890 = vmul.f32 %v776, %v776
      %v891 = vmul.f32 %v834, %v834
      %v892 = vmul.f32 %v778, %v778
      %v893 = vmul.f32 %v836, %v836
      %v894 = vmul.f32 %v781, %v781
      %v895 = vmul.f32 %v839, %v839
      %v896 = vmul.f32 %v783, %v783
      %v897 = vmul.f32 %v841, %v841
      %v898 = vadd.f32 %v882, %v883
      %899 = vadd.xlane.f32.xlu0 %v898
      %v900 = vpop.xlane.xlu0 %899
      %v901 = vadd.f32 %v884, %v885
      %902 = vadd.xlane.f32.xlu0 %v901
      %v903 = vpop.xlane.xlu0 %902
      %v904 = vadd.f32 %v886, %v887
      %905 = vadd.xlane.f32.xlu0 %v904
      %v906 = vpop.xlane.xlu0 %905
      %v907 = vadd.f32 %v888, %v889
      %908 = vadd.xlane.f32.xlu0 %v907
      %v909 = vpop.xlane.xlu0 %908
      %v910 = vadd.f32 %v890, %v891
      %911 = vadd.xlane.f32.xlu0 %v910
      %v912 = vpop.xlane.xlu0 %911
      %v913 = vadd.f32 %v892, %v893
      %914 = vadd.xlane.f32.xlu0 %v913
      %v915 = vpop.xlane.xlu0 %914
      %v916 = vadd.f32 %v894, %v895
      %917 = vadd.xlane.f32.xlu0 %v916
      %v918 = vpop.xlane.xlu0 %917
      %v919 = vadd.f32 %v896, %v897
      %920 = vadd.xlane.f32.xlu0 %v919
      %v921 = vpop.xlane.xlu0 %920
      %v922 = vmul.f32 %v900, %v873
      %v923 = vmul.f32 %v903, %v873
      %v924 = vmul.f32 %v906, %v873
      %v925 = vmul.f32 %v909, %v873
      %v926 = vmul.f32 %v912, %v873
      %v927 = vmul.f32 %v915, %v873
      %v928 = vmul.f32 %v918, %v873
      %v929 = vmul.f32 %v921, %v873
      %v930 = vmul.f32 %v874, %v874
      %v931 = vmul.f32 %v875, %v875
      %v932 = vmul.f32 %v876, %v876
      %v933 = vmul.f32 %v877, %v877
      %v934 = vmul.f32 %v878, %v878
      %v935 = vmul.f32 %v879, %v879
      %v936 = vmul.f32 %v880, %v880
      %v937 = vmul.f32 %v881, %v881
      %v938 = vsub.f32 %v922, %v930
      %v939 = vsub.f32 %v923, %v931
      %v940 = vsub.f32 %v924, %v932
      %v941 = vsub.f32 %v925, %v933
      %v942 = vsub.f32 %v926, %v934
      %v943 = vsub.f32 %v927, %v935
      %v944 = vsub.f32 %v928, %v936
      %v945 = vsub.f32 %v929, %v937
      %v946 = vmax.f32 %v938, 0.0
      %v947 = vmax.f32 %v939, 0.0
      %v948 = vmax.f32 %v940, 0.0
      %v949 = vmax.f32 %v941, 0.0
      %v950 = vmax.f32 %v942, 0.0
      %v951 = vmax.f32 %v943, 0.0
      %v952 = vmax.f32 %v944, 0.0
      %v953 = vmax.f32 %v945, 0.0
      %v954 = vsub.f32 %v766, %v874
      %v955 = vsub.f32 %v824, %v874
      %v956 = vsub.f32 %v768, %v875
      %v957 = vsub.f32 %v826, %v875
      %v958 = vsub.f32 %v771, %v876
      %v959 = vsub.f32 %v829, %v876
      %v960 = vsub.f32 %v773, %v877
      %v961 = vsub.f32 %v831, %v877
      %v962 = vsub.f32 %v776, %v878
      %v963 = vsub.f32 %v834, %v878
      %v964 = vsub.f32 %v778, %v879
      %v965 = vsub.f32 %v836, %v879
      %v966 = vsub.f32 %v781, %v880
      %v967 = vsub.f32 %v839, %v880
      %v968 = vsub.f32 %v783, %v881
      %v969 = vsub.f32 %v841, %v881
      %v970 = vadd.f32 %v946, 1e-05
      %v971 = vadd.f32 %v947, 1e-05
      %v972 = vadd.f32 %v948, 1e-05
      %v973 = vadd.f32 %v949, 1e-05
      %v974 = vadd.f32 %v950, 1e-05
      %v975 = vadd.f32 %v951, 1e-05
      %v976 = vadd.f32 %v952, 1e-05
      %v977 = vadd.f32 %v953, 1e-05
      %v978 = vrsqrt.pop %v970
      %v979 = vmul.f32 %v978, %v970
      %v980 = vmul.f32 %v979, %v978
      %v981 = vmul.f32 0.5, %v980
      %v982 = vsub.f32 1.5, %v981
      %v983 = vmul.f32 %v978, %v982
      %vm984 = vweird.f32 %v970
      %vm985 = vweird.f32 %v978
      %vm986 = vmor %vm984, %vm985
      %v987 = vsel %vm986, %v978, %v983
      %v988 = vrsqrt.pop %v971
      %v989 = vmul.f32 %v988, %v971
      %v990 = vmul.f32 %v989, %v988
      %v991 = vmul.f32 0.5, %v990
      %v992 = vsub.f32 1.5, %v991
      %v993 = vmul.f32 %v988, %v992
      %vm994 = vweird.f32 %v971
      %vm995 = vweird.f32 %v988
      %vm996 = vmor %vm994, %vm995
      %v997 = vsel %vm996, %v988, %v993
      %v998 = vrsqrt.pop %v972
      %v999 = vmul.f32 %v998, %v972
      %v1000 = vmul.f32 %v999, %v998
      %v1001 = vmul.f32 0.5, %v1000
      %v1002 = vsub.f32 1.5, %v1001
      %v1003 = vmul.f32 %v998, %v1002
      %vm1004 = vweird.f32 %v972
      %vm1005 = vweird.f32 %v998
      %vm1006 = vmor %vm1004, %vm1005
      %v1007 = vsel %vm1006, %v998, %v1003
      %v1008 = vrsqrt.pop %v973
      %v1009 = vmul.f32 %v1008, %v973
      %v1010 = vmul.f32 %v1009, %v1008
      %v1011 = vmul.f32 0.5, %v1010
      %v1012 = vsub.f32 1.5, %v1011
      %v1013 = vmul.f32 %v1008, %v1012
      %vm1014 = vweird.f32 %v973
      %vm1015 = vweird.f32 %v1008
      %vm1016 = vmor %vm1014, %vm1015
      %v1017 = vsel %vm1016, %v1008, %v1013
      %v1018 = vrsqrt.pop %v974
      %v1019 = vmul.f32 %v1018, %v974
      %v1020 = vmul.f32 %v1019, %v1018
      %v1021 = vmul.f32 0.5, %v1020
      %v1022 = vsub.f32 1.5, %v1021
      %v1023 = vmul.f32 %v1018, %v1022
      %vm1024 = vweird.f32 %v974
      %vm1025 = vweird.f32 %v1018
      %vm1026 = vmor %vm1024, %vm1025
      %v1027 = vsel %vm1026, %v1018, %v1023
      %v1028 = vrsqrt.pop %v975
      %v1029 = vmul.f32 %v1028, %v975
      %v1030 = vmul.f32 %v1029, %v1028
      %v1031 = vmul.f32 0.5, %v1030
      %v1032 = vsub.f32 1.5, %v1031
      %v1033 = vmul.f32 %v1028, %v1032
      %vm1034 = vweird.f32 %v975
      %vm1035 = vweird.f32 %v1028
      %vm1036 = vmor %vm1034, %vm1035
      %v1037 = vsel %vm1036, %v1028, %v1033
      %v1038 = vrsqrt.pop %v976
      %v1039 = vmul.f32 %v1038, %v976
      %v1040 = vmul.f32 %v1039, %v1038
      %v1041 = vmul.f32 0.5, %v1040
      %v1042 = vsub.f32 1.5, %v1041
      %v1043 = vmul.f32 %v1038, %v1042
      %vm1044 = vweird.f32 %v976
      %vm1045 = vweird.f32 %v1038
      %vm1046 = vmor %vm1044, %vm1045
      %v1047 = vsel %vm1046, %v1038, %v1043
      %v1048 = vrsqrt.pop %v977
      %v1049 = vmul.f32 %v1048, %v977
      %v1050 = vmul.f32 %v1049, %v1048
      %v1051 = vmul.f32 0.5, %v1050
      %v1052 = vsub.f32 1.5, %v1051
      %v1053 = vmul.f32 %v1048, %v1052
      %vm1054 = vweird.f32 %v977
      %vm1055 = vweird.f32 %v1048
      %vm1056 = vmor %vm1054, %vm1055
      %v1057 = vsel %vm1056, %v1048, %v1053
      %v1058 = vmul.f32 %v954, %v987
      %v1059 = vmul.f32 %v955, %v987
      %v1060 = vmul.f32 %v956, %v997
      %v1061 = vmul.f32 %v957, %v997
      %v1062 = vmul.f32 %v958, %v1007
      %v1063 = vmul.f32 %v959, %v1007
      %v1064 = vmul.f32 %v960, %v1017
      %v1065 = vmul.f32 %v961, %v1017
      %v1066 = vmul.f32 %v962, %v1027
      %v1067 = vmul.f32 %v963, %v1027
      %v1068 = vmul.f32 %v964, %v1037
      %v1069 = vmul.f32 %v965, %v1037
      %v1070 = vmul.f32 %v966, %v1047
      %v1071 = vmul.f32 %v967, %v1047
      %v1072 = vmul.f32 %v968, %v1057
      %v1073 = vmul.f32 %v969, %v1057
      %v1074 = vmax.f32 %v1058, 0.0
      %v1075 = vmax.f32 %v1059, 0.0
      %v1076 = vmax.f32 %v1060, 0.0
      %v1077 = vmax.f32 %v1061, 0.0
      %v1078 = vmax.f32 %v1062, 0.0
      %v1079 = vmax.f32 %v1063, 0.0
      %v1080 = vmax.f32 %v1064, 0.0
      %v1081 = vmax.f32 %v1065, 0.0
      %v1082 = vmax.f32 %v1066, 0.0
      %v1083 = vmax.f32 %v1067, 0.0
      %v1084 = vmax.f32 %v1068, 0.0
      %v1085 = vmax.f32 %v1069, 0.0
      %v1086 = vmax.f32 %v1070, 0.0
      %v1087 = vmax.f32 %v1071, 0.0
      %v1088 = vmax.f32 %v1072, 0.0
      %v1089 = vmax.f32 %v1073, 0.0
      %v1090 = vpack.c.bf16 %v1075, %v1074
      %v1091 = vpack.c.bf16 %v1077, %v1076
      %v1092 = vpack.c.bf16 %v1079, %v1078
      %v1093 = vpack.c.bf16 %v1081, %v1080
      %v1094 = vpack.c.bf16 %v1083, %v1082
      %v1095 = vpack.c.bf16 %v1085, %v1084
      %v1096 = vpack.c.bf16 %v1087, %v1086
      %v1097 = vpack.c.bf16 %v1089, %v1088
      %v1106 = vunpack.c.l.b16 %v1090
      %v1107 = vunpack.c.h.b16 %v1090
      %v1108 = vunpack.c.l.b16 %v1091
      %v1109 = vunpack.c.h.b16 %v1091
      %v1110 = vunpack.c.l.b16 %v1092
      %v1111 = vunpack.c.h.b16 %v1092
      %v1112 = vunpack.c.l.b16 %v1093
      %v1113 = vunpack.c.h.b16 %v1093
      %v1114 = vunpack.c.l.b16 %v1094
      %v1115 = vunpack.c.h.b16 %v1094
      %v1116 = vunpack.c.l.b16 %v1095
      %v1117 = vunpack.c.h.b16 %v1095
      %v1118 = vunpack.c.l.b16 %v1096
      %v1119 = vunpack.c.h.b16 %v1096
      %v1120 = vunpack.c.l.b16 %v1097
      %v1121 = vunpack.c.h.b16 %v1097
      %v1122 = vpack.c.b16 %v1108, %v1106
      %v1123 = vpack.c.b16 %v1109, %v1107
      %v1124 = vpack.c.b16 %v1112, %v1110
      %v1125 = vpack.c.b16 %v1113, %v1111
      %v1126 = vpack.c.b16 %v1116, %v1114
      %v1127 = vpack.c.b16 %v1117, %v1115
      %v1128 = vpack.c.b16 %v1120, %v1118
      %v1129 = vpack.c.b16 %v1121, %v1119
      %v1138 = vsel %vm372, %v1122, 0
      %v1139 = vsel %vm379, %v1123, 0
      %v1140 = vsel %vm372, %v1124, 0
      %v1141 = vsel %vm379, %v1125, 0
      %v1142 = vsel %vm372, %v1126, 0
      %v1143 = vsel %vm379, %v1127, 0
      %v1144 = vsel %vm372, %v1128, 0
      %v1145 = vsel %vm379, %v1129, 0
      %v1146 = vsel %vm402, %v1122, 0
      %v1147 = vsel %vm409, %v1123, 0
      %v1148 = vsel %vm402, %v1124, 0
      %v1149 = vsel %vm409, %v1125, 0
      %v1150 = vsel %vm402, %v1126, 0
      %v1151 = vsel %vm409, %v1127, 0
      %v1152 = vsel %vm402, %v1128, 0
      %v1153 = vsel %vm409, %v1129, 0
      %v1154 = vsel %vm424, %v1122, 0
      %v1155 = vsel %vm431, %v1123, 0
      %v1156 = vsel %vm424, %v1124, 0
      %v1157 = vsel %vm431, %v1125, 0
      %v1158 = vsel %vm424, %v1126, 0
      %v1159 = vsel %vm431, %v1127, 0
      %v1160 = vsel %vm424, %v1128, 0
      %v1161 = vsel %vm431, %v1129, 0
      %v1162 = vsel %vm446, %v1122, 0
      %v1163 = vsel %vm453, %v1123, 0
      %v1164 = vsel %vm446, %v1124, 0
      %v1165 = vsel %vm453, %v1125, 0
      %v1166 = vsel %vm446, %v1126, 0
      %v1167 = vsel %vm453, %v1127, 0
      %v1168 = vsel %vm446, %v1128, 0
      %v1169 = vsel %vm453, %v1129, 0
      %v1170 = vsel %vm468, %v1122, 0
      %v1171 = vsel %vm475, %v1123, 0
      %v1172 = vsel %vm468, %v1124, 0
      %v1173 = vsel %vm475, %v1125, 0
      %v1174 = vsel %vm468, %v1126, 0
      %v1175 = vsel %vm475, %v1127, 0
      %v1176 = vsel %vm468, %v1128, 0
      %v1177 = vsel %vm475, %v1129, 0
      %v1178 = vsel %vm490, %v1122, 0
      %v1179 = vsel %vm497, %v1123, 0
      %v1180 = vsel %vm490, %v1124, 0
      %v1181 = vsel %vm497, %v1125, 0
      %v1182 = vsel %vm490, %v1126, 0
      %v1183 = vsel %vm497, %v1127, 0
      %v1184 = vsel %vm490, %v1128, 0
      %v1185 = vsel %vm497, %v1129, 0
      %1186 = vrot.lane.b32.xlu0 %v1122, 127
      %v1187 = vpop.permute.xlu0 %1186
      %1188 = vrot.lane.b32.xlu0 %v1123, 127
      %v1189 = vpop.permute.xlu0 %1188
      %1190 = vrot.lane.b32.xlu0 %v1124, 127
      %v1191 = vpop.permute.xlu0 %1190
      %1192 = vrot.lane.b32.xlu0 %v1125, 127
      %v1193 = vpop.permute.xlu0 %1192
      %1194 = vrot.lane.b32.xlu0 %v1126, 127
      %v1195 = vpop.permute.xlu0 %1194
      %1196 = vrot.lane.b32.xlu0 %v1127, 127
      %v1197 = vpop.permute.xlu0 %1196
      %1198 = vrot.lane.b32.xlu0 %v1128, 127
      %v1199 = vpop.permute.xlu0 %1198
      %1200 = vrot.lane.b32.xlu0 %v1129, 127
      %v1201 = vpop.permute.xlu0 %1200
      %v1202 = vsel %vm416, %v502, %v1187
      %v1203 = vsel %vm416, %v1187, %v1189
      %v1204 = vsel %vm416, %v502, %v1191
      %v1205 = vsel %vm416, %v1191, %v1193
      %v1206 = vsel %vm416, %v502, %v1195
      %v1207 = vsel %vm416, %v1195, %v1197
      %v1208 = vsel %vm416, %v502, %v1199
      %v1209 = vsel %vm416, %v1199, %v1201
      %1218 = vrot.lane.b32.xlu0 %v1146, 126
      %v1219 = vpop.permute.xlu0 %1218
      %1220 = vrot.lane.b32.xlu0 %v1147, 126
      %v1221 = vpop.permute.xlu0 %1220
      %1222 = vrot.lane.b32.xlu0 %v1148, 126
      %v1223 = vpop.permute.xlu0 %1222
      %1224 = vrot.lane.b32.xlu0 %v1149, 126
      %v1225 = vpop.permute.xlu0 %1224
      %1226 = vrot.lane.b32.xlu0 %v1150, 126
      %v1227 = vpop.permute.xlu0 %1226
      %1228 = vrot.lane.b32.xlu0 %v1151, 126
      %v1229 = vpop.permute.xlu0 %1228
      %1230 = vrot.lane.b32.xlu0 %v1152, 126
      %v1231 = vpop.permute.xlu0 %1230
      %1232 = vrot.lane.b32.xlu0 %v1153, 126
      %v1233 = vpop.permute.xlu0 %1232
      %v1234 = vsel %vm517, %v512, %v1219
      %v1235 = vsel %vm517, %v1219, %v1221
      %v1236 = vsel %vm517, %v512, %v1223
      %v1237 = vsel %vm517, %v1223, %v1225
      %v1238 = vsel %vm517, %v512, %v1227
      %v1239 = vsel %vm517, %v1227, %v1229
      %v1240 = vsel %vm517, %v512, %v1231
      %v1241 = vsel %vm517, %v1231, %v1233
      %1250 = vrot.lane.b32.xlu0 %v1154, 112
      %v1251 = vpop.permute.xlu0 %1250
      %1252 = vrot.lane.b32.xlu0 %v1155, 112
      %v1253 = vpop.permute.xlu0 %1252
      %1254 = vrot.lane.b32.xlu0 %v1156, 112
      %v1255 = vpop.permute.xlu0 %1254
      %1256 = vrot.lane.b32.xlu0 %v1157, 112
      %v1257 = vpop.permute.xlu0 %1256
      %1258 = vrot.lane.b32.xlu0 %v1158, 112
      %v1259 = vpop.permute.xlu0 %1258
      %1260 = vrot.lane.b32.xlu0 %v1159, 112
      %v1261 = vpop.permute.xlu0 %1260
      %1262 = vrot.lane.b32.xlu0 %v1160, 112
      %v1263 = vpop.permute.xlu0 %1262
      %1264 = vrot.lane.b32.xlu0 %v1161, 112
      %v1265 = vpop.permute.xlu0 %1264
      %v1266 = vsel %vm528, %v523, %v1251
      %v1267 = vsel %vm528, %v1251, %v1253
      %v1268 = vsel %vm528, %v523, %v1255
      %v1269 = vsel %vm528, %v1255, %v1257
      %v1270 = vsel %vm528, %v523, %v1259
      %v1271 = vsel %vm528, %v1259, %v1261
      %v1272 = vsel %vm528, %v523, %v1263
      %v1273 = vsel %vm528, %v1263, %v1265
      %1274 = vrot.lane.b32.xlu0 %v1122, 111
      %v1275 = vpop.permute.xlu0 %1274
      %1276 = vrot.lane.b32.xlu0 %v1123, 111
      %v1277 = vpop.permute.xlu0 %1276
      %1278 = vrot.lane.b32.xlu0 %v1124, 111
      %v1279 = vpop.permute.xlu0 %1278
      %1280 = vrot.lane.b32.xlu0 %v1125, 111
      %v1281 = vpop.permute.xlu0 %1280
      %1282 = vrot.lane.b32.xlu0 %v1126, 111
      %v1283 = vpop.permute.xlu0 %1282
      %1284 = vrot.lane.b32.xlu0 %v1127, 111
      %v1285 = vpop.permute.xlu0 %1284
      %1286 = vrot.lane.b32.xlu0 %v1128, 111
      %v1287 = vpop.permute.xlu0 %1286
      %1288 = vrot.lane.b32.xlu0 %v1129, 111
      %v1289 = vpop.permute.xlu0 %1288
      %v1290 = vsel %vm364, %v1275, %v1277
      %v1291 = vsel %vm364, %v1279, %v1281
      %v1292 = vsel %vm364, %v1283, %v1285
      %v1293 = vsel %vm364, %v1287, %v1289
      %1302 = vrot.lane.b32.xlu0 %v1162, 110
      %v1303 = vpop.permute.xlu0 %1302
      %1304 = vrot.lane.b32.xlu0 %v1163, 110
      %v1305 = vpop.permute.xlu0 %1304
      %1306 = vrot.lane.b32.xlu0 %v1164, 110
      %v1307 = vpop.permute.xlu0 %1306
      %1308 = vrot.lane.b32.xlu0 %v1165, 110
      %v1309 = vpop.permute.xlu0 %1308
      %1310 = vrot.lane.b32.xlu0 %v1166, 110
      %v1311 = vpop.permute.xlu0 %1310
      %1312 = vrot.lane.b32.xlu0 %v1167, 110
      %v1313 = vpop.permute.xlu0 %1312
      %1314 = vrot.lane.b32.xlu0 %v1168, 110
      %v1315 = vpop.permute.xlu0 %1314
      %1316 = vrot.lane.b32.xlu0 %v1169, 110
      %v1317 = vpop.permute.xlu0 %1316
      %v1318 = vsel %vm544, %v1303, %v1305
      %v1319 = vsel %vm544, %v1305, %v543
      %v1320 = vsel %vm544, %v1307, %v1309
      %v1321 = vsel %vm544, %v1309, %v543
      %v1322 = vsel %vm544, %v1311, %v1313
      %v1323 = vsel %vm544, %v1313, %v543
      %v1324 = vsel %vm544, %v1315, %v1317
      %v1325 = vsel %vm544, %v1317, %v543
      %1334 = vrot.lane.b32.xlu0 %v1170, 96
      %v1335 = vpop.permute.xlu0 %1334
      %1336 = vrot.lane.b32.xlu0 %v1171, 96
      %v1337 = vpop.permute.xlu0 %1336
      %1338 = vrot.lane.b32.xlu0 %v1172, 96
      %v1339 = vpop.permute.xlu0 %1338
      %1340 = vrot.lane.b32.xlu0 %v1173, 96
      %v1341 = vpop.permute.xlu0 %1340
      %1342 = vrot.lane.b32.xlu0 %v1174, 96
      %v1343 = vpop.permute.xlu0 %1342
      %1344 = vrot.lane.b32.xlu0 %v1175, 96
      %v1345 = vpop.permute.xlu0 %1344
      %1346 = vrot.lane.b32.xlu0 %v1176, 96
      %v1347 = vpop.permute.xlu0 %1346
      %1348 = vrot.lane.b32.xlu0 %v1177, 96
      %v1349 = vpop.permute.xlu0 %1348
      %v1350 = vsel %vm555, %v1335, %v1337
      %v1351 = vsel %vm555, %v1337, %v554
      %v1352 = vsel %vm555, %v1339, %v1341
      %v1353 = vsel %vm555, %v1341, %v554
      %v1354 = vsel %vm555, %v1343, %v1345
      %v1355 = vsel %vm555, %v1345, %v554
      %v1356 = vsel %vm555, %v1347, %v1349
      %v1357 = vsel %vm555, %v1349, %v554
      %1358 = vrot.lane.b32.xlu0 %v1122, 95
      %v1359 = vpop.permute.xlu0 %1358
      %1360 = vrot.lane.b32.xlu0 %v1123, 95
      %v1361 = vpop.permute.xlu0 %1360
      %1362 = vrot.lane.b32.xlu0 %v1124, 95
      %v1363 = vpop.permute.xlu0 %1362
      %1364 = vrot.lane.b32.xlu0 %v1125, 95
      %v1365 = vpop.permute.xlu0 %1364
      %1366 = vrot.lane.b32.xlu0 %v1126, 95
      %v1367 = vpop.permute.xlu0 %1366
      %1368 = vrot.lane.b32.xlu0 %v1127, 95
      %v1369 = vpop.permute.xlu0 %1368
      %1370 = vrot.lane.b32.xlu0 %v1128, 95
      %v1371 = vpop.permute.xlu0 %1370
      %1372 = vrot.lane.b32.xlu0 %v1129, 95
      %v1373 = vpop.permute.xlu0 %1372
      %v1374 = vsel %vm564, %v1359, %v1361
      %v1375 = vsel %vm564, %v1361, %v563
      %v1376 = vsel %vm564, %v1363, %v1365
      %v1377 = vsel %vm564, %v1365, %v563
      %v1378 = vsel %vm564, %v1367, %v1369
      %v1379 = vsel %vm564, %v1369, %v563
      %v1380 = vsel %vm564, %v1371, %v1373
      %v1381 = vsel %vm564, %v1373, %v563
      %1390 = vrot.lane.b32.xlu0 %v1178, 94
      %v1391 = vpop.permute.xlu0 %1390
      %1392 = vrot.lane.b32.xlu0 %v1179, 94
      %v1393 = vpop.permute.xlu0 %1392
      %1394 = vrot.lane.b32.xlu0 %v1180, 94
      %v1395 = vpop.permute.xlu0 %1394
      %1396 = vrot.lane.b32.xlu0 %v1181, 94
      %v1397 = vpop.permute.xlu0 %1396
      %1398 = vrot.lane.b32.xlu0 %v1182, 94
      %v1399 = vpop.permute.xlu0 %1398
      %1400 = vrot.lane.b32.xlu0 %v1183, 94
      %v1401 = vpop.permute.xlu0 %1400
      %1402 = vrot.lane.b32.xlu0 %v1184, 94
      %v1403 = vpop.permute.xlu0 %1402
      %1404 = vrot.lane.b32.xlu0 %v1185, 94
      %v1405 = vpop.permute.xlu0 %1404
      %v1406 = vsel %vm575, %v1391, %v1393
      %v1407 = vsel %vm575, %v1393, %v574
      %v1408 = vsel %vm575, %v1395, %v1397
      %v1409 = vsel %vm575, %v1397, %v574
      %v1410 = vsel %vm575, %v1399, %v1401
      %v1411 = vsel %vm575, %v1401, %v574
      %v1412 = vsel %vm575, %v1403, %v1405
      %v1413 = vsel %vm575, %v1405, %v574
      %v1414 = vld [vmem:[%s2] sm:$0xff]
      %v1415 = vld [vmem:[%s2 + $0x8] sm:$0xff]
      %v1416 = vld [vmem:[%s2 + $0x10] sm:$0xf]
      %v1417 = vld [vmem:[%s2 + $0x14] sm:$0xff]
      %v1418 = vld [vmem:[%s2 + $0x1c] sm:$0xff]
      %v1419 = vld [vmem:[%s2 + $0x24] sm:$0xf]
      %v1420 = vld [vmem:[%s2 + $0x28] sm:$0xff]
      %v1421 = vld [vmem:[%s2 + $0x30] sm:$0xff]
      %v1422 = vld [vmem:[%s2 + $0x38] sm:$0xf]
      %v1423 = vld [vmem:[%s2 + $0x3c] sm:$0xff]
      %v1424 = vld [vmem:[%s2 + $0x44] sm:$0xff]
      %v1425 = vld [vmem:[%s2 + $0x4c] sm:$0xf]
      %v1426 = vld [vmem:[%s2 + $0x50] sm:$0xff]
      %v1427 = vld [vmem:[%s2 + $0x58] sm:$0xff]
      %v1428 = vld [vmem:[%s2 + $0x60] sm:$0xf]
      %v1429 = vld [vmem:[%s2 + $0x64] sm:$0xff]
      %v1430 = vld [vmem:[%s2 + $0x6c] sm:$0xff]
      %v1431 = vld [vmem:[%s2 + $0x74] sm:$0xf]
      %v1432 = vld [vmem:[%s2 + $0x78] sm:$0xff]
      %v1433 = vld [vmem:[%s2 + $0x80] sm:$0xff]
      %v1434 = vld [vmem:[%s2 + $0x88] sm:$0xf]
      %v1435 = vld [vmem:[%s2 + $0x8c] sm:$0xff]
      %v1436 = vld [vmem:[%s2 + $0x94] sm:$0xff]
      %v1437 = vld [vmem:[%s2 + $0x9c] sm:$0xf]
      %v1462 = vunpack.c.l.b16 %v1414
      %v1463 = vunpack.c.h.b16 %v1414
      %v1464 = vunpack.c.l.b16 %v1415
      %v1465 = vunpack.c.h.b16 %v1415
      %v1466 = vunpack.c.l.b16 %v1416
      %v1467 = vunpack.c.l.b16 %v1417
      %v1468 = vunpack.c.h.b16 %v1417
      %v1469 = vunpack.c.l.b16 %v1418
      %v1470 = vunpack.c.h.b16 %v1418
      %v1471 = vunpack.c.l.b16 %v1419
      %v1472 = vunpack.c.l.b16 %v1420
      %v1473 = vunpack.c.h.b16 %v1420
      %v1474 = vunpack.c.l.b16 %v1421
      %v1475 = vunpack.c.h.b16 %v1421
      %v1476 = vunpack.c.l.b16 %v1422
      %v1477 = vunpack.c.l.b16 %v1423
      %v1478 = vunpack.c.h.b16 %v1423
      %v1479 = vunpack.c.l.b16 %v1424
      %v1480 = vunpack.c.h.b16 %v1424
      %v1481 = vunpack.c.l.b16 %v1425
      %v1482 = vunpack.c.l.b16 %v1426
      %v1483 = vunpack.c.h.b16 %v1426
      %v1484 = vunpack.c.l.b16 %v1427
      %v1485 = vunpack.c.h.b16 %v1427
      %v1486 = vunpack.c.l.b16 %v1428
      %v1487 = vunpack.c.l.b16 %v1429
      %v1488 = vunpack.c.h.b16 %v1429
      %v1489 = vunpack.c.l.b16 %v1430
      %v1490 = vunpack.c.h.b16 %v1430
      %v1491 = vunpack.c.l.b16 %v1431
      %v1492 = vunpack.c.l.b16 %v1432
      %v1493 = vunpack.c.h.b16 %v1432
      %v1494 = vunpack.c.l.b16 %v1433
      %v1495 = vunpack.c.h.b16 %v1433
      %v1496 = vunpack.c.l.b16 %v1434
      %v1497 = vunpack.c.l.b16 %v1435
      %v1498 = vunpack.c.h.b16 %v1435
      %v1499 = vunpack.c.l.b16 %v1436
      %v1500 = vunpack.c.h.b16 %v1436
      %v1501 = vunpack.c.l.b16 %v1437
      %v1502 = vpack.c.b16 %v1467, %v1462
      %v1503 = vpack.c.b16 %v1468, %v1463
      %v1504 = vpack.c.b16 %v1469, %v1464
      %v1505 = vpack.c.b16 %v1470, %v1465
      %v1506 = vpack.c.b16 %v1471, %v1466
      %v1507 = vpack.c.b16 %v1477, %v1472
      %v1508 = vpack.c.b16 %v1478, %v1473
      %v1509 = vpack.c.b16 %v1479, %v1474
      %v1510 = vpack.c.b16 %v1480, %v1475
      %v1511 = vpack.c.b16 %v1481, %v1476
      %v1512 = vpack.c.b16 %v1487, %v1482
      %v1513 = vpack.c.b16 %v1488, %v1483
      %v1514 = vpack.c.b16 %v1489, %v1484
      %v1515 = vpack.c.b16 %v1490, %v1485
      %v1516 = vpack.c.b16 %v1491, %v1486
      %v1517 = vpack.c.b16 %v1497, %v1492
      %v1518 = vpack.c.b16 %v1498, %v1493
      %v1519 = vpack.c.b16 %v1499, %v1494
      %v1520 = vpack.c.b16 %v1500, %v1495
      %v1521 = vpack.c.b16 %v1501, %v1496
      %1546 = vrot.lane.b32.xlu0 %v1138, 17
      %v1547 = vpop.permute.xlu0 %1546
      %1548 = vrot.lane.b32.xlu0 %v1139, 17
      %v1549 = vpop.permute.xlu0 %1548
      %1550 = vrot.lane.b32.xlu0 %v1140, 17
      %v1551 = vpop.permute.xlu0 %1550
      %1552 = vrot.lane.b32.xlu0 %v1141, 17
      %v1553 = vpop.permute.xlu0 %1552
      %1554 = vrot.lane.b32.xlu0 %v1142, 17
      %v1555 = vpop.permute.xlu0 %1554
      %1556 = vrot.lane.b32.xlu0 %v1143, 17
      %v1557 = vpop.permute.xlu0 %1556
      %1558 = vrot.lane.b32.xlu0 %v1144, 17
      %v1559 = vpop.permute.xlu0 %1558
      %1560 = vrot.lane.b32.xlu0 %v1145, 17
      %v1561 = vpop.permute.xlu0 %1560
      %1562 = vrot.lane.b32.xlu0 %v1202, 17
      %v1563 = vpop.permute.xlu0 %1562
      %1564 = vrot.lane.b32.xlu0 %v1203, 17
      %v1565 = vpop.permute.xlu0 %1564
      %1566 = vrot.lane.b32.xlu0 %v1189, 17
      %v1567 = vpop.permute.xlu0 %1566
      %1568 = vrot.lane.b32.xlu0 %v1204, 17
      %v1569 = vpop.permute.xlu0 %1568
      %1570 = vrot.lane.b32.xlu0 %v1205, 17
      %v1571 = vpop.permute.xlu0 %1570
      %1572 = vrot.lane.b32.xlu0 %v1193, 17
      %v1573 = vpop.permute.xlu0 %1572
      %1574 = vrot.lane.b32.xlu0 %v1206, 17
      %v1575 = vpop.permute.xlu0 %1574
      %1576 = vrot.lane.b32.xlu0 %v1207, 17
      %v1577 = vpop.permute.xlu0 %1576
      %1578 = vrot.lane.b32.xlu0 %v1197, 17
      %v1579 = vpop.permute.xlu0 %1578
      %1580 = vrot.lane.b32.xlu0 %v1208, 17
      %v1581 = vpop.permute.xlu0 %1580
      %1582 = vrot.lane.b32.xlu0 %v1209, 17
      %v1583 = vpop.permute.xlu0 %1582
      %1584 = vrot.lane.b32.xlu0 %v1201, 17
      %v1585 = vpop.permute.xlu0 %1584
      %1586 = vrot.lane.b32.xlu0 %v1234, 17
      %v1587 = vpop.permute.xlu0 %1586
      %1588 = vrot.lane.b32.xlu0 %v1235, 17
      %v1589 = vpop.permute.xlu0 %1588
      %1590 = vrot.lane.b32.xlu0 %v1221, 17
      %v1591 = vpop.permute.xlu0 %1590
      %1592 = vrot.lane.b32.xlu0 %v1236, 17
      %v1593 = vpop.permute.xlu0 %1592
      %1594 = vrot.lane.b32.xlu0 %v1237, 17
      %v1595 = vpop.permute.xlu0 %1594
      %1596 = vrot.lane.b32.xlu0 %v1225, 17
      %v1597 = vpop.permute.xlu0 %1596
      %1598 = vrot.lane.b32.xlu0 %v1238, 17
      %v1599 = vpop.permute.xlu0 %1598
      %1600 = vrot.lane.b32.xlu0 %v1239, 17
      %v1601 = vpop.permute.xlu0 %1600
      %1602 = vrot.lane.b32.xlu0 %v1229, 17
      %v1603 = vpop.permute.xlu0 %1602
      %1604 = vrot.lane.b32.xlu0 %v1240, 17
      %v1605 = vpop.permute.xlu0 %1604
      %1606 = vrot.lane.b32.xlu0 %v1241, 17
      %v1607 = vpop.permute.xlu0 %1606
      %1608 = vrot.lane.b32.xlu0 %v1233, 17
      %v1609 = vpop.permute.xlu0 %1608
      %1610 = vrot.lane.b32.xlu0 %v1266, 17
      %v1611 = vpop.permute.xlu0 %1610
      %1612 = vrot.lane.b32.xlu0 %v1267, 17
      %v1613 = vpop.permute.xlu0 %1612
      %1614 = vrot.lane.b32.xlu0 %v1253, 17
      %v1615 = vpop.permute.xlu0 %1614
      %1616 = vrot.lane.b32.xlu0 %v1268, 17
      %v1617 = vpop.permute.xlu0 %1616
      %1618 = vrot.lane.b32.xlu0 %v1269, 17
      %v1619 = vpop.permute.xlu0 %1618
      %1620 = vrot.lane.b32.xlu0 %v1257, 17
      %v1621 = vpop.permute.xlu0 %1620
      %1622 = vrot.lane.b32.xlu0 %v1270, 17
      %v1623 = vpop.permute.xlu0 %1622
      %1624 = vrot.lane.b32.xlu0 %v1271, 17
      %v1625 = vpop.permute.xlu0 %1624
      %1626 = vrot.lane.b32.xlu0 %v1261, 17
      %v1627 = vpop.permute.xlu0 %1626
      %1628 = vrot.lane.b32.xlu0 %v1272, 17
      %v1629 = vpop.permute.xlu0 %1628
      %1630 = vrot.lane.b32.xlu0 %v1273, 17
      %v1631 = vpop.permute.xlu0 %1630
      %1632 = vrot.lane.b32.xlu0 %v1265, 17
      %v1633 = vpop.permute.xlu0 %1632
      %1634 = vrot.lane.b32.xlu0 %v1275, 17
      %v1635 = vpop.permute.xlu0 %1634
      %1636 = vrot.lane.b32.xlu0 %v1290, 17
      %v1637 = vpop.permute.xlu0 %1636
      %1638 = vrot.lane.b32.xlu0 %v1277, 17
      %v1639 = vpop.permute.xlu0 %1638
      %1640 = vrot.lane.b32.xlu0 %v1279, 17
      %v1641 = vpop.permute.xlu0 %1640
      %1642 = vrot.lane.b32.xlu0 %v1291, 17
      %v1643 = vpop.permute.xlu0 %1642
      %1644 = vrot.lane.b32.xlu0 %v1281, 17
      %v1645 = vpop.permute.xlu0 %1644
      %1646 = vrot.lane.b32.xlu0 %v1283, 17
      %v1647 = vpop.permute.xlu0 %1646
      %1648 = vrot.lane.b32.xlu0 %v1292, 17
      %v1649 = vpop.permute.xlu0 %1648
      %1650 = vrot.lane.b32.xlu0 %v1285, 17
      %v1651 = vpop.permute.xlu0 %1650
      %1652 = vrot.lane.b32.xlu0 %v1287, 17
      %v1653 = vpop.permute.xlu0 %1652
      %1654 = vrot.lane.b32.xlu0 %v1293, 17
      %v1655 = vpop.permute.xlu0 %1654
      %1656 = vrot.lane.b32.xlu0 %v1289, 17
      %v1657 = vpop.permute.xlu0 %1656
      %1658 = vrot.lane.b32.xlu0 %v1303, 17
      %v1659 = vpop.permute.xlu0 %1658
      %1660 = vrot.lane.b32.xlu0 %v1318, 17
      %v1661 = vpop.permute.xlu0 %1660
      %1662 = vrot.lane.b32.xlu0 %v1319, 17
      %v1663 = vpop.permute.xlu0 %1662
      %1664 = vrot.lane.b32.xlu0 %v1307, 17
      %v1665 = vpop.permute.xlu0 %1664
      %1666 = vrot.lane.b32.xlu0 %v1320, 17
      %v1667 = vpop.permute.xlu0 %1666
      %1668 = vrot.lane.b32.xlu0 %v1321, 17
      %v1669 = vpop.permute.xlu0 %1668
      %1670 = vrot.lane.b32.xlu0 %v1311, 17
      %v1671 = vpop.permute.xlu0 %1670
      %1672 = vrot.lane.b32.xlu0 %v1322, 17
      %v1673 = vpop.permute.xlu0 %1672
      %1674 = vrot.lane.b32.xlu0 %v1323, 17
      %v1675 = vpop.permute.xlu0 %1674
      %1676 = vrot.lane.b32.xlu0 %v1315, 17
      %v1677 = vpop.permute.xlu0 %1676
      %1678 = vrot.lane.b32.xlu0 %v1324, 17
      %v1679 = vpop.permute.xlu0 %1678
      %1680 = vrot.lane.b32.xlu0 %v1325, 17
      %v1681 = vpop.permute.xlu0 %1680
      %1682 = vrot.lane.b32.xlu0 %v1335, 17
      %v1683 = vpop.permute.xlu0 %1682
      %1684 = vrot.lane.b32.xlu0 %v1350, 17
      %v1685 = vpop.permute.xlu0 %1684
      %1686 = vrot.lane.b32.xlu0 %v1351, 17
      %v1687 = vpop.permute.xlu0 %1686
      %1688 = vrot.lane.b32.xlu0 %v1339, 17
      %v1689 = vpop.permute.xlu0 %1688
      %1690 = vrot.lane.b32.xlu0 %v1352, 17
      %v1691 = vpop.permute.xlu0 %1690
      %1692 = vrot.lane.b32.xlu0 %v1353, 17
      %v1693 = vpop.permute.xlu0 %1692
      %1694 = vrot.lane.b32.xlu0 %v1343, 17
      %v1695 = vpop.permute.xlu0 %1694
      %1696 = vrot.lane.b32.xlu0 %v1354, 17
      %v1697 = vpop.permute.xlu0 %1696
      %1698 = vrot.lane.b32.xlu0 %v1355, 17
      %v1699 = vpop.permute.xlu0 %1698
      %1700 = vrot.lane.b32.xlu0 %v1347, 17
      %v1701 = vpop.permute.xlu0 %1700
      %1702 = vrot.lane.b32.xlu0 %v1356, 17
      %v1703 = vpop.permute.xlu0 %1702
      %1704 = vrot.lane.b32.xlu0 %v1357, 17
      %v1705 = vpop.permute.xlu0 %1704
      %1706 = vrot.lane.b32.xlu0 %v1359, 17
      %v1707 = vpop.permute.xlu0 %1706
      %1708 = vrot.lane.b32.xlu0 %v1374, 17
      %v1709 = vpop.permute.xlu0 %1708
      %1710 = vrot.lane.b32.xlu0 %v1375, 17
      %v1711 = vpop.permute.xlu0 %1710
      %1712 = vrot.lane.b32.xlu0 %v1363, 17
      %v1713 = vpop.permute.xlu0 %1712
      %1714 = vrot.lane.b32.xlu0 %v1376, 17
      %v1715 = vpop.permute.xlu0 %1714
      %1716 = vrot.lane.b32.xlu0 %v1377, 17
      %v1717 = vpop.permute.xlu0 %1716
      %1718 = vrot.lane.b32.xlu0 %v1367, 17
      %v1719 = vpop.permute.xlu0 %1718
      %1720 = vrot.lane.b32.xlu0 %v1378, 17
      %v1721 = vpop.permute.xlu0 %1720
      %1722 = vrot.lane.b32.xlu0 %v1379, 17
      %v1723 = vpop.permute.xlu0 %1722
      %1724 = vrot.lane.b32.xlu0 %v1371, 17
      %v1725 = vpop.permute.xlu0 %1724
      %1726 = vrot.lane.b32.xlu0 %v1380, 17
      %v1727 = vpop.permute.xlu0 %1726
      %1728 = vrot.lane.b32.xlu0 %v1381, 17
      %v1729 = vpop.permute.xlu0 %1728
      %1730 = vrot.lane.b32.xlu0 %v1391, 17
      %v1731 = vpop.permute.xlu0 %1730
      %1732 = vrot.lane.b32.xlu0 %v1406, 17
      %v1733 = vpop.permute.xlu0 %1732
      %1734 = vrot.lane.b32.xlu0 %v1407, 17
      %v1735 = vpop.permute.xlu0 %1734
      %1736 = vrot.lane.b32.xlu0 %v1395, 17
      %v1737 = vpop.permute.xlu0 %1736
      %1738 = vrot.lane.b32.xlu0 %v1408, 17
      %v1739 = vpop.permute.xlu0 %1738
      %1740 = vrot.lane.b32.xlu0 %v1409, 17
      %v1741 = vpop.permute.xlu0 %1740
      %1742 = vrot.lane.b32.xlu0 %v1399, 17
      %v1743 = vpop.permute.xlu0 %1742
      %1744 = vrot.lane.b32.xlu0 %v1410, 17
      %v1745 = vpop.permute.xlu0 %1744
      %1746 = vrot.lane.b32.xlu0 %v1411, 17
      %v1747 = vpop.permute.xlu0 %1746
      %1748 = vrot.lane.b32.xlu0 %v1403, 17
      %v1749 = vpop.permute.xlu0 %1748
      %1750 = vrot.lane.b32.xlu0 %v1412, 17
      %v1751 = vpop.permute.xlu0 %1750
      %1752 = vrot.lane.b32.xlu0 %v1413, 17
      %v1753 = vpop.permute.xlu0 %1752
      %v1754 = vsel %vm482, %v625, %v1547
      %v1755 = vsel %vm482, %v1547, %v1549
      %v1756 = vsel %vm482, %v625, %v1551
      %v1757 = vsel %vm482, %v1551, %v1553
      %v1758 = vsel %vm482, %v625, %v1555
      %v1759 = vsel %vm482, %v1555, %v1557
      %v1760 = vsel %vm482, %v625, %v1559
      %v1761 = vsel %vm482, %v1559, %v1561
      %v1762 = vsel %vm482, %v1563, %v1565
      %v1763 = vsel %vm482, %v1565, %v1567
      %v1764 = vsel %vm482, %v1569, %v1571
      %v1765 = vsel %vm482, %v1571, %v1573
      %v1766 = vsel %vm482, %v1575, %v1577
      %v1767 = vsel %vm482, %v1577, %v1579
      %v1768 = vsel %vm482, %v1581, %v1583
      %v1769 = vsel %vm482, %v1583, %v1585
      %v1770 = vsel %vm482, %v1587, %v1589
      %v1771 = vsel %vm482, %v1589, %v1591
      %v1772 = vsel %vm482, %v1593, %v1595
      %v1773 = vsel %vm482, %v1595, %v1597
      %v1774 = vsel %vm482, %v1599, %v1601
      %v1775 = vsel %vm482, %v1601, %v1603
      %v1776 = vsel %vm482, %v1605, %v1607
      %v1777 = vsel %vm482, %v1607, %v1609
      %v1778 = vsel %vm482, %v1611, %v1613
      %v1779 = vsel %vm482, %v1613, %v1615
      %v1780 = vsel %vm482, %v1617, %v1619
      %v1781 = vsel %vm482, %v1619, %v1621
      %v1782 = vsel %vm482, %v1623, %v1625
      %v1783 = vsel %vm482, %v1625, %v1627
      %v1784 = vsel %vm482, %v1629, %v1631
      %v1785 = vsel %vm482, %v1631, %v1633
      %v1786 = vsel %vm482, %v1635, %v1637
      %v1787 = vsel %vm482, %v1637, %v1639
      %v1788 = vsel %vm482, %v1641, %v1643
      %v1789 = vsel %vm482, %v1643, %v1645
      %v1790 = vsel %vm482, %v1647, %v1649
      %v1791 = vsel %vm482, %v1649, %v1651
      %v1792 = vsel %vm482, %v1653, %v1655
      %v1793 = vsel %vm482, %v1655, %v1657
      %v1794 = vsel %vm482, %v1659, %v1661
      %v1795 = vsel %vm482, %v1661, %v1663
      %v1796 = vsel %vm482, %v1665, %v1667
      %v1797 = vsel %vm482, %v1667, %v1669
      %v1798 = vsel %vm482, %v1671, %v1673
      %v1799 = vsel %vm482, %v1673, %v1675
      %v1800 = vsel %vm482, %v1677, %v1679
      %v1801 = vsel %vm482, %v1679, %v1681
      %v1802 = vsel %vm482, %v1683, %v1685
      %v1803 = vsel %vm482, %v1685, %v1687
      %v1804 = vsel %vm482, %v1689, %v1691
      %v1805 = vsel %vm482, %v1691, %v1693
      %v1806 = vsel %vm482, %v1695, %v1697
      %v1807 = vsel %vm482, %v1697, %v1699
      %v1808 = vsel %vm482, %v1701, %v1703
      %v1809 = vsel %vm482, %v1703, %v1705
      %v1810 = vsel %vm482, %v1707, %v1709
      %v1811 = vsel %vm482, %v1709, %v1711
      %v1812 = vsel %vm482, %v1713, %v1715
      %v1813 = vsel %vm482, %v1715, %v1717
      %v1814 = vsel %vm482, %v1719, %v1721
      %v1815 = vsel %vm482, %v1721, %v1723
      %v1816 = vsel %vm482, %v1725, %v1727
      %v1817 = vsel %vm482, %v1727, %v1729
      %v1818 = vsel %vm482, %v1731, %v1733
      %v1819 = vsel %vm482, %v1733, %v1735
      %v1820 = vsel %vm482, %v1737, %v1739
      %v1821 = vsel %vm482, %v1739, %v1741
      %v1822 = vsel %vm482, %v1743, %v1745
      %v1823 = vsel %vm482, %v1745, %v1747
      %v1824 = vsel %vm482, %v1749, %v1751
      %v1825 = vsel %vm482, %v1751, %v1753
      %vm1898 = vcmask 523264
      %v1900 = vsel %vm1898, %v1506, 0
      %v1903 = vsel %vm1898, %v1511, 0
      %v1906 = vsel %vm1898, %v1516, 0
      %v1909 = vsel %vm1898, %v1521, 0
      %1911 = vmatpush.bf16.msra.mxu0 %v1768
      %1912 = vmatpush.bf16.msra.mxu0 %v1766
      %1913 = vmatpush.bf16.msra.mxu0 %v1764
      %1914 = vmatpush.bf16.msra.mxu0 %v1762
      %1915 = vmatpush.bf16.msra.mxu0 %v1760
      %1916 = vmatpush.bf16.msra.mxu0 %v1758
      %1917 = vmatpush.bf16.msra.mxu0 %v1756
      %1918 = vmatpush.bf16.msra.mxu0 %v1754
      %1919 = vmatmul.bf16.gmra.mxu0 %v1502
      %v1920 = vpop.f32.mrf.mxu0
      %v1921 = vadd.f32 0.0, %v1920
      %v1922 = vpop.f32.mrf.mxu0
      %v1923 = vadd.f32 0.0, %v1922
      %1924 = vmatmul.bf16.gmra.mxu0 %v1507
      %v1925 = vpop.f32.mrf.mxu0
      %v1926 = vadd.f32 0.0, %v1925
      %v1927 = vpop.f32.mrf.mxu0
      %v1928 = vadd.f32 0.0, %v1927
      %1929 = vmatmul.bf16.gmra.mxu0 %v1512
      %v1930 = vpop.f32.mrf.mxu0
      %v1931 = vadd.f32 0.0, %v1930
      %v1932 = vpop.f32.mrf.mxu0
      %v1933 = vadd.f32 0.0, %v1932
      %1934 = vmatmul.bf16.gmra.mxu0 %v1517
      %v1935 = vpop.f32.mrf.mxu0
      %v1936 = vadd.f32 0.0, %v1935
      %v1937 = vpop.f32.mrf.mxu0
      %v1938 = vadd.f32 0.0, %v1937
      %1939 = vdwg.mxu0
      %1940 = vmatpush.bf16.msra.mxu0 %v1784
      %1941 = vmatpush.bf16.msra.mxu0 %v1782
      %1942 = vmatpush.bf16.msra.mxu0 %v1780
      %1943 = vmatpush.bf16.msra.mxu0 %v1778
      %1944 = vmatpush.bf16.msra.mxu0 %v1776
      %1945 = vmatpush.bf16.msra.mxu0 %v1774
      %1946 = vmatpush.bf16.msra.mxu0 %v1772
      %1947 = vmatpush.bf16.msra.mxu0 %v1770
      %1948 = vmatmul.bf16.gmra.mxu0 %v1503
      %v1949 = vpop.f32.mrf.mxu0
      %v1950 = vadd.f32 %v1921, %v1949
      %v1951 = vpop.f32.mrf.mxu0
      %v1952 = vadd.f32 %v1923, %v1951
      %1953 = vmatmul.bf16.gmra.mxu0 %v1508
      %v1954 = vpop.f32.mrf.mxu0
      %v1955 = vadd.f32 %v1926, %v1954
      %v1956 = vpop.f32.mrf.mxu0
      %v1957 = vadd.f32 %v1928, %v1956
      %1958 = vmatmul.bf16.gmra.mxu0 %v1513
      %v1959 = vpop.f32.mrf.mxu0
      %v1960 = vadd.f32 %v1931, %v1959
      %v1961 = vpop.f32.mrf.mxu0
      %v1962 = vadd.f32 %v1933, %v1961
      %1963 = vmatmul.bf16.gmra.mxu0 %v1518
      %v1964 = vpop.f32.mrf.mxu0
      %v1965 = vadd.f32 %v1936, %v1964
      %v1966 = vpop.f32.mrf.mxu0
      %v1967 = vadd.f32 %v1938, %v1966
      %1968 = vdwg.mxu0
      %1969 = vmatpush.bf16.msra.mxu0 %v1800
      %1970 = vmatpush.bf16.msra.mxu0 %v1798
      %1971 = vmatpush.bf16.msra.mxu0 %v1796
      %1972 = vmatpush.bf16.msra.mxu0 %v1794
      %1973 = vmatpush.bf16.msra.mxu0 %v1792
      %1974 = vmatpush.bf16.msra.mxu0 %v1790
      %1975 = vmatpush.bf16.msra.mxu0 %v1788
      %1976 = vmatpush.bf16.msra.mxu0 %v1786
      %1977 = vmatmul.bf16.gmra.mxu0 %v1504
      %v1978 = vpop.f32.mrf.mxu0
      %v1979 = vadd.f32 %v1950, %v1978
      %v1980 = vpop.f32.mrf.mxu0
      %v1981 = vadd.f32 %v1952, %v1980
      %1982 = vmatmul.bf16.gmra.mxu0 %v1509
      %v1983 = vpop.f32.mrf.mxu0
      %v1984 = vadd.f32 %v1955, %v1983
      %v1985 = vpop.f32.mrf.mxu0
      %v1986 = vadd.f32 %v1957, %v1985
      %1987 = vmatmul.bf16.gmra.mxu0 %v1514
      %v1988 = vpop.f32.mrf.mxu0
      %v1989 = vadd.f32 %v1960, %v1988
      %v1990 = vpop.f32.mrf.mxu0
      %v1991 = vadd.f32 %v1962, %v1990
      %1992 = vmatmul.bf16.gmra.mxu0 %v1519
      %v1993 = vpop.f32.mrf.mxu0
      %v1994 = vadd.f32 %v1965, %v1993
      %v1995 = vpop.f32.mrf.mxu0
      %v1996 = vadd.f32 %v1967, %v1995
      %1997 = vdwg.mxu0
      %1998 = vmatpush.bf16.msra.mxu0 %v1816
      %1999 = vmatpush.bf16.msra.mxu0 %v1814
      %2000 = vmatpush.bf16.msra.mxu0 %v1812
      %2001 = vmatpush.bf16.msra.mxu0 %v1810
      %2002 = vmatpush.bf16.msra.mxu0 %v1808
      %2003 = vmatpush.bf16.msra.mxu0 %v1806
      %2004 = vmatpush.bf16.msra.mxu0 %v1804
      %2005 = vmatpush.bf16.msra.mxu0 %v1802
      %2006 = vmatmul.bf16.gmra.mxu0 %v1505
      %v2007 = vpop.f32.mrf.mxu0
      %v2008 = vadd.f32 %v1979, %v2007
      %v2009 = vpop.f32.mrf.mxu0
      %v2010 = vadd.f32 %v1981, %v2009
      %2011 = vmatmul.bf16.gmra.mxu0 %v1510
      %v2012 = vpop.f32.mrf.mxu0
      %v2013 = vadd.f32 %v1984, %v2012
      %v2014 = vpop.f32.mrf.mxu0
      %v2015 = vadd.f32 %v1986, %v2014
      %2016 = vmatmul.bf16.gmra.mxu0 %v1515
      %v2017 = vpop.f32.mrf.mxu0
      %v2018 = vadd.f32 %v1989, %v2017
      %v2019 = vpop.f32.mrf.mxu0
      %v2020 = vadd.f32 %v1991, %v2019
      %2021 = vmatmul.bf16.gmra.mxu0 %v1520
      %v2022 = vpop.f32.mrf.mxu0
      %v2023 = vadd.f32 %v1994, %v2022
      %v2024 = vpop.f32.mrf.mxu0
      %v2025 = vadd.f32 %v1996, %v2024
      %2026 = vdwg.mxu0
      %2027 = vmatpush.bf16.msra.mxu0 0
      %2028 = vmatpush.bf16.msra.mxu0 0
      %2029 = vmatpush.bf16.msra.mxu0 0
      %2030 = vmatpush.bf16.msra.mxu0 0
      %2031 = vmatpush.bf16.msra.mxu0 %v1824
      %2032 = vmatpush.bf16.msra.mxu0 %v1822
      %2033 = vmatpush.bf16.msra.mxu0 %v1820
      %2034 = vmatpush.bf16.msra.mxu0 %v1818
      %2035 = vmatmul.bf16.gmra.mxu0 %v1900
      %v2036 = vpop.f32.mrf.mxu0
      %v2037 = vadd.f32 %v2008, %v2036
      %v2038 = vpop.f32.mrf.mxu0
      %v2039 = vadd.f32 %v2010, %v2038
      %2040 = vmatmul.bf16.gmra.mxu0 %v1903
      %v2041 = vpop.f32.mrf.mxu0
      %v2042 = vadd.f32 %v2013, %v2041
      %v2043 = vpop.f32.mrf.mxu0
      %v2044 = vadd.f32 %v2015, %v2043
      %2045 = vmatmul.bf16.gmra.mxu0 %v1906
      %v2046 = vpop.f32.mrf.mxu0
      %v2047 = vadd.f32 %v2018, %v2046
      %v2048 = vpop.f32.mrf.mxu0
      %v2049 = vadd.f32 %v2020, %v2048
      %2050 = vmatmul.bf16.gmra.mxu0 %v1909
      %v2051 = vpop.f32.mrf.mxu0
      %v2052 = vadd.f32 %v2023, %v2051
      %v2053 = vpop.f32.mrf.mxu0
      %v2054 = vadd.f32 %v2025, %v2053
      %2055 = vdwg.mxu0
      %2056 = vmatpush.bf16.msra.mxu0 %v1769
      %2057 = vmatpush.bf16.msra.mxu0 %v1767
      %2058 = vmatpush.bf16.msra.mxu0 %v1765
      %2059 = vmatpush.bf16.msra.mxu0 %v1763
      %2060 = vmatpush.bf16.msra.mxu0 %v1761
      %2061 = vmatpush.bf16.msra.mxu0 %v1759
      %2062 = vmatpush.bf16.msra.mxu0 %v1757
      %2063 = vmatpush.bf16.msra.mxu0 %v1755
      %2064 = vmatmul.bf16.gmra.mxu0 %v1502
      %v2065 = vpop.f32.mrf.mxu0
      %v2066 = vadd.f32 0.0, %v2065
      %v2067 = vpop.f32.mrf.mxu0
      %v2068 = vadd.f32 0.0, %v2067
      %2069 = vmatmul.bf16.gmra.mxu0 %v1507
      %v2070 = vpop.f32.mrf.mxu0
      %v2071 = vadd.f32 0.0, %v2070
      %v2072 = vpop.f32.mrf.mxu0
      %v2073 = vadd.f32 0.0, %v2072
      %2074 = vmatmul.bf16.gmra.mxu0 %v1512
      %v2075 = vpop.f32.mrf.mxu0
      %v2076 = vadd.f32 0.0, %v2075
      %v2077 = vpop.f32.mrf.mxu0
      %v2078 = vadd.f32 0.0, %v2077
      %2079 = vmatmul.bf16.gmra.mxu0 %v1517
      %v2080 = vpop.f32.mrf.mxu0
      %v2081 = vadd.f32 0.0, %v2080
      %v2082 = vpop.f32.mrf.mxu0
      %v2083 = vadd.f32 0.0, %v2082
      %2084 = vdwg.mxu0
      %2085 = vmatpush.bf16.msra.mxu0 %v1785
      %2086 = vmatpush.bf16.msra.mxu0 %v1783
      %2087 = vmatpush.bf16.msra.mxu0 %v1781
      %2088 = vmatpush.bf16.msra.mxu0 %v1779
      %2089 = vmatpush.bf16.msra.mxu0 %v1777
      %2090 = vmatpush.bf16.msra.mxu0 %v1775
      %2091 = vmatpush.bf16.msra.mxu0 %v1773
      %2092 = vmatpush.bf16.msra.mxu0 %v1771
      %2093 = vmatmul.bf16.gmra.mxu0 %v1503
      %v2094 = vpop.f32.mrf.mxu0
      %v2095 = vadd.f32 %v2066, %v2094
      %v2096 = vpop.f32.mrf.mxu0
      %v2097 = vadd.f32 %v2068, %v2096
      %2098 = vmatmul.bf16.gmra.mxu0 %v1508
      %v2099 = vpop.f32.mrf.mxu0
      %v2100 = vadd.f32 %v2071, %v2099
      %v2101 = vpop.f32.mrf.mxu0
      %v2102 = vadd.f32 %v2073, %v2101
      %2103 = vmatmul.bf16.gmra.mxu0 %v1513
      %v2104 = vpop.f32.mrf.mxu0
      %v2105 = vadd.f32 %v2076, %v2104
      %v2106 = vpop.f32.mrf.mxu0
      %v2107 = vadd.f32 %v2078, %v2106
      %2108 = vmatmul.bf16.gmra.mxu0 %v1518
      %v2109 = vpop.f32.mrf.mxu0
      %v2110 = vadd.f32 %v2081, %v2109
      %v2111 = vpop.f32.mrf.mxu0
      %v2112 = vadd.f32 %v2083, %v2111
      %2113 = vdwg.mxu0
      %2114 = vmatpush.bf16.msra.mxu0 %v1801
      %2115 = vmatpush.bf16.msra.mxu0 %v1799
      %2116 = vmatpush.bf16.msra.mxu0 %v1797
      %2117 = vmatpush.bf16.msra.mxu0 %v1795
      %2118 = vmatpush.bf16.msra.mxu0 %v1793
      %2119 = vmatpush.bf16.msra.mxu0 %v1791
      %2120 = vmatpush.bf16.msra.mxu0 %v1789
      %2121 = vmatpush.bf16.msra.mxu0 %v1787
      %2122 = vmatmul.bf16.gmra.mxu0 %v1504
      %v2123 = vpop.f32.mrf.mxu0
      %v2124 = vadd.f32 %v2095, %v2123
      %v2125 = vpop.f32.mrf.mxu0
      %v2126 = vadd.f32 %v2097, %v2125
      %2127 = vmatmul.bf16.gmra.mxu0 %v1509
      %v2128 = vpop.f32.mrf.mxu0
      %v2129 = vadd.f32 %v2100, %v2128
      %v2130 = vpop.f32.mrf.mxu0
      %v2131 = vadd.f32 %v2102, %v2130
      %2132 = vmatmul.bf16.gmra.mxu0 %v1514
      %v2133 = vpop.f32.mrf.mxu0
      %v2134 = vadd.f32 %v2105, %v2133
      %v2135 = vpop.f32.mrf.mxu0
      %v2136 = vadd.f32 %v2107, %v2135
      %2137 = vmatmul.bf16.gmra.mxu0 %v1519
      %v2138 = vpop.f32.mrf.mxu0
      %v2139 = vadd.f32 %v2110, %v2138
      %v2140 = vpop.f32.mrf.mxu0
      %v2141 = vadd.f32 %v2112, %v2140
      %2142 = vdwg.mxu0
      %2143 = vmatpush.bf16.msra.mxu0 %v1817
      %2144 = vmatpush.bf16.msra.mxu0 %v1815
      %2145 = vmatpush.bf16.msra.mxu0 %v1813
      %2146 = vmatpush.bf16.msra.mxu0 %v1811
      %2147 = vmatpush.bf16.msra.mxu0 %v1809
      %2148 = vmatpush.bf16.msra.mxu0 %v1807
      %2149 = vmatpush.bf16.msra.mxu0 %v1805
      %2150 = vmatpush.bf16.msra.mxu0 %v1803
      %2151 = vmatmul.bf16.gmra.mxu0 %v1505
      %v2152 = vpop.f32.mrf.mxu0
      %v2153 = vadd.f32 %v2124, %v2152
      %v2154 = vpop.f32.mrf.mxu0
      %v2155 = vadd.f32 %v2126, %v2154
      %2156 = vmatmul.bf16.gmra.mxu0 %v1510
      %v2157 = vpop.f32.mrf.mxu0
      %v2158 = vadd.f32 %v2129, %v2157
      %v2159 = vpop.f32.mrf.mxu0
      %v2160 = vadd.f32 %v2131, %v2159
      %2161 = vmatmul.bf16.gmra.mxu0 %v1515
      %v2162 = vpop.f32.mrf.mxu0
      %v2163 = vadd.f32 %v2134, %v2162
      %v2164 = vpop.f32.mrf.mxu0
      %v2165 = vadd.f32 %v2136, %v2164
      %2166 = vmatmul.bf16.gmra.mxu0 %v1520
      %v2167 = vpop.f32.mrf.mxu0
      %v2168 = vadd.f32 %v2139, %v2167
      %v2169 = vpop.f32.mrf.mxu0
      %v2170 = vadd.f32 %v2141, %v2169
      %2171 = vdwg.mxu0
      %2172 = vmatpush.bf16.msra.mxu0 0
      %2173 = vmatpush.bf16.msra.mxu0 0
      %2174 = vmatpush.bf16.msra.mxu0 0
      %2175 = vmatpush.bf16.msra.mxu0 0
      %2176 = vmatpush.bf16.msra.mxu0 %v1825
      %2177 = vmatpush.bf16.msra.mxu0 %v1823
      %2178 = vmatpush.bf16.msra.mxu0 %v1821
      %2179 = vmatpush.bf16.msra.mxu0 %v1819
      %2180 = vmatmul.bf16.gmra.mxu0 %v1900
      %v2181 = vpop.f32.mrf.mxu0
      %v2182 = vadd.f32 %v2153, %v2181
      %v2183 = vpop.f32.mrf.mxu0
      %v2184 = vadd.f32 %v2155, %v2183
      %2185 = vmatmul.bf16.gmra.mxu0 %v1903
      %v2186 = vpop.f32.mrf.mxu0
      %v2187 = vadd.f32 %v2158, %v2186
      %v2188 = vpop.f32.mrf.mxu0
      %v2189 = vadd.f32 %v2160, %v2188
      %2190 = vmatmul.bf16.gmra.mxu0 %v1906
      %v2191 = vpop.f32.mrf.mxu0
      %v2192 = vadd.f32 %v2163, %v2191
      %v2193 = vpop.f32.mrf.mxu0
      %v2194 = vadd.f32 %v2165, %v2193
      %2195 = vmatmul.bf16.gmra.mxu0 %v1909
      %v2196 = vpop.f32.mrf.mxu0
      %v2197 = vadd.f32 %v2168, %v2196
      %v2198 = vpop.f32.mrf.mxu0
      %v2199 = vadd.f32 %v2170, %v2198
      %2200 = vdwg.mxu0
      %v2201 = vadd.f32 %v2037, %v2182
      %2202 = vadd.xlane.f32.xlu0 %v2201
      %v2203 = vpop.xlane.xlu0 %2202
      %v2204 = vadd.f32 %v2039, %v2184
      %2205 = vadd.xlane.f32.xlu0 %v2204
      %v2206 = vpop.xlane.xlu0 %2205
      %v2207 = vadd.f32 %v2042, %v2187
      %2208 = vadd.xlane.f32.xlu0 %v2207
      %v2209 = vpop.xlane.xlu0 %2208
      %v2210 = vadd.f32 %v2044, %v2189
      %2211 = vadd.xlane.f32.xlu0 %v2210
      %v2212 = vpop.xlane.xlu0 %2211
      %v2213 = vadd.f32 %v2047, %v2192
      %2214 = vadd.xlane.f32.xlu0 %v2213
      %v2215 = vpop.xlane.xlu0 %2214
      %v2216 = vadd.f32 %v2049, %v2194
      %2217 = vadd.xlane.f32.xlu0 %v2216
      %v2218 = vpop.xlane.xlu0 %2217
      %v2219 = vadd.f32 %v2052, %v2197
      %2220 = vadd.xlane.f32.xlu0 %v2219
      %v2221 = vpop.xlane.xlu0 %2220
      %v2222 = vadd.f32 %v2054, %v2199
      %2223 = vadd.xlane.f32.xlu0 %v2222
      %v2224 = vpop.xlane.xlu0 %2223
      %v2225 = vmul.f32 %v2203, %v873
      %v2226 = vmul.f32 %v2206, %v873
      %v2227 = vmul.f32 %v2209, %v873
      %v2228 = vmul.f32 %v2212, %v873
      %v2229 = vmul.f32 %v2215, %v873
      %v2230 = vmul.f32 %v2218, %v873
      %v2231 = vmul.f32 %v2221, %v873
      %v2232 = vmul.f32 %v2224, %v873
      %v2233 = vmul.f32 %v2037, %v2037
      %v2234 = vmul.f32 %v2182, %v2182
      %v2235 = vmul.f32 %v2039, %v2039
      %v2236 = vmul.f32 %v2184, %v2184
      %v2237 = vmul.f32 %v2042, %v2042
      %v2238 = vmul.f32 %v2187, %v2187
      %v2239 = vmul.f32 %v2044, %v2044
      %v2240 = vmul.f32 %v2189, %v2189
      %v2241 = vmul.f32 %v2047, %v2047
      %v2242 = vmul.f32 %v2192, %v2192
      %v2243 = vmul.f32 %v2049, %v2049
      %v2244 = vmul.f32 %v2194, %v2194
      %v2245 = vmul.f32 %v2052, %v2052
      %v2246 = vmul.f32 %v2197, %v2197
      %v2247 = vmul.f32 %v2054, %v2054
      %v2248 = vmul.f32 %v2199, %v2199
      %v2249 = vadd.f32 %v2233, %v2234
      %2250 = vadd.xlane.f32.xlu0 %v2249
      %v2251 = vpop.xlane.xlu0 %2250
      %v2252 = vadd.f32 %v2235, %v2236
      %2253 = vadd.xlane.f32.xlu0 %v2252
      %v2254 = vpop.xlane.xlu0 %2253
      %v2255 = vadd.f32 %v2237, %v2238
      %2256 = vadd.xlane.f32.xlu0 %v2255
      %v2257 = vpop.xlane.xlu0 %2256
      %v2258 = vadd.f32 %v2239, %v2240
      %2259 = vadd.xlane.f32.xlu0 %v2258
      %v2260 = vpop.xlane.xlu0 %2259
      %v2261 = vadd.f32 %v2241, %v2242
      %2262 = vadd.xlane.f32.xlu0 %v2261
      %v2263 = vpop.xlane.xlu0 %2262
      %v2264 = vadd.f32 %v2243, %v2244
      %2265 = vadd.xlane.f32.xlu0 %v2264
      %v2266 = vpop.xlane.xlu0 %2265
      %v2267 = vadd.f32 %v2245, %v2246
      %2268 = vadd.xlane.f32.xlu0 %v2267
      %v2269 = vpop.xlane.xlu0 %2268
      %v2270 = vadd.f32 %v2247, %v2248
      %2271 = vadd.xlane.f32.xlu0 %v2270
      %v2272 = vpop.xlane.xlu0 %2271
      %v2273 = vmul.f32 %v2251, %v873
      %v2274 = vmul.f32 %v2254, %v873
      %v2275 = vmul.f32 %v2257, %v873
      %v2276 = vmul.f32 %v2260, %v873
      %v2277 = vmul.f32 %v2263, %v873
      %v2278 = vmul.f32 %v2266, %v873
      %v2279 = vmul.f32 %v2269, %v873
      %v2280 = vmul.f32 %v2272, %v873
      %v2281 = vmul.f32 %v2225, %v2225
      %v2282 = vmul.f32 %v2226, %v2226
      %v2283 = vmul.f32 %v2227, %v2227
      %v2284 = vmul.f32 %v2228, %v2228
      %v2285 = vmul.f32 %v2229, %v2229
      %v2286 = vmul.f32 %v2230, %v2230
      %v2287 = vmul.f32 %v2231, %v2231
      %v2288 = vmul.f32 %v2232, %v2232
      %v2289 = vsub.f32 %v2273, %v2281
      %v2290 = vsub.f32 %v2274, %v2282
      %v2291 = vsub.f32 %v2275, %v2283
      %v2292 = vsub.f32 %v2276, %v2284
      %v2293 = vsub.f32 %v2277, %v2285
      %v2294 = vsub.f32 %v2278, %v2286
      %v2295 = vsub.f32 %v2279, %v2287
      %v2296 = vsub.f32 %v2280, %v2288
      %v2297 = vmax.f32 %v2289, 0.0
      %v2298 = vmax.f32 %v2290, 0.0
      %v2299 = vmax.f32 %v2291, 0.0
      %v2300 = vmax.f32 %v2292, 0.0
      %v2301 = vmax.f32 %v2293, 0.0
      %v2302 = vmax.f32 %v2294, 0.0
      %v2303 = vmax.f32 %v2295, 0.0
      %v2304 = vmax.f32 %v2296, 0.0
      %v2305 = vsub.f32 %v2037, %v2225
      %v2306 = vsub.f32 %v2182, %v2225
      %v2307 = vsub.f32 %v2039, %v2226
      %v2308 = vsub.f32 %v2184, %v2226
      %v2309 = vsub.f32 %v2042, %v2227
      %v2310 = vsub.f32 %v2187, %v2227
      %v2311 = vsub.f32 %v2044, %v2228
      %v2312 = vsub.f32 %v2189, %v2228
      %v2313 = vsub.f32 %v2047, %v2229
      %v2314 = vsub.f32 %v2192, %v2229
      %v2315 = vsub.f32 %v2049, %v2230
      %v2316 = vsub.f32 %v2194, %v2230
      %v2317 = vsub.f32 %v2052, %v2231
      %v2318 = vsub.f32 %v2197, %v2231
      %v2319 = vsub.f32 %v2054, %v2232
      %v2320 = vsub.f32 %v2199, %v2232
      %v2321 = vadd.f32 %v2297, 1e-05
      %v2322 = vadd.f32 %v2298, 1e-05
      %v2323 = vadd.f32 %v2299, 1e-05
      %v2324 = vadd.f32 %v2300, 1e-05
      %v2325 = vadd.f32 %v2301, 1e-05
      %v2326 = vadd.f32 %v2302, 1e-05
      %v2327 = vadd.f32 %v2303, 1e-05
      %v2328 = vadd.f32 %v2304, 1e-05
      %v2329 = vrsqrt.pop %v2321
      %v2330 = vmul.f32 %v2329, %v2321
      %v2331 = vmul.f32 %v2330, %v2329
      %v2332 = vmul.f32 0.5, %v2331
      %v2333 = vsub.f32 1.5, %v2332
      %v2334 = vmul.f32 %v2329, %v2333
      %vm2335 = vweird.f32 %v2321
      %vm2336 = vweird.f32 %v2329
      %vm2337 = vmor %vm2335, %vm2336
      %v2338 = vsel %vm2337, %v2329, %v2334
      %v2339 = vrsqrt.pop %v2322
      %v2340 = vmul.f32 %v2339, %v2322
      %v2341 = vmul.f32 %v2340, %v2339
      %v2342 = vmul.f32 0.5, %v2341
      %v2343 = vsub.f32 1.5, %v2342
      %v2344 = vmul.f32 %v2339, %v2343
      %vm2345 = vweird.f32 %v2322
      %vm2346 = vweird.f32 %v2339
      %vm2347 = vmor %vm2345, %vm2346
      %v2348 = vsel %vm2347, %v2339, %v2344
      %v2349 = vrsqrt.pop %v2323
      %v2350 = vmul.f32 %v2349, %v2323
      %v2351 = vmul.f32 %v2350, %v2349
      %v2352 = vmul.f32 0.5, %v2351
      %v2353 = vsub.f32 1.5, %v2352
      %v2354 = vmul.f32 %v2349, %v2353
      %vm2355 = vweird.f32 %v2323
      %vm2356 = vweird.f32 %v2349
      %vm2357 = vmor %vm2355, %vm2356
      %v2358 = vsel %vm2357, %v2349, %v2354
      %v2359 = vrsqrt.pop %v2324
      %v2360 = vmul.f32 %v2359, %v2324
      %v2361 = vmul.f32 %v2360, %v2359
      %v2362 = vmul.f32 0.5, %v2361
      %v2363 = vsub.f32 1.5, %v2362
      %v2364 = vmul.f32 %v2359, %v2363
      %vm2365 = vweird.f32 %v2324
      %vm2366 = vweird.f32 %v2359
      %vm2367 = vmor %vm2365, %vm2366
      %v2368 = vsel %vm2367, %v2359, %v2364
      %v2369 = vrsqrt.pop %v2325
      %v2370 = vmul.f32 %v2369, %v2325
      %v2371 = vmul.f32 %v2370, %v2369
      %v2372 = vmul.f32 0.5, %v2371
      %v2373 = vsub.f32 1.5, %v2372
      %v2374 = vmul.f32 %v2369, %v2373
      %vm2375 = vweird.f32 %v2325
      %vm2376 = vweird.f32 %v2369
      %vm2377 = vmor %vm2375, %vm2376
      %v2378 = vsel %vm2377, %v2369, %v2374
      %v2379 = vrsqrt.pop %v2326
      %v2380 = vmul.f32 %v2379, %v2326
      %v2381 = vmul.f32 %v2380, %v2379
      %v2382 = vmul.f32 0.5, %v2381
      %v2383 = vsub.f32 1.5, %v2382
      %v2384 = vmul.f32 %v2379, %v2383
      %vm2385 = vweird.f32 %v2326
      %vm2386 = vweird.f32 %v2379
      %vm2387 = vmor %vm2385, %vm2386
      %v2388 = vsel %vm2387, %v2379, %v2384
      %v2389 = vrsqrt.pop %v2327
      %v2390 = vmul.f32 %v2389, %v2327
      %v2391 = vmul.f32 %v2390, %v2389
      %v2392 = vmul.f32 0.5, %v2391
      %v2393 = vsub.f32 1.5, %v2392
      %v2394 = vmul.f32 %v2389, %v2393
      %vm2395 = vweird.f32 %v2327
      %vm2396 = vweird.f32 %v2389
      %vm2397 = vmor %vm2395, %vm2396
      %v2398 = vsel %vm2397, %v2389, %v2394
      %v2399 = vrsqrt.pop %v2328
      %v2400 = vmul.f32 %v2399, %v2328
      %v2401 = vmul.f32 %v2400, %v2399
      %v2402 = vmul.f32 0.5, %v2401
      %v2403 = vsub.f32 1.5, %v2402
      %v2404 = vmul.f32 %v2399, %v2403
      %vm2405 = vweird.f32 %v2328
      %vm2406 = vweird.f32 %v2399
      %vm2407 = vmor %vm2405, %vm2406
      %v2408 = vsel %vm2407, %v2399, %v2404
      %v2409 = vmul.f32 %v2305, %v2338
      %v2410 = vmul.f32 %v2306, %v2338
      %v2411 = vmul.f32 %v2307, %v2348
      %v2412 = vmul.f32 %v2308, %v2348
      %v2413 = vmul.f32 %v2309, %v2358
      %v2414 = vmul.f32 %v2310, %v2358
      %v2415 = vmul.f32 %v2311, %v2368
      %v2416 = vmul.f32 %v2312, %v2368
      %v2417 = vmul.f32 %v2313, %v2378
      %v2418 = vmul.f32 %v2314, %v2378
      %v2419 = vmul.f32 %v2315, %v2388
      %v2420 = vmul.f32 %v2316, %v2388
      %v2421 = vmul.f32 %v2317, %v2398
      %v2422 = vmul.f32 %v2318, %v2398
      %v2423 = vmul.f32 %v2319, %v2408
      %v2424 = vmul.f32 %v2320, %v2408
      %v2425 = vmax.f32 %v2409, 0.0
      %v2426 = vmax.f32 %v2410, 0.0
      %v2427 = vmax.f32 %v2411, 0.0
      %v2428 = vmax.f32 %v2412, 0.0
      %v2429 = vmax.f32 %v2413, 0.0
      %v2430 = vmax.f32 %v2414, 0.0
      %v2431 = vmax.f32 %v2415, 0.0
      %v2432 = vmax.f32 %v2416, 0.0
      %v2433 = vmax.f32 %v2417, 0.0
      %v2434 = vmax.f32 %v2418, 0.0
      %v2435 = vmax.f32 %v2419, 0.0
      %v2436 = vmax.f32 %v2420, 0.0
      %v2437 = vmax.f32 %v2421, 0.0
      %v2438 = vmax.f32 %v2422, 0.0
      %v2439 = vmax.f32 %v2423, 0.0
      %v2440 = vmax.f32 %v2424, 0.0
      %v2441 = vpack.c.bf16 %v2426, %v2425
      %v2442 = vpack.c.bf16 %v2428, %v2427
      %v2443 = vpack.c.bf16 %v2430, %v2429
      %v2444 = vpack.c.bf16 %v2432, %v2431
      %v2445 = vpack.c.bf16 %v2434, %v2433
      %v2446 = vpack.c.bf16 %v2436, %v2435
      %v2447 = vpack.c.bf16 %v2438, %v2437
      %v2448 = vpack.c.bf16 %v2440, %v2439
      %v2457 = vunpack.c.l.b16 %v2441
      %v2458 = vunpack.c.h.b16 %v2441
      %v2459 = vunpack.c.l.b16 %v2442
      %v2460 = vunpack.c.h.b16 %v2442
      %v2461 = vunpack.c.l.b16 %v2443
      %v2462 = vunpack.c.h.b16 %v2443
      %v2463 = vunpack.c.l.b16 %v2444
      %v2464 = vunpack.c.h.b16 %v2444
      %v2465 = vunpack.c.l.b16 %v2445
      %v2466 = vunpack.c.h.b16 %v2445
      %v2467 = vunpack.c.l.b16 %v2446
      %v2468 = vunpack.c.h.b16 %v2446
      %v2469 = vunpack.c.l.b16 %v2447
      %v2470 = vunpack.c.h.b16 %v2447
      %v2471 = vunpack.c.l.b16 %v2448
      %v2472 = vunpack.c.h.b16 %v2448
      %v2473 = vpack.c.b16 %v2459, %v2457
      %v2474 = vpack.c.b16 %v2460, %v2458
      %v2475 = vpack.c.b16 %v2463, %v2461
      %v2476 = vpack.c.b16 %v2464, %v2462
      %v2477 = vpack.c.b16 %v2467, %v2465
      %v2478 = vpack.c.b16 %v2468, %v2466
      %v2479 = vpack.c.b16 %v2471, %v2469
      %v2480 = vpack.c.b16 %v2472, %v2470
      %v2489 = vsel %vm372, %v2473, 0
      %v2490 = vsel %vm379, %v2474, 0
      %v2491 = vsel %vm372, %v2475, 0
      %v2492 = vsel %vm379, %v2476, 0
      %v2493 = vsel %vm372, %v2477, 0
      %v2494 = vsel %vm379, %v2478, 0
      %v2495 = vsel %vm372, %v2479, 0
      %v2496 = vsel %vm379, %v2480, 0
      %v2497 = vsel %vm402, %v2473, 0
      %v2498 = vsel %vm409, %v2474, 0
      %v2499 = vsel %vm402, %v2475, 0
      %v2500 = vsel %vm409, %v2476, 0
      %v2501 = vsel %vm402, %v2477, 0
      %v2502 = vsel %vm409, %v2478, 0
      %v2503 = vsel %vm402, %v2479, 0
      %v2504 = vsel %vm409, %v2480, 0
      %v2505 = vsel %vm424, %v2473, 0
      %v2506 = vsel %vm431, %v2474, 0
      %v2507 = vsel %vm424, %v2475, 0
      %v2508 = vsel %vm431, %v2476, 0
      %v2509 = vsel %vm424, %v2477, 0
      %v2510 = vsel %vm431, %v2478, 0
      %v2511 = vsel %vm424, %v2479, 0
      %v2512 = vsel %vm431, %v2480, 0
      %v2513 = vsel %vm446, %v2473, 0
      %v2514 = vsel %vm453, %v2474, 0
      %v2515 = vsel %vm446, %v2475, 0
      %v2516 = vsel %vm453, %v2476, 0
      %v2517 = vsel %vm446, %v2477, 0
      %v2518 = vsel %vm453, %v2478, 0
      %v2519 = vsel %vm446, %v2479, 0
      %v2520 = vsel %vm453, %v2480, 0
      %v2521 = vsel %vm468, %v2473, 0
      %v2522 = vsel %vm475, %v2474, 0
      %v2523 = vsel %vm468, %v2475, 0
      %v2524 = vsel %vm475, %v2476, 0
      %v2525 = vsel %vm468, %v2477, 0
      %v2526 = vsel %vm475, %v2478, 0
      %v2527 = vsel %vm468, %v2479, 0
      %v2528 = vsel %vm475, %v2480, 0
      %v2529 = vsel %vm490, %v2473, 0
      %v2530 = vsel %vm497, %v2474, 0
      %v2531 = vsel %vm490, %v2475, 0
      %v2532 = vsel %vm497, %v2476, 0
      %v2533 = vsel %vm490, %v2477, 0
      %v2534 = vsel %vm497, %v2478, 0
      %v2535 = vsel %vm490, %v2479, 0
      %v2536 = vsel %vm497, %v2480, 0
      %2537 = vrot.lane.b32.xlu0 %v2473, 127
      %v2538 = vpop.permute.xlu0 %2537
      %2539 = vrot.lane.b32.xlu0 %v2474, 127
      %v2540 = vpop.permute.xlu0 %2539
      %2541 = vrot.lane.b32.xlu0 %v2475, 127
      %v2542 = vpop.permute.xlu0 %2541
      %2543 = vrot.lane.b32.xlu0 %v2476, 127
      %v2544 = vpop.permute.xlu0 %2543
      %2545 = vrot.lane.b32.xlu0 %v2477, 127
      %v2546 = vpop.permute.xlu0 %2545
      %2547 = vrot.lane.b32.xlu0 %v2478, 127
      %v2548 = vpop.permute.xlu0 %2547
      %2549 = vrot.lane.b32.xlu0 %v2479, 127
      %v2550 = vpop.permute.xlu0 %2549
      %2551 = vrot.lane.b32.xlu0 %v2480, 127
      %v2552 = vpop.permute.xlu0 %2551
      %v2553 = vsel %vm416, %v502, %v2538
      %v2554 = vsel %vm416, %v2538, %v2540
      %v2555 = vsel %vm416, %v502, %v2542
      %v2556 = vsel %vm416, %v2542, %v2544
      %v2557 = vsel %vm416, %v502, %v2546
      %v2558 = vsel %vm416, %v2546, %v2548
      %v2559 = vsel %vm416, %v502, %v2550
      %v2560 = vsel %vm416, %v2550, %v2552
      %2569 = vrot.lane.b32.xlu0 %v2497, 126
      %v2570 = vpop.permute.xlu0 %2569
      %2571 = vrot.lane.b32.xlu0 %v2498, 126
      %v2572 = vpop.permute.xlu0 %2571
      %2573 = vrot.lane.b32.xlu0 %v2499, 126
      %v2574 = vpop.permute.xlu0 %2573
      %2575 = vrot.lane.b32.xlu0 %v2500, 126
      %v2576 = vpop.permute.xlu0 %2575
      %2577 = vrot.lane.b32.xlu0 %v2501, 126
      %v2578 = vpop.permute.xlu0 %2577
      %2579 = vrot.lane.b32.xlu0 %v2502, 126
      %v2580 = vpop.permute.xlu0 %2579
      %2581 = vrot.lane.b32.xlu0 %v2503, 126
      %v2582 = vpop.permute.xlu0 %2581
      %2583 = vrot.lane.b32.xlu0 %v2504, 126
      %v2584 = vpop.permute.xlu0 %2583
      %v2585 = vsel %vm517, %v512, %v2570
      %v2586 = vsel %vm517, %v2570, %v2572
      %v2587 = vsel %vm517, %v512, %v2574
      %v2588 = vsel %vm517, %v2574, %v2576
      %v2589 = vsel %vm517, %v512, %v2578
      %v2590 = vsel %vm517, %v2578, %v2580
      %v2591 = vsel %vm517, %v512, %v2582
      %v2592 = vsel %vm517, %v2582, %v2584
      %2601 = vrot.lane.b32.xlu0 %v2505, 112
      %v2602 = vpop.permute.xlu0 %2601
      %2603 = vrot.lane.b32.xlu0 %v2506, 112
      %v2604 = vpop.permute.xlu0 %2603
      %2605 = vrot.lane.b32.xlu0 %v2507, 112
      %v2606 = vpop.permute.xlu0 %2605
      %2607 = vrot.lane.b32.xlu0 %v2508, 112
      %v2608 = vpop.permute.xlu0 %2607
      %2609 = vrot.lane.b32.xlu0 %v2509, 112
      %v2610 = vpop.permute.xlu0 %2609
      %2611 = vrot.lane.b32.xlu0 %v2510, 112
      %v2612 = vpop.permute.xlu0 %2611
      %2613 = vrot.lane.b32.xlu0 %v2511, 112
      %v2614 = vpop.permute.xlu0 %2613
      %2615 = vrot.lane.b32.xlu0 %v2512, 112
      %v2616 = vpop.permute.xlu0 %2615
      %v2617 = vsel %vm528, %v523, %v2602
      %v2618 = vsel %vm528, %v2602, %v2604
      %v2619 = vsel %vm528, %v523, %v2606
      %v2620 = vsel %vm528, %v2606, %v2608
      %v2621 = vsel %vm528, %v523, %v2610
      %v2622 = vsel %vm528, %v2610, %v2612
      %v2623 = vsel %vm528, %v523, %v2614
      %v2624 = vsel %vm528, %v2614, %v2616
      %2625 = vrot.lane.b32.xlu0 %v2473, 111
      %v2626 = vpop.permute.xlu0 %2625
      %2627 = vrot.lane.b32.xlu0 %v2474, 111
      %v2628 = vpop.permute.xlu0 %2627
      %2629 = vrot.lane.b32.xlu0 %v2475, 111
      %v2630 = vpop.permute.xlu0 %2629
      %2631 = vrot.lane.b32.xlu0 %v2476, 111
      %v2632 = vpop.permute.xlu0 %2631
      %2633 = vrot.lane.b32.xlu0 %v2477, 111
      %v2634 = vpop.permute.xlu0 %2633
      %2635 = vrot.lane.b32.xlu0 %v2478, 111
      %v2636 = vpop.permute.xlu0 %2635
      %2637 = vrot.lane.b32.xlu0 %v2479, 111
      %v2638 = vpop.permute.xlu0 %2637
      %2639 = vrot.lane.b32.xlu0 %v2480, 111
      %v2640 = vpop.permute.xlu0 %2639
      %v2641 = vsel %vm364, %v2626, %v2628
      %v2642 = vsel %vm364, %v2630, %v2632
      %v2643 = vsel %vm364, %v2634, %v2636
      %v2644 = vsel %vm364, %v2638, %v2640
      %2653 = vrot.lane.b32.xlu0 %v2513, 110
      %v2654 = vpop.permute.xlu0 %2653
      %2655 = vrot.lane.b32.xlu0 %v2514, 110
      %v2656 = vpop.permute.xlu0 %2655
      %2657 = vrot.lane.b32.xlu0 %v2515, 110
      %v2658 = vpop.permute.xlu0 %2657
      %2659 = vrot.lane.b32.xlu0 %v2516, 110
      %v2660 = vpop.permute.xlu0 %2659
      %2661 = vrot.lane.b32.xlu0 %v2517, 110
      %v2662 = vpop.permute.xlu0 %2661
      %2663 = vrot.lane.b32.xlu0 %v2518, 110
      %v2664 = vpop.permute.xlu0 %2663
      %2665 = vrot.lane.b32.xlu0 %v2519, 110
      %v2666 = vpop.permute.xlu0 %2665
      %2667 = vrot.lane.b32.xlu0 %v2520, 110
      %v2668 = vpop.permute.xlu0 %2667
      %v2669 = vsel %vm544, %v2654, %v2656
      %v2670 = vsel %vm544, %v2656, %v543
      %v2671 = vsel %vm544, %v2658, %v2660
      %v2672 = vsel %vm544, %v2660, %v543
      %v2673 = vsel %vm544, %v2662, %v2664
      %v2674 = vsel %vm544, %v2664, %v543
      %v2675 = vsel %vm544, %v2666, %v2668
      %v2676 = vsel %vm544, %v2668, %v543
      %2685 = vrot.lane.b32.xlu0 %v2521, 96
      %v2686 = vpop.permute.xlu0 %2685
      %2687 = vrot.lane.b32.xlu0 %v2522, 96
      %v2688 = vpop.permute.xlu0 %2687
      %2689 = vrot.lane.b32.xlu0 %v2523, 96
      %v2690 = vpop.permute.xlu0 %2689
      %2691 = vrot.lane.b32.xlu0 %v2524, 96
      %v2692 = vpop.permute.xlu0 %2691
      %2693 = vrot.lane.b32.xlu0 %v2525, 96
      %v2694 = vpop.permute.xlu0 %2693
      %2695 = vrot.lane.b32.xlu0 %v2526, 96
      %v2696 = vpop.permute.xlu0 %2695
      %2697 = vrot.lane.b32.xlu0 %v2527, 96
      %v2698 = vpop.permute.xlu0 %2697
      %2699 = vrot.lane.b32.xlu0 %v2528, 96
      %v2700 = vpop.permute.xlu0 %2699
      %v2701 = vsel %vm555, %v2686, %v2688
      %v2702 = vsel %vm555, %v2688, %v554
      %v2703 = vsel %vm555, %v2690, %v2692
      %v2704 = vsel %vm555, %v2692, %v554
      %v2705 = vsel %vm555, %v2694, %v2696
      %v2706 = vsel %vm555, %v2696, %v554
      %v2707 = vsel %vm555, %v2698, %v2700
      %v2708 = vsel %vm555, %v2700, %v554
      %2709 = vrot.lane.b32.xlu0 %v2473, 95
      %v2710 = vpop.permute.xlu0 %2709
      %2711 = vrot.lane.b32.xlu0 %v2474, 95
      %v2712 = vpop.permute.xlu0 %2711
      %2713 = vrot.lane.b32.xlu0 %v2475, 95
      %v2714 = vpop.permute.xlu0 %2713
      %2715 = vrot.lane.b32.xlu0 %v2476, 95
      %v2716 = vpop.permute.xlu0 %2715
      %2717 = vrot.lane.b32.xlu0 %v2477, 95
      %v2718 = vpop.permute.xlu0 %2717
      %2719 = vrot.lane.b32.xlu0 %v2478, 95
      %v2720 = vpop.permute.xlu0 %2719
      %2721 = vrot.lane.b32.xlu0 %v2479, 95
      %v2722 = vpop.permute.xlu0 %2721
      %2723 = vrot.lane.b32.xlu0 %v2480, 95
      %v2724 = vpop.permute.xlu0 %2723
      %v2725 = vsel %vm564, %v2710, %v2712
      %v2726 = vsel %vm564, %v2712, %v563
      %v2727 = vsel %vm564, %v2714, %v2716
      %v2728 = vsel %vm564, %v2716, %v563
      %v2729 = vsel %vm564, %v2718, %v2720
      %v2730 = vsel %vm564, %v2720, %v563
      %v2731 = vsel %vm564, %v2722, %v2724
      %v2732 = vsel %vm564, %v2724, %v563
      %2741 = vrot.lane.b32.xlu0 %v2529, 94
      %v2742 = vpop.permute.xlu0 %2741
      %2743 = vrot.lane.b32.xlu0 %v2530, 94
      %v2744 = vpop.permute.xlu0 %2743
      %2745 = vrot.lane.b32.xlu0 %v2531, 94
      %v2746 = vpop.permute.xlu0 %2745
      %2747 = vrot.lane.b32.xlu0 %v2532, 94
      %v2748 = vpop.permute.xlu0 %2747
      %2749 = vrot.lane.b32.xlu0 %v2533, 94
      %v2750 = vpop.permute.xlu0 %2749
      %2751 = vrot.lane.b32.xlu0 %v2534, 94
      %v2752 = vpop.permute.xlu0 %2751
      %2753 = vrot.lane.b32.xlu0 %v2535, 94
      %v2754 = vpop.permute.xlu0 %2753
      %2755 = vrot.lane.b32.xlu0 %v2536, 94
      %v2756 = vpop.permute.xlu0 %2755
      %v2757 = vsel %vm575, %v2742, %v2744
      %v2758 = vsel %vm575, %v2744, %v574
      %v2759 = vsel %vm575, %v2746, %v2748
      %v2760 = vsel %vm575, %v2748, %v574
      %v2761 = vsel %vm575, %v2750, %v2752
      %v2762 = vsel %vm575, %v2752, %v574
      %v2763 = vsel %vm575, %v2754, %v2756
      %v2764 = vsel %vm575, %v2756, %v574
      %v2765 = vld [vmem:[%s3] sm:$0xff]
      %v2766 = vld [vmem:[%s3 + $0x8] sm:$0xff]
      %v2767 = vld [vmem:[%s3 + $0x10] sm:$0xf]
      %v2768 = vld [vmem:[%s3 + $0x14] sm:$0xff]
      %v2769 = vld [vmem:[%s3 + $0x1c] sm:$0xff]
      %v2770 = vld [vmem:[%s3 + $0x24] sm:$0xf]
      %v2771 = vld [vmem:[%s3 + $0x28] sm:$0xff]
      %v2772 = vld [vmem:[%s3 + $0x30] sm:$0xff]
      %v2773 = vld [vmem:[%s3 + $0x38] sm:$0xf]
      %v2774 = vld [vmem:[%s3 + $0x3c] sm:$0xff]
      %v2775 = vld [vmem:[%s3 + $0x44] sm:$0xff]
      %v2776 = vld [vmem:[%s3 + $0x4c] sm:$0xf]
      %v2777 = vld [vmem:[%s3 + $0x50] sm:$0xff]
      %v2778 = vld [vmem:[%s3 + $0x58] sm:$0xff]
      %v2779 = vld [vmem:[%s3 + $0x60] sm:$0xf]
      %v2780 = vld [vmem:[%s3 + $0x64] sm:$0xff]
      %v2781 = vld [vmem:[%s3 + $0x6c] sm:$0xff]
      %v2782 = vld [vmem:[%s3 + $0x74] sm:$0xf]
      %v2783 = vld [vmem:[%s3 + $0x78] sm:$0xff]
      %v2784 = vld [vmem:[%s3 + $0x80] sm:$0xff]
      %v2785 = vld [vmem:[%s3 + $0x88] sm:$0xf]
      %v2786 = vld [vmem:[%s3 + $0x8c] sm:$0xff]
      %v2787 = vld [vmem:[%s3 + $0x94] sm:$0xff]
      %v2788 = vld [vmem:[%s3 + $0x9c] sm:$0xf]
      %v2813 = vunpack.c.l.b16 %v2765
      %v2814 = vunpack.c.h.b16 %v2765
      %v2815 = vunpack.c.l.b16 %v2766
      %v2816 = vunpack.c.h.b16 %v2766
      %v2817 = vunpack.c.l.b16 %v2767
      %v2818 = vunpack.c.l.b16 %v2768
      %v2819 = vunpack.c.h.b16 %v2768
      %v2820 = vunpack.c.l.b16 %v2769
      %v2821 = vunpack.c.h.b16 %v2769
      %v2822 = vunpack.c.l.b16 %v2770
      %v2823 = vunpack.c.l.b16 %v2771
      %v2824 = vunpack.c.h.b16 %v2771
      %v2825 = vunpack.c.l.b16 %v2772
      %v2826 = vunpack.c.h.b16 %v2772
      %v2827 = vunpack.c.l.b16 %v2773
      %v2828 = vunpack.c.l.b16 %v2774
      %v2829 = vunpack.c.h.b16 %v2774
      %v2830 = vunpack.c.l.b16 %v2775
      %v2831 = vunpack.c.h.b16 %v2775
      %v2832 = vunpack.c.l.b16 %v2776
      %v2833 = vunpack.c.l.b16 %v2777
      %v2834 = vunpack.c.h.b16 %v2777
      %v2835 = vunpack.c.l.b16 %v2778
      %v2836 = vunpack.c.h.b16 %v2778
      %v2837 = vunpack.c.l.b16 %v2779
      %v2838 = vunpack.c.l.b16 %v2780
      %v2839 = vunpack.c.h.b16 %v2780
      %v2840 = vunpack.c.l.b16 %v2781
      %v2841 = vunpack.c.h.b16 %v2781
      %v2842 = vunpack.c.l.b16 %v2782
      %v2843 = vunpack.c.l.b16 %v2783
      %v2844 = vunpack.c.h.b16 %v2783
      %v2845 = vunpack.c.l.b16 %v2784
      %v2846 = vunpack.c.h.b16 %v2784
      %v2847 = vunpack.c.l.b16 %v2785
      %v2848 = vunpack.c.l.b16 %v2786
      %v2849 = vunpack.c.h.b16 %v2786
      %v2850 = vunpack.c.l.b16 %v2787
      %v2851 = vunpack.c.h.b16 %v2787
      %v2852 = vunpack.c.l.b16 %v2788
      %v2853 = vpack.c.b16 %v2818, %v2813
      %v2854 = vpack.c.b16 %v2819, %v2814
      %v2855 = vpack.c.b16 %v2820, %v2815
      %v2856 = vpack.c.b16 %v2821, %v2816
      %v2857 = vpack.c.b16 %v2822, %v2817
      %v2858 = vpack.c.b16 %v2828, %v2823
      %v2859 = vpack.c.b16 %v2829, %v2824
      %v2860 = vpack.c.b16 %v2830, %v2825
      %v2861 = vpack.c.b16 %v2831, %v2826
      %v2862 = vpack.c.b16 %v2832, %v2827
      %v2863 = vpack.c.b16 %v2838, %v2833
      %v2864 = vpack.c.b16 %v2839, %v2834
      %v2865 = vpack.c.b16 %v2840, %v2835
      %v2866 = vpack.c.b16 %v2841, %v2836
      %v2867 = vpack.c.b16 %v2842, %v2837
      %v2868 = vpack.c.b16 %v2848, %v2843
      %v2869 = vpack.c.b16 %v2849, %v2844
      %v2870 = vpack.c.b16 %v2850, %v2845
      %v2871 = vpack.c.b16 %v2851, %v2846
      %v2872 = vpack.c.b16 %v2852, %v2847
      %2897 = vrot.lane.b32.xlu0 %v2489, 17
      %v2898 = vpop.permute.xlu0 %2897
      %2899 = vrot.lane.b32.xlu0 %v2490, 17
      %v2900 = vpop.permute.xlu0 %2899
      %2901 = vrot.lane.b32.xlu0 %v2491, 17
      %v2902 = vpop.permute.xlu0 %2901
      %2903 = vrot.lane.b32.xlu0 %v2492, 17
      %v2904 = vpop.permute.xlu0 %2903
      %2905 = vrot.lane.b32.xlu0 %v2493, 17
      %v2906 = vpop.permute.xlu0 %2905
      %2907 = vrot.lane.b32.xlu0 %v2494, 17
      %v2908 = vpop.permute.xlu0 %2907
      %2909 = vrot.lane.b32.xlu0 %v2495, 17
      %v2910 = vpop.permute.xlu0 %2909
      %2911 = vrot.lane.b32.xlu0 %v2496, 17
      %v2912 = vpop.permute.xlu0 %2911
      %2913 = vrot.lane.b32.xlu0 %v2553, 17
      %v2914 = vpop.permute.xlu0 %2913
      %2915 = vrot.lane.b32.xlu0 %v2554, 17
      %v2916 = vpop.permute.xlu0 %2915
      %2917 = vrot.lane.b32.xlu0 %v2540, 17
      %v2918 = vpop.permute.xlu0 %2917
      %2919 = vrot.lane.b32.xlu0 %v2555, 17
      %v2920 = vpop.permute.xlu0 %2919
      %2921 = vrot.lane.b32.xlu0 %v2556, 17
      %v2922 = vpop.permute.xlu0 %2921
      %2923 = vrot.lane.b32.xlu0 %v2544, 17
      %v2924 = vpop.permute.xlu0 %2923
      %2925 = vrot.lane.b32.xlu0 %v2557, 17
      %v2926 = vpop.permute.xlu0 %2925
      %2927 = vrot.lane.b32.xlu0 %v2558, 17
      %v2928 = vpop.permute.xlu0 %2927
      %2929 = vrot.lane.b32.xlu0 %v2548, 17
      %v2930 = vpop.permute.xlu0 %2929
      %2931 = vrot.lane.b32.xlu0 %v2559, 17
      %v2932 = vpop.permute.xlu0 %2931
      %2933 = vrot.lane.b32.xlu0 %v2560, 17
      %v2934 = vpop.permute.xlu0 %2933
      %2935 = vrot.lane.b32.xlu0 %v2552, 17
      %v2936 = vpop.permute.xlu0 %2935
      %2937 = vrot.lane.b32.xlu0 %v2585, 17
      %v2938 = vpop.permute.xlu0 %2937
      %2939 = vrot.lane.b32.xlu0 %v2586, 17
      %v2940 = vpop.permute.xlu0 %2939
      %2941 = vrot.lane.b32.xlu0 %v2572, 17
      %v2942 = vpop.permute.xlu0 %2941
      %2943 = vrot.lane.b32.xlu0 %v2587, 17
      %v2944 = vpop.permute.xlu0 %2943
      %2945 = vrot.lane.b32.xlu0 %v2588, 17
      %v2946 = vpop.permute.xlu0 %2945
      %2947 = vrot.lane.b32.xlu0 %v2576, 17
      %v2948 = vpop.permute.xlu0 %2947
      %2949 = vrot.lane.b32.xlu0 %v2589, 17
      %v2950 = vpop.permute.xlu0 %2949
      %2951 = vrot.lane.b32.xlu0 %v2590, 17
      %v2952 = vpop.permute.xlu0 %2951
      %2953 = vrot.lane.b32.xlu0 %v2580, 17
      %v2954 = vpop.permute.xlu0 %2953
      %2955 = vrot.lane.b32.xlu0 %v2591, 17
      %v2956 = vpop.permute.xlu0 %2955
      %2957 = vrot.lane.b32.xlu0 %v2592, 17
      %v2958 = vpop.permute.xlu0 %2957
      %2959 = vrot.lane.b32.xlu0 %v2584, 17
      %v2960 = vpop.permute.xlu0 %2959
      %2961 = vrot.lane.b32.xlu0 %v2617, 17
      %v2962 = vpop.permute.xlu0 %2961
      %2963 = vrot.lane.b32.xlu0 %v2618, 17
      %v2964 = vpop.permute.xlu0 %2963
      %2965 = vrot.lane.b32.xlu0 %v2604, 17
      %v2966 = vpop.permute.xlu0 %2965
      %2967 = vrot.lane.b32.xlu0 %v2619, 17
      %v2968 = vpop.permute.xlu0 %2967
      %2969 = vrot.lane.b32.xlu0 %v2620, 17
      %v2970 = vpop.permute.xlu0 %2969
      %2971 = vrot.lane.b32.xlu0 %v2608, 17
      %v2972 = vpop.permute.xlu0 %2971
      %2973 = vrot.lane.b32.xlu0 %v2621, 17
      %v2974 = vpop.permute.xlu0 %2973
      %2975 = vrot.lane.b32.xlu0 %v2622, 17
      %v2976 = vpop.permute.xlu0 %2975
      %2977 = vrot.lane.b32.xlu0 %v2612, 17
      %v2978 = vpop.permute.xlu0 %2977
      %2979 = vrot.lane.b32.xlu0 %v2623, 17
      %v2980 = vpop.permute.xlu0 %2979
      %2981 = vrot.lane.b32.xlu0 %v2624, 17
      %v2982 = vpop.permute.xlu0 %2981
      %2983 = vrot.lane.b32.xlu0 %v2616, 17
      %v2984 = vpop.permute.xlu0 %2983
      %2985 = vrot.lane.b32.xlu0 %v2626, 17
      %v2986 = vpop.permute.xlu0 %2985
      %2987 = vrot.lane.b32.xlu0 %v2641, 17
      %v2988 = vpop.permute.xlu0 %2987
      %2989 = vrot.lane.b32.xlu0 %v2628, 17
      %v2990 = vpop.permute.xlu0 %2989
      %2991 = vrot.lane.b32.xlu0 %v2630, 17
      %v2992 = vpop.permute.xlu0 %2991
      %2993 = vrot.lane.b32.xlu0 %v2642, 17
      %v2994 = vpop.permute.xlu0 %2993
      %2995 = vrot.lane.b32.xlu0 %v2632, 17
      %v2996 = vpop.permute.xlu0 %2995
      %2997 = vrot.lane.b32.xlu0 %v2634, 17
      %v2998 = vpop.permute.xlu0 %2997
      %2999 = vrot.lane.b32.xlu0 %v2643, 17
      %v3000 = vpop.permute.xlu0 %2999
      %3001 = vrot.lane.b32.xlu0 %v2636, 17
      %v3002 = vpop.permute.xlu0 %3001
      %3003 = vrot.lane.b32.xlu0 %v2638, 17
      %v3004 = vpop.permute.xlu0 %3003
      %3005 = vrot.lane.b32.xlu0 %v2644, 17
      %v3006 = vpop.permute.xlu0 %3005
      %3007 = vrot.lane.b32.xlu0 %v2640, 17
      %v3008 = vpop.permute.xlu0 %3007
      %3009 = vrot.lane.b32.xlu0 %v2654, 17
      %v3010 = vpop.permute.xlu0 %3009
      %3011 = vrot.lane.b32.xlu0 %v2669, 17
      %v3012 = vpop.permute.xlu0 %3011
      %3013 = vrot.lane.b32.xlu0 %v2670, 17
      %v3014 = vpop.permute.xlu0 %3013
      %3015 = vrot.lane.b32.xlu0 %v2658, 17
      %v3016 = vpop.permute.xlu0 %3015
      %3017 = vrot.lane.b32.xlu0 %v2671, 17
      %v3018 = vpop.permute.xlu0 %3017
      %3019 = vrot.lane.b32.xlu0 %v2672, 17
      %v3020 = vpop.permute.xlu0 %3019
      %3021 = vrot.lane.b32.xlu0 %v2662, 17
      %v3022 = vpop.permute.xlu0 %3021
      %3023 = vrot.lane.b32.xlu0 %v2673, 17
      %v3024 = vpop.permute.xlu0 %3023
      %3025 = vrot.lane.b32.xlu0 %v2674, 17
      %v3026 = vpop.permute.xlu0 %3025
      %3027 = vrot.lane.b32.xlu0 %v2666, 17
      %v3028 = vpop.permute.xlu0 %3027
      %3029 = vrot.lane.b32.xlu0 %v2675, 17
      %v3030 = vpop.permute.xlu0 %3029
      %3031 = vrot.lane.b32.xlu0 %v2676, 17
      %v3032 = vpop.permute.xlu0 %3031
      %3033 = vrot.lane.b32.xlu0 %v2686, 17
      %v3034 = vpop.permute.xlu0 %3033
      %3035 = vrot.lane.b32.xlu0 %v2701, 17
      %v3036 = vpop.permute.xlu0 %3035
      %3037 = vrot.lane.b32.xlu0 %v2702, 17
      %v3038 = vpop.permute.xlu0 %3037
      %3039 = vrot.lane.b32.xlu0 %v2690, 17
      %v3040 = vpop.permute.xlu0 %3039
      %3041 = vrot.lane.b32.xlu0 %v2703, 17
      %v3042 = vpop.permute.xlu0 %3041
      %3043 = vrot.lane.b32.xlu0 %v2704, 17
      %v3044 = vpop.permute.xlu0 %3043
      %3045 = vrot.lane.b32.xlu0 %v2694, 17
      %v3046 = vpop.permute.xlu0 %3045
      %3047 = vrot.lane.b32.xlu0 %v2705, 17
      %v3048 = vpop.permute.xlu0 %3047
      %3049 = vrot.lane.b32.xlu0 %v2706, 17
      %v3050 = vpop.permute.xlu0 %3049
      %3051 = vrot.lane.b32.xlu0 %v2698, 17
      %v3052 = vpop.permute.xlu0 %3051
      %3053 = vrot.lane.b32.xlu0 %v2707, 17
      %v3054 = vpop.permute.xlu0 %3053
      %3055 = vrot.lane.b32.xlu0 %v2708, 17
      %v3056 = vpop.permute.xlu0 %3055
      %3057 = vrot.lane.b32.xlu0 %v2710, 17
      %v3058 = vpop.permute.xlu0 %3057
      %3059 = vrot.lane.b32.xlu0 %v2725, 17
      %v3060 = vpop.permute.xlu0 %3059
      %3061 = vrot.lane.b32.xlu0 %v2726, 17
      %v3062 = vpop.permute.xlu0 %3061
      %3063 = vrot.lane.b32.xlu0 %v2714, 17
      %v3064 = vpop.permute.xlu0 %3063
      %3065 = vrot.lane.b32.xlu0 %v2727, 17
      %v3066 = vpop.permute.xlu0 %3065
      %3067 = vrot.lane.b32.xlu0 %v2728, 17
      %v3068 = vpop.permute.xlu0 %3067
      %3069 = vrot.lane.b32.xlu0 %v2718, 17
      %v3070 = vpop.permute.xlu0 %3069
      %3071 = vrot.lane.b32.xlu0 %v2729, 17
      %v3072 = vpop.permute.xlu0 %3071
      %3073 = vrot.lane.b32.xlu0 %v2730, 17
      %v3074 = vpop.permute.xlu0 %3073
      %3075 = vrot.lane.b32.xlu0 %v2722, 17
      %v3076 = vpop.permute.xlu0 %3075
      %3077 = vrot.lane.b32.xlu0 %v2731, 17
      %v3078 = vpop.permute.xlu0 %3077
      %3079 = vrot.lane.b32.xlu0 %v2732, 17
      %v3080 = vpop.permute.xlu0 %3079
      %3081 = vrot.lane.b32.xlu0 %v2742, 17
      %v3082 = vpop.permute.xlu0 %3081
      %3083 = vrot.lane.b32.xlu0 %v2757, 17
      %v3084 = vpop.permute.xlu0 %3083
      %3085 = vrot.lane.b32.xlu0 %v2758, 17
      %v3086 = vpop.permute.xlu0 %3085
      %3087 = vrot.lane.b32.xlu0 %v2746, 17
      %v3088 = vpop.permute.xlu0 %3087
      %3089 = vrot.lane.b32.xlu0 %v2759, 17
      %v3090 = vpop.permute.xlu0 %3089
      %3091 = vrot.lane.b32.xlu0 %v2760, 17
      %v3092 = vpop.permute.xlu0 %3091
      %3093 = vrot.lane.b32.xlu0 %v2750, 17
      %v3094 = vpop.permute.xlu0 %3093
      %3095 = vrot.lane.b32.xlu0 %v2761, 17
      %v3096 = vpop.permute.xlu0 %3095
      %3097 = vrot.lane.b32.xlu0 %v2762, 17
      %v3098 = vpop.permute.xlu0 %3097
      %3099 = vrot.lane.b32.xlu0 %v2754, 17
      %v3100 = vpop.permute.xlu0 %3099
      %3101 = vrot.lane.b32.xlu0 %v2763, 17
      %v3102 = vpop.permute.xlu0 %3101
      %3103 = vrot.lane.b32.xlu0 %v2764, 17
      %v3104 = vpop.permute.xlu0 %3103
      %v3105 = vsel %vm482, %v625, %v2898
      %v3106 = vsel %vm482, %v2898, %v2900
      %v3107 = vsel %vm482, %v625, %v2902
      %v3108 = vsel %vm482, %v2902, %v2904
      %v3109 = vsel %vm482, %v625, %v2906
      %v3110 = vsel %vm482, %v2906, %v2908
      %v3111 = vsel %vm482, %v625, %v2910
      %v3112 = vsel %vm482, %v2910, %v2912
      %v3113 = vsel %vm482, %v2914, %v2916
      %v3114 = vsel %vm482, %v2916, %v2918
      %v3115 = vsel %vm482, %v2920, %v2922
      %v3116 = vsel %vm482, %v2922, %v2924
      %v3117 = vsel %vm482, %v2926, %v2928
      %v3118 = vsel %vm482, %v2928, %v2930
      %v3119 = vsel %vm482, %v2932, %v2934
      %v3120 = vsel %vm482, %v2934, %v2936
      %v3121 = vsel %vm482, %v2938, %v2940
      %v3122 = vsel %vm482, %v2940, %v2942
      %v3123 = vsel %vm482, %v2944, %v2946
      %v3124 = vsel %vm482, %v2946, %v2948
      %v3125 = vsel %vm482, %v2950, %v2952
      %v3126 = vsel %vm482, %v2952, %v2954
      %v3127 = vsel %vm482, %v2956, %v2958
      %v3128 = vsel %vm482, %v2958, %v2960
      %v3129 = vsel %vm482, %v2962, %v2964
      %v3130 = vsel %vm482, %v2964, %v2966
      %v3131 = vsel %vm482, %v2968, %v2970
      %v3132 = vsel %vm482, %v2970, %v2972
      %v3133 = vsel %vm482, %v2974, %v2976
      %v3134 = vsel %vm482, %v2976, %v2978
      %v3135 = vsel %vm482, %v2980, %v2982
      %v3136 = vsel %vm482, %v2982, %v2984
      %v3137 = vsel %vm482, %v2986, %v2988
      %v3138 = vsel %vm482, %v2988, %v2990
      %v3139 = vsel %vm482, %v2992, %v2994
      %v3140 = vsel %vm482, %v2994, %v2996
      %v3141 = vsel %vm482, %v2998, %v3000
      %v3142 = vsel %vm482, %v3000, %v3002
      %v3143 = vsel %vm482, %v3004, %v3006
      %v3144 = vsel %vm482, %v3006, %v3008
      %v3145 = vsel %vm482, %v3010, %v3012
      %v3146 = vsel %vm482, %v3012, %v3014
      %v3147 = vsel %vm482, %v3016, %v3018
      %v3148 = vsel %vm482, %v3018, %v3020
      %v3149 = vsel %vm482, %v3022, %v3024
      %v3150 = vsel %vm482, %v3024, %v3026
      %v3151 = vsel %vm482, %v3028, %v3030
      %v3152 = vsel %vm482, %v3030, %v3032
      %v3153 = vsel %vm482, %v3034, %v3036
      %v3154 = vsel %vm482, %v3036, %v3038
      %v3155 = vsel %vm482, %v3040, %v3042
      %v3156 = vsel %vm482, %v3042, %v3044
      %v3157 = vsel %vm482, %v3046, %v3048
      %v3158 = vsel %vm482, %v3048, %v3050
      %v3159 = vsel %vm482, %v3052, %v3054
      %v3160 = vsel %vm482, %v3054, %v3056
      %v3161 = vsel %vm482, %v3058, %v3060
      %v3162 = vsel %vm482, %v3060, %v3062
      %v3163 = vsel %vm482, %v3064, %v3066
      %v3164 = vsel %vm482, %v3066, %v3068
      %v3165 = vsel %vm482, %v3070, %v3072
      %v3166 = vsel %vm482, %v3072, %v3074
      %v3167 = vsel %vm482, %v3076, %v3078
      %v3168 = vsel %vm482, %v3078, %v3080
      %v3169 = vsel %vm482, %v3082, %v3084
      %v3170 = vsel %vm482, %v3084, %v3086
      %v3171 = vsel %vm482, %v3088, %v3090
      %v3172 = vsel %vm482, %v3090, %v3092
      %v3173 = vsel %vm482, %v3094, %v3096
      %v3174 = vsel %vm482, %v3096, %v3098
      %v3175 = vsel %vm482, %v3100, %v3102
      %v3176 = vsel %vm482, %v3102, %v3104
      %v3250 = vsel %vm1898, %v2857, 0
      %v3253 = vsel %vm1898, %v2862, 0
      %v3256 = vsel %vm1898, %v2867, 0
      %v3259 = vsel %vm1898, %v2872, 0
      %3261 = vmatpush.bf16.msra.mxu0 %v3119
      %3262 = vmatpush.bf16.msra.mxu0 %v3117
      %3263 = vmatpush.bf16.msra.mxu0 %v3115
      %3264 = vmatpush.bf16.msra.mxu0 %v3113
      %3265 = vmatpush.bf16.msra.mxu0 %v3111
      %3266 = vmatpush.bf16.msra.mxu0 %v3109
      %3267 = vmatpush.bf16.msra.mxu0 %v3107
      %3268 = vmatpush.bf16.msra.mxu0 %v3105
      %3269 = vmatmul.bf16.gmra.mxu0 %v2853
      %v3270 = vpop.f32.mrf.mxu0
      %v3271 = vadd.f32 0.0, %v3270
      %v3272 = vpop.f32.mrf.mxu0
      %v3273 = vadd.f32 0.0, %v3272
      %3274 = vmatmul.bf16.gmra.mxu0 %v2858
      %v3275 = vpop.f32.mrf.mxu0
      %v3276 = vadd.f32 0.0, %v3275
      %v3277 = vpop.f32.mrf.mxu0
      %v3278 = vadd.f32 0.0, %v3277
      %3279 = vmatmul.bf16.gmra.mxu0 %v2863
      %v3280 = vpop.f32.mrf.mxu0
      %v3281 = vadd.f32 0.0, %v3280
      %v3282 = vpop.f32.mrf.mxu0
      %v3283 = vadd.f32 0.0, %v3282
      %3284 = vmatmul.bf16.gmra.mxu0 %v2868
      %v3285 = vpop.f32.mrf.mxu0
      %v3286 = vadd.f32 0.0, %v3285
      %v3287 = vpop.f32.mrf.mxu0
      %v3288 = vadd.f32 0.0, %v3287
      %3289 = vdwg.mxu0
      %3290 = vmatpush.bf16.msra.mxu0 %v3135
      %3291 = vmatpush.bf16.msra.mxu0 %v3133
      %3292 = vmatpush.bf16.msra.mxu0 %v3131
      %3293 = vmatpush.bf16.msra.mxu0 %v3129
      %3294 = vmatpush.bf16.msra.mxu0 %v3127
      %3295 = vmatpush.bf16.msra.mxu0 %v3125
      %3296 = vmatpush.bf16.msra.mxu0 %v3123
      %3297 = vmatpush.bf16.msra.mxu0 %v3121
      %3298 = vmatmul.bf16.gmra.mxu0 %v2854
      %v3299 = vpop.f32.mrf.mxu0
      %v3300 = vadd.f32 %v3271, %v3299
      %v3301 = vpop.f32.mrf.mxu0
      %v3302 = vadd.f32 %v3273, %v3301
      %3303 = vmatmul.bf16.gmra.mxu0 %v2859
      %v3304 = vpop.f32.mrf.mxu0
      %v3305 = vadd.f32 %v3276, %v3304
      %v3306 = vpop.f32.mrf.mxu0
      %v3307 = vadd.f32 %v3278, %v3306
      %3308 = vmatmul.bf16.gmra.mxu0 %v2864
      %v3309 = vpop.f32.mrf.mxu0
      %v3310 = vadd.f32 %v3281, %v3309
      %v3311 = vpop.f32.mrf.mxu0
      %v3312 = vadd.f32 %v3283, %v3311
      %3313 = vmatmul.bf16.gmra.mxu0 %v2869
      %v3314 = vpop.f32.mrf.mxu0
      %v3315 = vadd.f32 %v3286, %v3314
      %v3316 = vpop.f32.mrf.mxu0
      %v3317 = vadd.f32 %v3288, %v3316
      %3318 = vdwg.mxu0
      %3319 = vmatpush.bf16.msra.mxu0 %v3151
      %3320 = vmatpush.bf16.msra.mxu0 %v3149
      %3321 = vmatpush.bf16.msra.mxu0 %v3147
      %3322 = vmatpush.bf16.msra.mxu0 %v3145
      %3323 = vmatpush.bf16.msra.mxu0 %v3143
      %3324 = vmatpush.bf16.msra.mxu0 %v3141
      %3325 = vmatpush.bf16.msra.mxu0 %v3139
      %3326 = vmatpush.bf16.msra.mxu0 %v3137
      %3327 = vmatmul.bf16.gmra.mxu0 %v2855
      %v3328 = vpop.f32.mrf.mxu0
      %v3329 = vadd.f32 %v3300, %v3328
      %v3330 = vpop.f32.mrf.mxu0
      %v3331 = vadd.f32 %v3302, %v3330
      %3332 = vmatmul.bf16.gmra.mxu0 %v2860
      %v3333 = vpop.f32.mrf.mxu0
      %v3334 = vadd.f32 %v3305, %v3333
      %v3335 = vpop.f32.mrf.mxu0
      %v3336 = vadd.f32 %v3307, %v3335
      %3337 = vmatmul.bf16.gmra.mxu0 %v2865
      %v3338 = vpop.f32.mrf.mxu0
      %v3339 = vadd.f32 %v3310, %v3338
      %v3340 = vpop.f32.mrf.mxu0
      %v3341 = vadd.f32 %v3312, %v3340
      %3342 = vmatmul.bf16.gmra.mxu0 %v2870
      %v3343 = vpop.f32.mrf.mxu0
      %v3344 = vadd.f32 %v3315, %v3343
      %v3345 = vpop.f32.mrf.mxu0
      %v3346 = vadd.f32 %v3317, %v3345
      %3347 = vdwg.mxu0
      %3348 = vmatpush.bf16.msra.mxu0 %v3167
      %3349 = vmatpush.bf16.msra.mxu0 %v3165
      %3350 = vmatpush.bf16.msra.mxu0 %v3163
      %3351 = vmatpush.bf16.msra.mxu0 %v3161
      %3352 = vmatpush.bf16.msra.mxu0 %v3159
      %3353 = vmatpush.bf16.msra.mxu0 %v3157
      %3354 = vmatpush.bf16.msra.mxu0 %v3155
      %3355 = vmatpush.bf16.msra.mxu0 %v3153
      %3356 = vmatmul.bf16.gmra.mxu0 %v2856
      %v3357 = vpop.f32.mrf.mxu0
      %v3358 = vadd.f32 %v3329, %v3357
      %v3359 = vpop.f32.mrf.mxu0
      %v3360 = vadd.f32 %v3331, %v3359
      %3361 = vmatmul.bf16.gmra.mxu0 %v2861
      %v3362 = vpop.f32.mrf.mxu0
      %v3363 = vadd.f32 %v3334, %v3362
      %v3364 = vpop.f32.mrf.mxu0
      %v3365 = vadd.f32 %v3336, %v3364
      %3366 = vmatmul.bf16.gmra.mxu0 %v2866
      %v3367 = vpop.f32.mrf.mxu0
      %v3368 = vadd.f32 %v3339, %v3367
      %v3369 = vpop.f32.mrf.mxu0
      %v3370 = vadd.f32 %v3341, %v3369
      %3371 = vmatmul.bf16.gmra.mxu0 %v2871
      %v3372 = vpop.f32.mrf.mxu0
      %v3373 = vadd.f32 %v3344, %v3372
      %v3374 = vpop.f32.mrf.mxu0
      %v3375 = vadd.f32 %v3346, %v3374
      %3376 = vdwg.mxu0
      %3377 = vmatpush.bf16.msra.mxu0 0
      %3378 = vmatpush.bf16.msra.mxu0 0
      %3379 = vmatpush.bf16.msra.mxu0 0
      %3380 = vmatpush.bf16.msra.mxu0 0
      %3381 = vmatpush.bf16.msra.mxu0 %v3175
      %3382 = vmatpush.bf16.msra.mxu0 %v3173
      %3383 = vmatpush.bf16.msra.mxu0 %v3171
      %3384 = vmatpush.bf16.msra.mxu0 %v3169
      %3385 = vmatmul.bf16.gmra.mxu0 %v3250
      %v3386 = vpop.f32.mrf.mxu0
      %v3387 = vadd.f32 %v3358, %v3386
      %v3388 = vpop.f32.mrf.mxu0
      %v3389 = vadd.f32 %v3360, %v3388
      %3390 = vmatmul.bf16.gmra.mxu0 %v3253
      %v3391 = vpop.f32.mrf.mxu0
      %v3392 = vadd.f32 %v3363, %v3391
      %v3393 = vpop.f32.mrf.mxu0
      %v3394 = vadd.f32 %v3365, %v3393
      %3395 = vmatmul.bf16.gmra.mxu0 %v3256
      %v3396 = vpop.f32.mrf.mxu0
      %v3397 = vadd.f32 %v3368, %v3396
      %v3398 = vpop.f32.mrf.mxu0
      %v3399 = vadd.f32 %v3370, %v3398
      %3400 = vmatmul.bf16.gmra.mxu0 %v3259
      %v3401 = vpop.f32.mrf.mxu0
      %v3402 = vadd.f32 %v3373, %v3401
      %v3403 = vpop.f32.mrf.mxu0
      %v3404 = vadd.f32 %v3375, %v3403
      %3405 = vdwg.mxu0
      %3406 = vmatpush.bf16.msra.mxu0 %v3120
      %3407 = vmatpush.bf16.msra.mxu0 %v3118
      %3408 = vmatpush.bf16.msra.mxu0 %v3116
      %3409 = vmatpush.bf16.msra.mxu0 %v3114
      %3410 = vmatpush.bf16.msra.mxu0 %v3112
      %3411 = vmatpush.bf16.msra.mxu0 %v3110
      %3412 = vmatpush.bf16.msra.mxu0 %v3108
      %3413 = vmatpush.bf16.msra.mxu0 %v3106
      %3414 = vmatmul.bf16.gmra.mxu0 %v2853
      %v3415 = vpop.f32.mrf.mxu0
      %v3416 = vadd.f32 0.0, %v3415
      %v3417 = vpop.f32.mrf.mxu0
      %v3418 = vadd.f32 0.0, %v3417
      %3419 = vmatmul.bf16.gmra.mxu0 %v2858
      %v3420 = vpop.f32.mrf.mxu0
      %v3421 = vadd.f32 0.0, %v3420
      %v3422 = vpop.f32.mrf.mxu0
      %v3423 = vadd.f32 0.0, %v3422
      %3424 = vmatmul.bf16.gmra.mxu0 %v2863
      %v3425 = vpop.f32.mrf.mxu0
      %v3426 = vadd.f32 0.0, %v3425
      %v3427 = vpop.f32.mrf.mxu0
      %v3428 = vadd.f32 0.0, %v3427
      %3429 = vmatmul.bf16.gmra.mxu0 %v2868
      %v3430 = vpop.f32.mrf.mxu0
      %v3431 = vadd.f32 0.0, %v3430
      %v3432 = vpop.f32.mrf.mxu0
      %v3433 = vadd.f32 0.0, %v3432
      %3434 = vdwg.mxu0
      %3435 = vmatpush.bf16.msra.mxu0 %v3136
      %3436 = vmatpush.bf16.msra.mxu0 %v3134
      %3437 = vmatpush.bf16.msra.mxu0 %v3132
      %3438 = vmatpush.bf16.msra.mxu0 %v3130
      %3439 = vmatpush.bf16.msra.mxu0 %v3128
      %3440 = vmatpush.bf16.msra.mxu0 %v3126
      %3441 = vmatpush.bf16.msra.mxu0 %v3124
      %3442 = vmatpush.bf16.msra.mxu0 %v3122
      %3443 = vmatmul.bf16.gmra.mxu0 %v2854
      %v3444 = vpop.f32.mrf.mxu0
      %v3445 = vadd.f32 %v3416, %v3444
      %v3446 = vpop.f32.mrf.mxu0
      %v3447 = vadd.f32 %v3418, %v3446
      %3448 = vmatmul.bf16.gmra.mxu0 %v2859
      %v3449 = vpop.f32.mrf.mxu0
      %v3450 = vadd.f32 %v3421, %v3449
      %v3451 = vpop.f32.mrf.mxu0
      %v3452 = vadd.f32 %v3423, %v3451
      %3453 = vmatmul.bf16.gmra.mxu0 %v2864
      %v3454 = vpop.f32.mrf.mxu0
      %v3455 = vadd.f32 %v3426, %v3454
      %v3456 = vpop.f32.mrf.mxu0
      %v3457 = vadd.f32 %v3428, %v3456
      %3458 = vmatmul.bf16.gmra.mxu0 %v2869
      %v3459 = vpop.f32.mrf.mxu0
      %v3460 = vadd.f32 %v3431, %v3459
      %v3461 = vpop.f32.mrf.mxu0
      %v3462 = vadd.f32 %v3433, %v3461
      %3463 = vdwg.mxu0
      %3464 = vmatpush.bf16.msra.mxu0 %v3152
      %3465 = vmatpush.bf16.msra.mxu0 %v3150
      %3466 = vmatpush.bf16.msra.mxu0 %v3148
      %3467 = vmatpush.bf16.msra.mxu0 %v3146
      %3468 = vmatpush.bf16.msra.mxu0 %v3144
      %3469 = vmatpush.bf16.msra.mxu0 %v3142
      %3470 = vmatpush.bf16.msra.mxu0 %v3140
      %3471 = vmatpush.bf16.msra.mxu0 %v3138
      %3472 = vmatmul.bf16.gmra.mxu0 %v2855
      %v3473 = vpop.f32.mrf.mxu0
      %v3474 = vadd.f32 %v3445, %v3473
      %v3475 = vpop.f32.mrf.mxu0
      %v3476 = vadd.f32 %v3447, %v3475
      %3477 = vmatmul.bf16.gmra.mxu0 %v2860
      %v3478 = vpop.f32.mrf.mxu0
      %v3479 = vadd.f32 %v3450, %v3478
      %v3480 = vpop.f32.mrf.mxu0
      %v3481 = vadd.f32 %v3452, %v3480
      %3482 = vmatmul.bf16.gmra.mxu0 %v2865
      %v3483 = vpop.f32.mrf.mxu0
      %v3484 = vadd.f32 %v3455, %v3483
      %v3485 = vpop.f32.mrf.mxu0
      %v3486 = vadd.f32 %v3457, %v3485
      %3487 = vmatmul.bf16.gmra.mxu0 %v2870
      %v3488 = vpop.f32.mrf.mxu0
      %v3489 = vadd.f32 %v3460, %v3488
      %v3490 = vpop.f32.mrf.mxu0
      %v3491 = vadd.f32 %v3462, %v3490
      %3492 = vdwg.mxu0
      %3493 = vmatpush.bf16.msra.mxu0 %v3168
      %3494 = vmatpush.bf16.msra.mxu0 %v3166
      %3495 = vmatpush.bf16.msra.mxu0 %v3164
      %3496 = vmatpush.bf16.msra.mxu0 %v3162
      %3497 = vmatpush.bf16.msra.mxu0 %v3160
      %3498 = vmatpush.bf16.msra.mxu0 %v3158
      %3499 = vmatpush.bf16.msra.mxu0 %v3156
      %3500 = vmatpush.bf16.msra.mxu0 %v3154
      %3501 = vmatmul.bf16.gmra.mxu0 %v2856
      %v3502 = vpop.f32.mrf.mxu0
      %v3503 = vadd.f32 %v3474, %v3502
      %v3504 = vpop.f32.mrf.mxu0
      %v3505 = vadd.f32 %v3476, %v3504
      %3506 = vmatmul.bf16.gmra.mxu0 %v2861
      %v3507 = vpop.f32.mrf.mxu0
      %v3508 = vadd.f32 %v3479, %v3507
      %v3509 = vpop.f32.mrf.mxu0
      %v3510 = vadd.f32 %v3481, %v3509
      %3511 = vmatmul.bf16.gmra.mxu0 %v2866
      %v3512 = vpop.f32.mrf.mxu0
      %v3513 = vadd.f32 %v3484, %v3512
      %v3514 = vpop.f32.mrf.mxu0
      %v3515 = vadd.f32 %v3486, %v3514
      %3516 = vmatmul.bf16.gmra.mxu0 %v2871
      %v3517 = vpop.f32.mrf.mxu0
      %v3518 = vadd.f32 %v3489, %v3517
      %v3519 = vpop.f32.mrf.mxu0
      %v3520 = vadd.f32 %v3491, %v3519
      %3521 = vdwg.mxu0
      %3522 = vmatpush.bf16.msra.mxu0 0
      %3523 = vmatpush.bf16.msra.mxu0 0
      %3524 = vmatpush.bf16.msra.mxu0 0
      %3525 = vmatpush.bf16.msra.mxu0 0
      %3526 = vmatpush.bf16.msra.mxu0 %v3176
      %3527 = vmatpush.bf16.msra.mxu0 %v3174
      %3528 = vmatpush.bf16.msra.mxu0 %v3172
      %3529 = vmatpush.bf16.msra.mxu0 %v3170
      %3530 = vmatmul.bf16.gmra.mxu0 %v3250
      %v3531 = vpop.f32.mrf.mxu0
      %v3532 = vadd.f32 %v3503, %v3531
      %v3533 = vpop.f32.mrf.mxu0
      %v3534 = vadd.f32 %v3505, %v3533
      %3535 = vmatmul.bf16.gmra.mxu0 %v3253
      %v3536 = vpop.f32.mrf.mxu0
      %v3537 = vadd.f32 %v3508, %v3536
      %v3538 = vpop.f32.mrf.mxu0
      %v3539 = vadd.f32 %v3510, %v3538
      %3540 = vmatmul.bf16.gmra.mxu0 %v3256
      %v3541 = vpop.f32.mrf.mxu0
      %v3542 = vadd.f32 %v3513, %v3541
      %v3543 = vpop.f32.mrf.mxu0
      %v3544 = vadd.f32 %v3515, %v3543
      %3545 = vmatmul.bf16.gmra.mxu0 %v3259
      %v3546 = vpop.f32.mrf.mxu0
      %v3547 = vadd.f32 %v3518, %v3546
      %v3548 = vpop.f32.mrf.mxu0
      %v3549 = vadd.f32 %v3520, %v3548
      %3550 = vdwg.mxu0
      %v3551 = vadd.f32 %v3387, %v3532
      %3552 = vadd.xlane.f32.xlu0 %v3551
      %v3553 = vpop.xlane.xlu0 %3552
      %v3554 = vadd.f32 %v3389, %v3534
      %3555 = vadd.xlane.f32.xlu0 %v3554
      %v3556 = vpop.xlane.xlu0 %3555
      %v3557 = vadd.f32 %v3392, %v3537
      %3558 = vadd.xlane.f32.xlu0 %v3557
      %v3559 = vpop.xlane.xlu0 %3558
      %v3560 = vadd.f32 %v3394, %v3539
      %3561 = vadd.xlane.f32.xlu0 %v3560
      %v3562 = vpop.xlane.xlu0 %3561
      %v3563 = vadd.f32 %v3397, %v3542
      %3564 = vadd.xlane.f32.xlu0 %v3563
      %v3565 = vpop.xlane.xlu0 %3564
      %v3566 = vadd.f32 %v3399, %v3544
      %3567 = vadd.xlane.f32.xlu0 %v3566
      %v3568 = vpop.xlane.xlu0 %3567
      %v3569 = vadd.f32 %v3402, %v3547
      %3570 = vadd.xlane.f32.xlu0 %v3569
      %v3571 = vpop.xlane.xlu0 %3570
      %v3572 = vadd.f32 %v3404, %v3549
      %3573 = vadd.xlane.f32.xlu0 %v3572
      %v3574 = vpop.xlane.xlu0 %3573
      %v3575 = vmul.f32 %v3553, %v873
      %v3576 = vmul.f32 %v3556, %v873
      %v3577 = vmul.f32 %v3559, %v873
      %v3578 = vmul.f32 %v3562, %v873
      %v3579 = vmul.f32 %v3565, %v873
      %v3580 = vmul.f32 %v3568, %v873
      %v3581 = vmul.f32 %v3571, %v873
      %v3582 = vmul.f32 %v3574, %v873
      %v3583 = vmul.f32 %v3387, %v3387
      %v3584 = vmul.f32 %v3532, %v3532
      %v3585 = vmul.f32 %v3389, %v3389
      %v3586 = vmul.f32 %v3534, %v3534
      %v3587 = vmul.f32 %v3392, %v3392
      %v3588 = vmul.f32 %v3537, %v3537
      %v3589 = vmul.f32 %v3394, %v3394
      %v3590 = vmul.f32 %v3539, %v3539
      %v3591 = vmul.f32 %v3397, %v3397
      %v3592 = vmul.f32 %v3542, %v3542
      %v3593 = vmul.f32 %v3399, %v3399
      %v3594 = vmul.f32 %v3544, %v3544
      %v3595 = vmul.f32 %v3402, %v3402
      %v3596 = vmul.f32 %v3547, %v3547
      %v3597 = vmul.f32 %v3404, %v3404
      %v3598 = vmul.f32 %v3549, %v3549
      %v3599 = vadd.f32 %v3583, %v3584
      %3600 = vadd.xlane.f32.xlu0 %v3599
      %v3601 = vpop.xlane.xlu0 %3600
      %v3602 = vadd.f32 %v3585, %v3586
      %3603 = vadd.xlane.f32.xlu0 %v3602
      %v3604 = vpop.xlane.xlu0 %3603
      %v3605 = vadd.f32 %v3587, %v3588
      %3606 = vadd.xlane.f32.xlu0 %v3605
      %v3607 = vpop.xlane.xlu0 %3606
      %v3608 = vadd.f32 %v3589, %v3590
      %3609 = vadd.xlane.f32.xlu0 %v3608
      %v3610 = vpop.xlane.xlu0 %3609
      %v3611 = vadd.f32 %v3591, %v3592
      %3612 = vadd.xlane.f32.xlu0 %v3611
      %v3613 = vpop.xlane.xlu0 %3612
      %v3614 = vadd.f32 %v3593, %v3594
      %3615 = vadd.xlane.f32.xlu0 %v3614
      %v3616 = vpop.xlane.xlu0 %3615
      %v3617 = vadd.f32 %v3595, %v3596
      %3618 = vadd.xlane.f32.xlu0 %v3617
      %v3619 = vpop.xlane.xlu0 %3618
      %v3620 = vadd.f32 %v3597, %v3598
      %3621 = vadd.xlane.f32.xlu0 %v3620
      %v3622 = vpop.xlane.xlu0 %3621
      %v3623 = vmul.f32 %v3601, %v873
      %v3624 = vmul.f32 %v3604, %v873
      %v3625 = vmul.f32 %v3607, %v873
      %v3626 = vmul.f32 %v3610, %v873
      %v3627 = vmul.f32 %v3613, %v873
      %v3628 = vmul.f32 %v3616, %v873
      %v3629 = vmul.f32 %v3619, %v873
      %v3630 = vmul.f32 %v3622, %v873
      %v3631 = vmul.f32 %v3575, %v3575
      %v3632 = vmul.f32 %v3576, %v3576
      %v3633 = vmul.f32 %v3577, %v3577
      %v3634 = vmul.f32 %v3578, %v3578
      %v3635 = vmul.f32 %v3579, %v3579
      %v3636 = vmul.f32 %v3580, %v3580
      %v3637 = vmul.f32 %v3581, %v3581
      %v3638 = vmul.f32 %v3582, %v3582
      %v3639 = vsub.f32 %v3623, %v3631
      %v3640 = vsub.f32 %v3624, %v3632
      %v3641 = vsub.f32 %v3625, %v3633
      %v3642 = vsub.f32 %v3626, %v3634
      %v3643 = vsub.f32 %v3627, %v3635
      %v3644 = vsub.f32 %v3628, %v3636
      %v3645 = vsub.f32 %v3629, %v3637
      %v3646 = vsub.f32 %v3630, %v3638
      %v3647 = vmax.f32 %v3639, 0.0
      %v3648 = vmax.f32 %v3640, 0.0
      %v3649 = vmax.f32 %v3641, 0.0
      %v3650 = vmax.f32 %v3642, 0.0
      %v3651 = vmax.f32 %v3643, 0.0
      %v3652 = vmax.f32 %v3644, 0.0
      %v3653 = vmax.f32 %v3645, 0.0
      %v3654 = vmax.f32 %v3646, 0.0
      %v3655 = vsub.f32 %v3387, %v3575
      %v3656 = vsub.f32 %v3532, %v3575
      %v3657 = vsub.f32 %v3389, %v3576
      %v3658 = vsub.f32 %v3534, %v3576
      %v3659 = vsub.f32 %v3392, %v3577
      %v3660 = vsub.f32 %v3537, %v3577
      %v3661 = vsub.f32 %v3394, %v3578
      %v3662 = vsub.f32 %v3539, %v3578
      %v3663 = vsub.f32 %v3397, %v3579
      %v3664 = vsub.f32 %v3542, %v3579
      %v3665 = vsub.f32 %v3399, %v3580
      %v3666 = vsub.f32 %v3544, %v3580
      %v3667 = vsub.f32 %v3402, %v3581
      %v3668 = vsub.f32 %v3547, %v3581
      %v3669 = vsub.f32 %v3404, %v3582
      %v3670 = vsub.f32 %v3549, %v3582
      %v3671 = vadd.f32 %v3647, 1e-05
      %v3672 = vadd.f32 %v3648, 1e-05
      %v3673 = vadd.f32 %v3649, 1e-05
      %v3674 = vadd.f32 %v3650, 1e-05
      %v3675 = vadd.f32 %v3651, 1e-05
      %v3676 = vadd.f32 %v3652, 1e-05
      %v3677 = vadd.f32 %v3653, 1e-05
      %v3678 = vadd.f32 %v3654, 1e-05
      %v3679 = vrsqrt.pop %v3671
      %v3680 = vmul.f32 %v3679, %v3671
      %v3681 = vmul.f32 %v3680, %v3679
      %v3682 = vmul.f32 0.5, %v3681
      %v3683 = vsub.f32 1.5, %v3682
      %v3684 = vmul.f32 %v3679, %v3683
      %vm3685 = vweird.f32 %v3671
      %vm3686 = vweird.f32 %v3679
      %vm3687 = vmor %vm3685, %vm3686
      %v3688 = vsel %vm3687, %v3679, %v3684
      %v3689 = vrsqrt.pop %v3672
      %v3690 = vmul.f32 %v3689, %v3672
      %v3691 = vmul.f32 %v3690, %v3689
      %v3692 = vmul.f32 0.5, %v3691
      %v3693 = vsub.f32 1.5, %v3692
      %v3694 = vmul.f32 %v3689, %v3693
      %vm3695 = vweird.f32 %v3672
      %vm3696 = vweird.f32 %v3689
      %vm3697 = vmor %vm3695, %vm3696
      %v3698 = vsel %vm3697, %v3689, %v3694
      %v3699 = vrsqrt.pop %v3673
      %v3700 = vmul.f32 %v3699, %v3673
      %v3701 = vmul.f32 %v3700, %v3699
      %v3702 = vmul.f32 0.5, %v3701
      %v3703 = vsub.f32 1.5, %v3702
      %v3704 = vmul.f32 %v3699, %v3703
      %vm3705 = vweird.f32 %v3673
      %vm3706 = vweird.f32 %v3699
      %vm3707 = vmor %vm3705, %vm3706
      %v3708 = vsel %vm3707, %v3699, %v3704
      %v3709 = vrsqrt.pop %v3674
      %v3710 = vmul.f32 %v3709, %v3674
      %v3711 = vmul.f32 %v3710, %v3709
      %v3712 = vmul.f32 0.5, %v3711
      %v3713 = vsub.f32 1.5, %v3712
      %v3714 = vmul.f32 %v3709, %v3713
      %vm3715 = vweird.f32 %v3674
      %vm3716 = vweird.f32 %v3709
      %vm3717 = vmor %vm3715, %vm3716
      %v3718 = vsel %vm3717, %v3709, %v3714
      %v3719 = vrsqrt.pop %v3675
      %v3720 = vmul.f32 %v3719, %v3675
      %v3721 = vmul.f32 %v3720, %v3719
      %v3722 = vmul.f32 0.5, %v3721
      %v3723 = vsub.f32 1.5, %v3722
      %v3724 = vmul.f32 %v3719, %v3723
      %vm3725 = vweird.f32 %v3675
      %vm3726 = vweird.f32 %v3719
      %vm3727 = vmor %vm3725, %vm3726
      %v3728 = vsel %vm3727, %v3719, %v3724
      %v3729 = vrsqrt.pop %v3676
      %v3730 = vmul.f32 %v3729, %v3676
      %v3731 = vmul.f32 %v3730, %v3729
      %v3732 = vmul.f32 0.5, %v3731
      %v3733 = vsub.f32 1.5, %v3732
      %v3734 = vmul.f32 %v3729, %v3733
      %vm3735 = vweird.f32 %v3676
      %vm3736 = vweird.f32 %v3729
      %vm3737 = vmor %vm3735, %vm3736
      %v3738 = vsel %vm3737, %v3729, %v3734
      %v3739 = vrsqrt.pop %v3677
      %v3740 = vmul.f32 %v3739, %v3677
      %v3741 = vmul.f32 %v3740, %v3739
      %v3742 = vmul.f32 0.5, %v3741
      %v3743 = vsub.f32 1.5, %v3742
      %v3744 = vmul.f32 %v3739, %v3743
      %vm3745 = vweird.f32 %v3677
      %vm3746 = vweird.f32 %v3739
      %vm3747 = vmor %vm3745, %vm3746
      %v3748 = vsel %vm3747, %v3739, %v3744
      %v3749 = vrsqrt.pop %v3678
      %v3750 = vmul.f32 %v3749, %v3678
      %v3751 = vmul.f32 %v3750, %v3749
      %v3752 = vmul.f32 0.5, %v3751
      %v3753 = vsub.f32 1.5, %v3752
      %v3754 = vmul.f32 %v3749, %v3753
      %vm3755 = vweird.f32 %v3678
      %vm3756 = vweird.f32 %v3749
      %vm3757 = vmor %vm3755, %vm3756
      %v3758 = vsel %vm3757, %v3749, %v3754
      %v3759 = vmul.f32 %v3655, %v3688
      %v3760 = vmul.f32 %v3656, %v3688
      %v3761 = vmul.f32 %v3657, %v3698
      %v3762 = vmul.f32 %v3658, %v3698
      %v3763 = vmul.f32 %v3659, %v3708
      %v3764 = vmul.f32 %v3660, %v3708
      %v3765 = vmul.f32 %v3661, %v3718
      %v3766 = vmul.f32 %v3662, %v3718
      %v3767 = vmul.f32 %v3663, %v3728
      %v3768 = vmul.f32 %v3664, %v3728
      %v3769 = vmul.f32 %v3665, %v3738
      %v3770 = vmul.f32 %v3666, %v3738
      %v3771 = vmul.f32 %v3667, %v3748
      %v3772 = vmul.f32 %v3668, %v3748
      %v3773 = vmul.f32 %v3669, %v3758
      %v3774 = vmul.f32 %v3670, %v3758
      %v3775 = vmax.f32 %v3759, 0.0
      %v3776 = vmax.f32 %v3760, 0.0
      %v3777 = vmax.f32 %v3761, 0.0
      %v3778 = vmax.f32 %v3762, 0.0
      %v3779 = vmax.f32 %v3763, 0.0
      %v3780 = vmax.f32 %v3764, 0.0
      %v3781 = vmax.f32 %v3765, 0.0
      %v3782 = vmax.f32 %v3766, 0.0
      %v3783 = vmax.f32 %v3767, 0.0
      %v3784 = vmax.f32 %v3768, 0.0
      %v3785 = vmax.f32 %v3769, 0.0
      %v3786 = vmax.f32 %v3770, 0.0
      %v3787 = vmax.f32 %v3771, 0.0
      %v3788 = vmax.f32 %v3772, 0.0
      %v3789 = vmax.f32 %v3773, 0.0
      %v3790 = vmax.f32 %v3774, 0.0
      %v3791 = vpack.c.bf16 %v3776, %v3775
      %v3792 = vpack.c.bf16 %v3778, %v3777
      %v3793 = vpack.c.bf16 %v3780, %v3779
      %v3794 = vpack.c.bf16 %v3782, %v3781
      %v3795 = vpack.c.bf16 %v3784, %v3783
      %v3796 = vpack.c.bf16 %v3786, %v3785
      %v3797 = vpack.c.bf16 %v3788, %v3787
      %v3798 = vpack.c.bf16 %v3790, %v3789
      %v3807 = vunpack.c.l.b16 %v3791
      %v3808 = vunpack.c.h.b16 %v3791
      %v3809 = vunpack.c.l.b16 %v3792
      %v3810 = vunpack.c.h.b16 %v3792
      %v3811 = vunpack.c.l.b16 %v3793
      %v3812 = vunpack.c.h.b16 %v3793
      %v3813 = vunpack.c.l.b16 %v3794
      %v3814 = vunpack.c.h.b16 %v3794
      %v3815 = vunpack.c.l.b16 %v3795
      %v3816 = vunpack.c.h.b16 %v3795
      %v3817 = vunpack.c.l.b16 %v3796
      %v3818 = vunpack.c.h.b16 %v3796
      %v3819 = vunpack.c.l.b16 %v3797
      %v3820 = vunpack.c.h.b16 %v3797
      %v3821 = vunpack.c.l.b16 %v3798
      %v3822 = vunpack.c.h.b16 %v3798
      %v3823 = vpack.c.b16 %v3809, %v3807
      %v3824 = vpack.c.b16 %v3810, %v3808
      %v3825 = vpack.c.b16 %v3813, %v3811
      %v3826 = vpack.c.b16 %v3814, %v3812
      %v3827 = vpack.c.b16 %v3817, %v3815
      %v3828 = vpack.c.b16 %v3818, %v3816
      %v3829 = vpack.c.b16 %v3821, %v3819
      %v3830 = vpack.c.b16 %v3822, %v3820
      %v3839 = vsel %vm372, %v3823, 0
      %v3840 = vsel %vm379, %v3824, 0
      %v3841 = vsel %vm372, %v3825, 0
      %v3842 = vsel %vm379, %v3826, 0
      %v3843 = vsel %vm372, %v3827, 0
      %v3844 = vsel %vm379, %v3828, 0
      %v3845 = vsel %vm372, %v3829, 0
      %v3846 = vsel %vm379, %v3830, 0
      %v3847 = vsel %vm402, %v3823, 0
      %v3848 = vsel %vm409, %v3824, 0
      %v3849 = vsel %vm402, %v3825, 0
      %v3850 = vsel %vm409, %v3826, 0
      %v3851 = vsel %vm402, %v3827, 0
      %v3852 = vsel %vm409, %v3828, 0
      %v3853 = vsel %vm402, %v3829, 0
      %v3854 = vsel %vm409, %v3830, 0
      %v3855 = vsel %vm424, %v3823, 0
      %v3856 = vsel %vm431, %v3824, 0
      %v3857 = vsel %vm424, %v3825, 0
      %v3858 = vsel %vm431, %v3826, 0
      %v3859 = vsel %vm424, %v3827, 0
      %v3860 = vsel %vm431, %v3828, 0
      %v3861 = vsel %vm424, %v3829, 0
      %v3862 = vsel %vm431, %v3830, 0
      %v3863 = vsel %vm446, %v3823, 0
      %v3864 = vsel %vm453, %v3824, 0
      %v3865 = vsel %vm446, %v3825, 0
      %v3866 = vsel %vm453, %v3826, 0
      %v3867 = vsel %vm446, %v3827, 0
      %v3868 = vsel %vm453, %v3828, 0
      %v3869 = vsel %vm446, %v3829, 0
      %v3870 = vsel %vm453, %v3830, 0
      %v3871 = vsel %vm468, %v3823, 0
      %v3872 = vsel %vm475, %v3824, 0
      %v3873 = vsel %vm468, %v3825, 0
      %v3874 = vsel %vm475, %v3826, 0
      %v3875 = vsel %vm468, %v3827, 0
      %v3876 = vsel %vm475, %v3828, 0
      %v3877 = vsel %vm468, %v3829, 0
      %v3878 = vsel %vm475, %v3830, 0
      %v3879 = vsel %vm490, %v3823, 0
      %v3880 = vsel %vm497, %v3824, 0
      %v3881 = vsel %vm490, %v3825, 0
      %v3882 = vsel %vm497, %v3826, 0
      %v3883 = vsel %vm490, %v3827, 0
      %v3884 = vsel %vm497, %v3828, 0
      %v3885 = vsel %vm490, %v3829, 0
      %v3886 = vsel %vm497, %v3830, 0
      %3887 = vrot.lane.b32.xlu0 %v3823, 127
      %v3888 = vpop.permute.xlu0 %3887
      %3889 = vrot.lane.b32.xlu0 %v3824, 127
      %v3890 = vpop.permute.xlu0 %3889
      %3891 = vrot.lane.b32.xlu0 %v3825, 127
      %v3892 = vpop.permute.xlu0 %3891
      %3893 = vrot.lane.b32.xlu0 %v3826, 127
      %v3894 = vpop.permute.xlu0 %3893
      %3895 = vrot.lane.b32.xlu0 %v3827, 127
      %v3896 = vpop.permute.xlu0 %3895
      %3897 = vrot.lane.b32.xlu0 %v3828, 127
      %v3898 = vpop.permute.xlu0 %3897
      %3899 = vrot.lane.b32.xlu0 %v3829, 127
      %v3900 = vpop.permute.xlu0 %3899
      %3901 = vrot.lane.b32.xlu0 %v3830, 127
      %v3902 = vpop.permute.xlu0 %3901
      %v3903 = vsel %vm416, %v502, %v3888
      %v3904 = vsel %vm416, %v3888, %v3890
      %v3905 = vsel %vm416, %v502, %v3892
      %v3906 = vsel %vm416, %v3892, %v3894
      %v3907 = vsel %vm416, %v502, %v3896
      %v3908 = vsel %vm416, %v3896, %v3898
      %v3909 = vsel %vm416, %v502, %v3900
      %v3910 = vsel %vm416, %v3900, %v3902
      %3919 = vrot.lane.b32.xlu0 %v3847, 126
      %v3920 = vpop.permute.xlu0 %3919
      %3921 = vrot.lane.b32.xlu0 %v3848, 126
      %v3922 = vpop.permute.xlu0 %3921
      %3923 = vrot.lane.b32.xlu0 %v3849, 126
      %v3924 = vpop.permute.xlu0 %3923
      %3925 = vrot.lane.b32.xlu0 %v3850, 126
      %v3926 = vpop.permute.xlu0 %3925
      %3927 = vrot.lane.b32.xlu0 %v3851, 126
      %v3928 = vpop.permute.xlu0 %3927
      %3929 = vrot.lane.b32.xlu0 %v3852, 126
      %v3930 = vpop.permute.xlu0 %3929
      %3931 = vrot.lane.b32.xlu0 %v3853, 126
      %v3932 = vpop.permute.xlu0 %3931
      %3933 = vrot.lane.b32.xlu0 %v3854, 126
      %v3934 = vpop.permute.xlu0 %3933
      %v3935 = vsel %vm517, %v512, %v3920
      %v3936 = vsel %vm517, %v3920, %v3922
      %v3937 = vsel %vm517, %v512, %v3924
      %v3938 = vsel %vm517, %v3924, %v3926
      %v3939 = vsel %vm517, %v512, %v3928
      %v3940 = vsel %vm517, %v3928, %v3930
      %v3941 = vsel %vm517, %v512, %v3932
      %v3942 = vsel %vm517, %v3932, %v3934
      %3951 = vrot.lane.b32.xlu0 %v3855, 112
      %v3952 = vpop.permute.xlu0 %3951
      %3953 = vrot.lane.b32.xlu0 %v3856, 112
      %v3954 = vpop.permute.xlu0 %3953
      %3955 = vrot.lane.b32.xlu0 %v3857, 112
      %v3956 = vpop.permute.xlu0 %3955
      %3957 = vrot.lane.b32.xlu0 %v3858, 112
      %v3958 = vpop.permute.xlu0 %3957
      %3959 = vrot.lane.b32.xlu0 %v3859, 112
      %v3960 = vpop.permute.xlu0 %3959
      %3961 = vrot.lane.b32.xlu0 %v3860, 112
      %v3962 = vpop.permute.xlu0 %3961
      %3963 = vrot.lane.b32.xlu0 %v3861, 112
      %v3964 = vpop.permute.xlu0 %3963
      %3965 = vrot.lane.b32.xlu0 %v3862, 112
      %v3966 = vpop.permute.xlu0 %3965
      %v3967 = vsel %vm528, %v523, %v3952
      %v3968 = vsel %vm528, %v3952, %v3954
      %v3969 = vsel %vm528, %v523, %v3956
      %v3970 = vsel %vm528, %v3956, %v3958
      %v3971 = vsel %vm528, %v523, %v3960
      %v3972 = vsel %vm528, %v3960, %v3962
      %v3973 = vsel %vm528, %v523, %v3964
      %v3974 = vsel %vm528, %v3964, %v3966
      %3975 = vrot.lane.b32.xlu0 %v3823, 111
      %v3976 = vpop.permute.xlu0 %3975
      %3977 = vrot.lane.b32.xlu0 %v3824, 111
      %v3978 = vpop.permute.xlu0 %3977
      %3979 = vrot.lane.b32.xlu0 %v3825, 111
      %v3980 = vpop.permute.xlu0 %3979
      %3981 = vrot.lane.b32.xlu0 %v3826, 111
      %v3982 = vpop.permute.xlu0 %3981
      %3983 = vrot.lane.b32.xlu0 %v3827, 111
      %v3984 = vpop.permute.xlu0 %3983
      %3985 = vrot.lane.b32.xlu0 %v3828, 111
      %v3986 = vpop.permute.xlu0 %3985
      %3987 = vrot.lane.b32.xlu0 %v3829, 111
      %v3988 = vpop.permute.xlu0 %3987
      %3989 = vrot.lane.b32.xlu0 %v3830, 111
      %v3990 = vpop.permute.xlu0 %3989
      %v3991 = vsel %vm364, %v3976, %v3978
      %v3992 = vsel %vm364, %v3980, %v3982
      %v3993 = vsel %vm364, %v3984, %v3986
      %v3994 = vsel %vm364, %v3988, %v3990
      %4003 = vrot.lane.b32.xlu0 %v3863, 110
      %v4004 = vpop.permute.xlu0 %4003
      %4005 = vrot.lane.b32.xlu0 %v3864, 110
      %v4006 = vpop.permute.xlu0 %4005
      %4007 = vrot.lane.b32.xlu0 %v3865, 110
      %v4008 = vpop.permute.xlu0 %4007
      %4009 = vrot.lane.b32.xlu0 %v3866, 110
      %v4010 = vpop.permute.xlu0 %4009
      %4011 = vrot.lane.b32.xlu0 %v3867, 110
      %v4012 = vpop.permute.xlu0 %4011
      %4013 = vrot.lane.b32.xlu0 %v3868, 110
      %v4014 = vpop.permute.xlu0 %4013
      %4015 = vrot.lane.b32.xlu0 %v3869, 110
      %v4016 = vpop.permute.xlu0 %4015
      %4017 = vrot.lane.b32.xlu0 %v3870, 110
      %v4018 = vpop.permute.xlu0 %4017
      %v4019 = vsel %vm544, %v4004, %v4006
      %v4020 = vsel %vm544, %v4006, %v543
      %v4021 = vsel %vm544, %v4008, %v4010
      %v4022 = vsel %vm544, %v4010, %v543
      %v4023 = vsel %vm544, %v4012, %v4014
      %v4024 = vsel %vm544, %v4014, %v543
      %v4025 = vsel %vm544, %v4016, %v4018
      %v4026 = vsel %vm544, %v4018, %v543
      %4035 = vrot.lane.b32.xlu0 %v3871, 96
      %v4036 = vpop.permute.xlu0 %4035
      %4037 = vrot.lane.b32.xlu0 %v3872, 96
      %v4038 = vpop.permute.xlu0 %4037
      %4039 = vrot.lane.b32.xlu0 %v3873, 96
      %v4040 = vpop.permute.xlu0 %4039
      %4041 = vrot.lane.b32.xlu0 %v3874, 96
      %v4042 = vpop.permute.xlu0 %4041
      %4043 = vrot.lane.b32.xlu0 %v3875, 96
      %v4044 = vpop.permute.xlu0 %4043
      %4045 = vrot.lane.b32.xlu0 %v3876, 96
      %v4046 = vpop.permute.xlu0 %4045
      %4047 = vrot.lane.b32.xlu0 %v3877, 96
      %v4048 = vpop.permute.xlu0 %4047
      %4049 = vrot.lane.b32.xlu0 %v3878, 96
      %v4050 = vpop.permute.xlu0 %4049
      %v4051 = vsel %vm555, %v4036, %v4038
      %v4052 = vsel %vm555, %v4038, %v554
      %v4053 = vsel %vm555, %v4040, %v4042
      %v4054 = vsel %vm555, %v4042, %v554
      %v4055 = vsel %vm555, %v4044, %v4046
      %v4056 = vsel %vm555, %v4046, %v554
      %v4057 = vsel %vm555, %v4048, %v4050
      %v4058 = vsel %vm555, %v4050, %v554
      %4059 = vrot.lane.b32.xlu0 %v3823, 95
      %v4060 = vpop.permute.xlu0 %4059
      %4061 = vrot.lane.b32.xlu0 %v3824, 95
      %v4062 = vpop.permute.xlu0 %4061
      %4063 = vrot.lane.b32.xlu0 %v3825, 95
      %v4064 = vpop.permute.xlu0 %4063
      %4065 = vrot.lane.b32.xlu0 %v3826, 95
      %v4066 = vpop.permute.xlu0 %4065
      %4067 = vrot.lane.b32.xlu0 %v3827, 95
      %v4068 = vpop.permute.xlu0 %4067
      %4069 = vrot.lane.b32.xlu0 %v3828, 95
      %v4070 = vpop.permute.xlu0 %4069
      %4071 = vrot.lane.b32.xlu0 %v3829, 95
      %v4072 = vpop.permute.xlu0 %4071
      %4073 = vrot.lane.b32.xlu0 %v3830, 95
      %v4074 = vpop.permute.xlu0 %4073
      %v4075 = vsel %vm564, %v4060, %v4062
      %v4076 = vsel %vm564, %v4062, %v563
      %v4077 = vsel %vm564, %v4064, %v4066
      %v4078 = vsel %vm564, %v4066, %v563
      %v4079 = vsel %vm564, %v4068, %v4070
      %v4080 = vsel %vm564, %v4070, %v563
      %v4081 = vsel %vm564, %v4072, %v4074
      %v4082 = vsel %vm564, %v4074, %v563
      %4091 = vrot.lane.b32.xlu0 %v3879, 94
      %v4092 = vpop.permute.xlu0 %4091
      %4093 = vrot.lane.b32.xlu0 %v3880, 94
      %v4094 = vpop.permute.xlu0 %4093
      %4095 = vrot.lane.b32.xlu0 %v3881, 94
      %v4096 = vpop.permute.xlu0 %4095
      %4097 = vrot.lane.b32.xlu0 %v3882, 94
      %v4098 = vpop.permute.xlu0 %4097
      %4099 = vrot.lane.b32.xlu0 %v3883, 94
      %v4100 = vpop.permute.xlu0 %4099
      %4101 = vrot.lane.b32.xlu0 %v3884, 94
      %v4102 = vpop.permute.xlu0 %4101
      %4103 = vrot.lane.b32.xlu0 %v3885, 94
      %v4104 = vpop.permute.xlu0 %4103
      %4105 = vrot.lane.b32.xlu0 %v3886, 94
      %v4106 = vpop.permute.xlu0 %4105
      %v4107 = vsel %vm575, %v4092, %v4094
      %v4108 = vsel %vm575, %v4094, %v574
      %v4109 = vsel %vm575, %v4096, %v4098
      %v4110 = vsel %vm575, %v4098, %v574
      %v4111 = vsel %vm575, %v4100, %v4102
      %v4112 = vsel %vm575, %v4102, %v574
      %v4113 = vsel %vm575, %v4104, %v4106
      %v4114 = vsel %vm575, %v4106, %v574
      %v4115 = vld [vmem:[%s4] sm:$0xff]
      %v4116 = vld [vmem:[%s4 + $0x8] sm:$0xff]
      %v4117 = vld [vmem:[%s4 + $0x10] sm:$0xf]
      %v4118 = vld [vmem:[%s4 + $0x14] sm:$0xff]
      %v4119 = vld [vmem:[%s4 + $0x1c] sm:$0xff]
      %v4120 = vld [vmem:[%s4 + $0x24] sm:$0xf]
      %v4121 = vld [vmem:[%s4 + $0x28] sm:$0xff]
      %v4122 = vld [vmem:[%s4 + $0x30] sm:$0xff]
      %v4123 = vld [vmem:[%s4 + $0x38] sm:$0xf]
      %v4124 = vld [vmem:[%s4 + $0x3c] sm:$0xff]
      %v4125 = vld [vmem:[%s4 + $0x44] sm:$0xff]
      %v4126 = vld [vmem:[%s4 + $0x4c] sm:$0xf]
      %v4127 = vld [vmem:[%s4 + $0x50] sm:$0xff]
      %v4128 = vld [vmem:[%s4 + $0x58] sm:$0xff]
      %v4129 = vld [vmem:[%s4 + $0x60] sm:$0xf]
      %v4130 = vld [vmem:[%s4 + $0x64] sm:$0xff]
      %v4131 = vld [vmem:[%s4 + $0x6c] sm:$0xff]
      %v4132 = vld [vmem:[%s4 + $0x74] sm:$0xf]
      %v4133 = vld [vmem:[%s4 + $0x78] sm:$0xff]
      %v4134 = vld [vmem:[%s4 + $0x80] sm:$0xff]
      %v4135 = vld [vmem:[%s4 + $0x88] sm:$0xf]
      %v4136 = vld [vmem:[%s4 + $0x8c] sm:$0xff]
      %v4137 = vld [vmem:[%s4 + $0x94] sm:$0xff]
      %v4138 = vld [vmem:[%s4 + $0x9c] sm:$0xf]
      %v4163 = vunpack.c.l.b16 %v4115
      %v4164 = vunpack.c.h.b16 %v4115
      %v4165 = vunpack.c.l.b16 %v4116
      %v4166 = vunpack.c.h.b16 %v4116
      %v4167 = vunpack.c.l.b16 %v4117
      %v4168 = vunpack.c.l.b16 %v4118
      %v4169 = vunpack.c.h.b16 %v4118
      %v4170 = vunpack.c.l.b16 %v4119
      %v4171 = vunpack.c.h.b16 %v4119
      %v4172 = vunpack.c.l.b16 %v4120
      %v4173 = vunpack.c.l.b16 %v4121
      %v4174 = vunpack.c.h.b16 %v4121
      %v4175 = vunpack.c.l.b16 %v4122
      %v4176 = vunpack.c.h.b16 %v4122
      %v4177 = vunpack.c.l.b16 %v4123
      %v4178 = vunpack.c.l.b16 %v4124
      %v4179 = vunpack.c.h.b16 %v4124
      %v4180 = vunpack.c.l.b16 %v4125
      %v4181 = vunpack.c.h.b16 %v4125
      %v4182 = vunpack.c.l.b16 %v4126
      %v4183 = vunpack.c.l.b16 %v4127
      %v4184 = vunpack.c.h.b16 %v4127
      %v4185 = vunpack.c.l.b16 %v4128
      %v4186 = vunpack.c.h.b16 %v4128
      %v4187 = vunpack.c.l.b16 %v4129
      %v4188 = vunpack.c.l.b16 %v4130
      %v4189 = vunpack.c.h.b16 %v4130
      %v4190 = vunpack.c.l.b16 %v4131
      %v4191 = vunpack.c.h.b16 %v4131
      %v4192 = vunpack.c.l.b16 %v4132
      %v4193 = vunpack.c.l.b16 %v4133
      %v4194 = vunpack.c.h.b16 %v4133
      %v4195 = vunpack.c.l.b16 %v4134
      %v4196 = vunpack.c.h.b16 %v4134
      %v4197 = vunpack.c.l.b16 %v4135
      %v4198 = vunpack.c.l.b16 %v4136
      %v4199 = vunpack.c.h.b16 %v4136
      %v4200 = vunpack.c.l.b16 %v4137
      %v4201 = vunpack.c.h.b16 %v4137
      %v4202 = vunpack.c.l.b16 %v4138
      %v4203 = vpack.c.b16 %v4168, %v4163
      %v4204 = vpack.c.b16 %v4169, %v4164
      %v4205 = vpack.c.b16 %v4170, %v4165
      %v4206 = vpack.c.b16 %v4171, %v4166
      %v4207 = vpack.c.b16 %v4172, %v4167
      %v4208 = vpack.c.b16 %v4178, %v4173
      %v4209 = vpack.c.b16 %v4179, %v4174
      %v4210 = vpack.c.b16 %v4180, %v4175
      %v4211 = vpack.c.b16 %v4181, %v4176
      %v4212 = vpack.c.b16 %v4182, %v4177
      %v4213 = vpack.c.b16 %v4188, %v4183
      %v4214 = vpack.c.b16 %v4189, %v4184
      %v4215 = vpack.c.b16 %v4190, %v4185
      %v4216 = vpack.c.b16 %v4191, %v4186
      %v4217 = vpack.c.b16 %v4192, %v4187
      %v4218 = vpack.c.b16 %v4198, %v4193
      %v4219 = vpack.c.b16 %v4199, %v4194
      %v4220 = vpack.c.b16 %v4200, %v4195
      %v4221 = vpack.c.b16 %v4201, %v4196
      %v4222 = vpack.c.b16 %v4202, %v4197
      %4247 = vrot.lane.b32.xlu0 %v3839, 17
      %v4248 = vpop.permute.xlu0 %4247
      %4249 = vrot.lane.b32.xlu0 %v3840, 17
      %v4250 = vpop.permute.xlu0 %4249
      %4251 = vrot.lane.b32.xlu0 %v3841, 17
      %v4252 = vpop.permute.xlu0 %4251
      %4253 = vrot.lane.b32.xlu0 %v3842, 17
      %v4254 = vpop.permute.xlu0 %4253
      %4255 = vrot.lane.b32.xlu0 %v3843, 17
      %v4256 = vpop.permute.xlu0 %4255
      %4257 = vrot.lane.b32.xlu0 %v3844, 17
      %v4258 = vpop.permute.xlu0 %4257
      %4259 = vrot.lane.b32.xlu0 %v3845, 17
      %v4260 = vpop.permute.xlu0 %4259
      %4261 = vrot.lane.b32.xlu0 %v3846, 17
      %v4262 = vpop.permute.xlu0 %4261
      %4263 = vrot.lane.b32.xlu0 %v3903, 17
      %v4264 = vpop.permute.xlu0 %4263
      %4265 = vrot.lane.b32.xlu0 %v3904, 17
      %v4266 = vpop.permute.xlu0 %4265
      %4267 = vrot.lane.b32.xlu0 %v3890, 17
      %v4268 = vpop.permute.xlu0 %4267
      %4269 = vrot.lane.b32.xlu0 %v3905, 17
      %v4270 = vpop.permute.xlu0 %4269
      %4271 = vrot.lane.b32.xlu0 %v3906, 17
      %v4272 = vpop.permute.xlu0 %4271
      %4273 = vrot.lane.b32.xlu0 %v3894, 17
      %v4274 = vpop.permute.xlu0 %4273
      %4275 = vrot.lane.b32.xlu0 %v3907, 17
      %v4276 = vpop.permute.xlu0 %4275
      %4277 = vrot.lane.b32.xlu0 %v3908, 17
      %v4278 = vpop.permute.xlu0 %4277
      %4279 = vrot.lane.b32.xlu0 %v3898, 17
      %v4280 = vpop.permute.xlu0 %4279
      %4281 = vrot.lane.b32.xlu0 %v3909, 17
      %v4282 = vpop.permute.xlu0 %4281
      %4283 = vrot.lane.b32.xlu0 %v3910, 17
      %v4284 = vpop.permute.xlu0 %4283
      %4285 = vrot.lane.b32.xlu0 %v3902, 17
      %v4286 = vpop.permute.xlu0 %4285
      %4287 = vrot.lane.b32.xlu0 %v3935, 17
      %v4288 = vpop.permute.xlu0 %4287
      %4289 = vrot.lane.b32.xlu0 %v3936, 17
      %v4290 = vpop.permute.xlu0 %4289
      %4291 = vrot.lane.b32.xlu0 %v3922, 17
      %v4292 = vpop.permute.xlu0 %4291
      %4293 = vrot.lane.b32.xlu0 %v3937, 17
      %v4294 = vpop.permute.xlu0 %4293
      %4295 = vrot.lane.b32.xlu0 %v3938, 17
      %v4296 = vpop.permute.xlu0 %4295
      %4297 = vrot.lane.b32.xlu0 %v3926, 17
      %v4298 = vpop.permute.xlu0 %4297
      %4299 = vrot.lane.b32.xlu0 %v3939, 17
      %v4300 = vpop.permute.xlu0 %4299
      %4301 = vrot.lane.b32.xlu0 %v3940, 17
      %v4302 = vpop.permute.xlu0 %4301
      %4303 = vrot.lane.b32.xlu0 %v3930, 17
      %v4304 = vpop.permute.xlu0 %4303
      %4305 = vrot.lane.b32.xlu0 %v3941, 17
      %v4306 = vpop.permute.xlu0 %4305
      %4307 = vrot.lane.b32.xlu0 %v3942, 17
      %v4308 = vpop.permute.xlu0 %4307
      %4309 = vrot.lane.b32.xlu0 %v3934, 17
      %v4310 = vpop.permute.xlu0 %4309
      %4311 = vrot.lane.b32.xlu0 %v3967, 17
      %v4312 = vpop.permute.xlu0 %4311
      %4313 = vrot.lane.b32.xlu0 %v3968, 17
      %v4314 = vpop.permute.xlu0 %4313
      %4315 = vrot.lane.b32.xlu0 %v3954, 17
      %v4316 = vpop.permute.xlu0 %4315
      %4317 = vrot.lane.b32.xlu0 %v3969, 17
      %v4318 = vpop.permute.xlu0 %4317
      %4319 = vrot.lane.b32.xlu0 %v3970, 17
      %v4320 = vpop.permute.xlu0 %4319
      %4321 = vrot.lane.b32.xlu0 %v3958, 17
      %v4322 = vpop.permute.xlu0 %4321
      %4323 = vrot.lane.b32.xlu0 %v3971, 17
      %v4324 = vpop.permute.xlu0 %4323
      %4325 = vrot.lane.b32.xlu0 %v3972, 17
      %v4326 = vpop.permute.xlu0 %4325
      %4327 = vrot.lane.b32.xlu0 %v3962, 17
      %v4328 = vpop.permute.xlu0 %4327
      %4329 = vrot.lane.b32.xlu0 %v3973, 17
      %v4330 = vpop.permute.xlu0 %4329
      %4331 = vrot.lane.b32.xlu0 %v3974, 17
      %v4332 = vpop.permute.xlu0 %4331
      %4333 = vrot.lane.b32.xlu0 %v3966, 17
      %v4334 = vpop.permute.xlu0 %4333
      %4335 = vrot.lane.b32.xlu0 %v3976, 17
      %v4336 = vpop.permute.xlu0 %4335
      %4337 = vrot.lane.b32.xlu0 %v3991, 17
      %v4338 = vpop.permute.xlu0 %4337
      %4339 = vrot.lane.b32.xlu0 %v3978, 17
      %v4340 = vpop.permute.xlu0 %4339
      %4341 = vrot.lane.b32.xlu0 %v3980, 17
      %v4342 = vpop.permute.xlu0 %4341
      %4343 = vrot.lane.b32.xlu0 %v3992, 17
      %v4344 = vpop.permute.xlu0 %4343
      %4345 = vrot.lane.b32.xlu0 %v3982, 17
      %v4346 = vpop.permute.xlu0 %4345
      %4347 = vrot.lane.b32.xlu0 %v3984, 17
      %v4348 = vpop.permute.xlu0 %4347
      %4349 = vrot.lane.b32.xlu0 %v3993, 17
      %v4350 = vpop.permute.xlu0 %4349
      %4351 = vrot.lane.b32.xlu0 %v3986, 17
      %v4352 = vpop.permute.xlu0 %4351
      %4353 = vrot.lane.b32.xlu0 %v3988, 17
      %v4354 = vpop.permute.xlu0 %4353
      %4355 = vrot.lane.b32.xlu0 %v3994, 17
      %v4356 = vpop.permute.xlu0 %4355
      %4357 = vrot.lane.b32.xlu0 %v3990, 17
      %v4358 = vpop.permute.xlu0 %4357
      %4359 = vrot.lane.b32.xlu0 %v4004, 17
      %v4360 = vpop.permute.xlu0 %4359
      %4361 = vrot.lane.b32.xlu0 %v4019, 17
      %v4362 = vpop.permute.xlu0 %4361
      %4363 = vrot.lane.b32.xlu0 %v4020, 17
      %v4364 = vpop.permute.xlu0 %4363
      %4365 = vrot.lane.b32.xlu0 %v4008, 17
      %v4366 = vpop.permute.xlu0 %4365
      %4367 = vrot.lane.b32.xlu0 %v4021, 17
      %v4368 = vpop.permute.xlu0 %4367
      %4369 = vrot.lane.b32.xlu0 %v4022, 17
      %v4370 = vpop.permute.xlu0 %4369
      %4371 = vrot.lane.b32.xlu0 %v4012, 17
      %v4372 = vpop.permute.xlu0 %4371
      %4373 = vrot.lane.b32.xlu0 %v4023, 17
      %v4374 = vpop.permute.xlu0 %4373
      %4375 = vrot.lane.b32.xlu0 %v4024, 17
      %v4376 = vpop.permute.xlu0 %4375
      %4377 = vrot.lane.b32.xlu0 %v4016, 17
      %v4378 = vpop.permute.xlu0 %4377
      %4379 = vrot.lane.b32.xlu0 %v4025, 17
      %v4380 = vpop.permute.xlu0 %4379
      %4381 = vrot.lane.b32.xlu0 %v4026, 17
      %v4382 = vpop.permute.xlu0 %4381
      %4383 = vrot.lane.b32.xlu0 %v4036, 17
      %v4384 = vpop.permute.xlu0 %4383
      %4385 = vrot.lane.b32.xlu0 %v4051, 17
      %v4386 = vpop.permute.xlu0 %4385
      %4387 = vrot.lane.b32.xlu0 %v4052, 17
      %v4388 = vpop.permute.xlu0 %4387
      %4389 = vrot.lane.b32.xlu0 %v4040, 17
      %v4390 = vpop.permute.xlu0 %4389
      %4391 = vrot.lane.b32.xlu0 %v4053, 17
      %v4392 = vpop.permute.xlu0 %4391
      %4393 = vrot.lane.b32.xlu0 %v4054, 17
      %v4394 = vpop.permute.xlu0 %4393
      %4395 = vrot.lane.b32.xlu0 %v4044, 17
      %v4396 = vpop.permute.xlu0 %4395
      %4397 = vrot.lane.b32.xlu0 %v4055, 17
      %v4398 = vpop.permute.xlu0 %4397
      %4399 = vrot.lane.b32.xlu0 %v4056, 17
      %v4400 = vpop.permute.xlu0 %4399
      %4401 = vrot.lane.b32.xlu0 %v4048, 17
      %v4402 = vpop.permute.xlu0 %4401
      %4403 = vrot.lane.b32.xlu0 %v4057, 17
      %v4404 = vpop.permute.xlu0 %4403
      %4405 = vrot.lane.b32.xlu0 %v4058, 17
      %v4406 = vpop.permute.xlu0 %4405
      %4407 = vrot.lane.b32.xlu0 %v4060, 17
      %v4408 = vpop.permute.xlu0 %4407
      %4409 = vrot.lane.b32.xlu0 %v4075, 17
      %v4410 = vpop.permute.xlu0 %4409
      %4411 = vrot.lane.b32.xlu0 %v4076, 17
      %v4412 = vpop.permute.xlu0 %4411
      %4413 = vrot.lane.b32.xlu0 %v4064, 17
      %v4414 = vpop.permute.xlu0 %4413
      %4415 = vrot.lane.b32.xlu0 %v4077, 17
      %v4416 = vpop.permute.xlu0 %4415
      %4417 = vrot.lane.b32.xlu0 %v4078, 17
      %v4418 = vpop.permute.xlu0 %4417
      %4419 = vrot.lane.b32.xlu0 %v4068, 17
      %v4420 = vpop.permute.xlu0 %4419
      %4421 = vrot.lane.b32.xlu0 %v4079, 17
      %v4422 = vpop.permute.xlu0 %4421
      %4423 = vrot.lane.b32.xlu0 %v4080, 17
      %v4424 = vpop.permute.xlu0 %4423
      %4425 = vrot.lane.b32.xlu0 %v4072, 17
      %v4426 = vpop.permute.xlu0 %4425
      %4427 = vrot.lane.b32.xlu0 %v4081, 17
      %v4428 = vpop.permute.xlu0 %4427
      %4429 = vrot.lane.b32.xlu0 %v4082, 17
      %v4430 = vpop.permute.xlu0 %4429
      %4431 = vrot.lane.b32.xlu0 %v4092, 17
      %v4432 = vpop.permute.xlu0 %4431
      %4433 = vrot.lane.b32.xlu0 %v4107, 17
      %v4434 = vpop.permute.xlu0 %4433
      %4435 = vrot.lane.b32.xlu0 %v4108, 17
      %v4436 = vpop.permute.xlu0 %4435
      %4437 = vrot.lane.b32.xlu0 %v4096, 17
      %v4438 = vpop.permute.xlu0 %4437
      %4439 = vrot.lane.b32.xlu0 %v4109, 17
      %v4440 = vpop.permute.xlu0 %4439
      %4441 = vrot.lane.b32.xlu0 %v4110, 17
      %v4442 = vpop.permute.xlu0 %4441
      %4443 = vrot.lane.b32.xlu0 %v4100, 17
      %v4444 = vpop.permute.xlu0 %4443
      %4445 = vrot.lane.b32.xlu0 %v4111, 17
      %v4446 = vpop.permute.xlu0 %4445
      %4447 = vrot.lane.b32.xlu0 %v4112, 17
      %v4448 = vpop.permute.xlu0 %4447
      %4449 = vrot.lane.b32.xlu0 %v4104, 17
      %v4450 = vpop.permute.xlu0 %4449
      %4451 = vrot.lane.b32.xlu0 %v4113, 17
      %v4452 = vpop.permute.xlu0 %4451
      %4453 = vrot.lane.b32.xlu0 %v4114, 17
      %v4454 = vpop.permute.xlu0 %4453
      %v4455 = vsel %vm482, %v625, %v4248
      %v4456 = vsel %vm482, %v4248, %v4250
      %v4457 = vsel %vm482, %v625, %v4252
      %v4458 = vsel %vm482, %v4252, %v4254
      %v4459 = vsel %vm482, %v625, %v4256
      %v4460 = vsel %vm482, %v4256, %v4258
      %v4461 = vsel %vm482, %v625, %v4260
      %v4462 = vsel %vm482, %v4260, %v4262
      %v4463 = vsel %vm482, %v4264, %v4266
      %v4464 = vsel %vm482, %v4266, %v4268
      %v4465 = vsel %vm482, %v4270, %v4272
      %v4466 = vsel %vm482, %v4272, %v4274
      %v4467 = vsel %vm482, %v4276, %v4278
      %v4468 = vsel %vm482, %v4278, %v4280
      %v4469 = vsel %vm482, %v4282, %v4284
      %v4470 = vsel %vm482, %v4284, %v4286
      %v4471 = vsel %vm482, %v4288, %v4290
      %v4472 = vsel %vm482, %v4290, %v4292
      %v4473 = vsel %vm482, %v4294, %v4296
      %v4474 = vsel %vm482, %v4296, %v4298
      %v4475 = vsel %vm482, %v4300, %v4302
      %v4476 = vsel %vm482, %v4302, %v4304
      %v4477 = vsel %vm482, %v4306, %v4308
      %v4478 = vsel %vm482, %v4308, %v4310
      %v4479 = vsel %vm482, %v4312, %v4314
      %v4480 = vsel %vm482, %v4314, %v4316
      %v4481 = vsel %vm482, %v4318, %v4320
      %v4482 = vsel %vm482, %v4320, %v4322
      %v4483 = vsel %vm482, %v4324, %v4326
      %v4484 = vsel %vm482, %v4326, %v4328
      %v4485 = vsel %vm482, %v4330, %v4332
      %v4486 = vsel %vm482, %v4332, %v4334
      %v4487 = vsel %vm482, %v4336, %v4338
      %v4488 = vsel %vm482, %v4338, %v4340
      %v4489 = vsel %vm482, %v4342, %v4344
      %v4490 = vsel %vm482, %v4344, %v4346
      %v4491 = vsel %vm482, %v4348, %v4350
      %v4492 = vsel %vm482, %v4350, %v4352
      %v4493 = vsel %vm482, %v4354, %v4356
      %v4494 = vsel %vm482, %v4356, %v4358
      %v4495 = vsel %vm482, %v4360, %v4362
      %v4496 = vsel %vm482, %v4362, %v4364
      %v4497 = vsel %vm482, %v4366, %v4368
      %v4498 = vsel %vm482, %v4368, %v4370
      %v4499 = vsel %vm482, %v4372, %v4374
      %v4500 = vsel %vm482, %v4374, %v4376
      %v4501 = vsel %vm482, %v4378, %v4380
      %v4502 = vsel %vm482, %v4380, %v4382
      %v4503 = vsel %vm482, %v4384, %v4386
      %v4504 = vsel %vm482, %v4386, %v4388
      %v4505 = vsel %vm482, %v4390, %v4392
      %v4506 = vsel %vm482, %v4392, %v4394
      %v4507 = vsel %vm482, %v4396, %v4398
      %v4508 = vsel %vm482, %v4398, %v4400
      %v4509 = vsel %vm482, %v4402, %v4404
      %v4510 = vsel %vm482, %v4404, %v4406
      %v4511 = vsel %vm482, %v4408, %v4410
      %v4512 = vsel %vm482, %v4410, %v4412
      %v4513 = vsel %vm482, %v4414, %v4416
      %v4514 = vsel %vm482, %v4416, %v4418
      %v4515 = vsel %vm482, %v4420, %v4422
      %v4516 = vsel %vm482, %v4422, %v4424
      %v4517 = vsel %vm482, %v4426, %v4428
      %v4518 = vsel %vm482, %v4428, %v4430
      %v4519 = vsel %vm482, %v4432, %v4434
      %v4520 = vsel %vm482, %v4434, %v4436
      %v4521 = vsel %vm482, %v4438, %v4440
      %v4522 = vsel %vm482, %v4440, %v4442
      %v4523 = vsel %vm482, %v4444, %v4446
      %v4524 = vsel %vm482, %v4446, %v4448
      %v4525 = vsel %vm482, %v4450, %v4452
      %v4526 = vsel %vm482, %v4452, %v4454
      %v4600 = vsel %vm1898, %v4207, 0
      %v4603 = vsel %vm1898, %v4212, 0
      %v4606 = vsel %vm1898, %v4217, 0
      %v4609 = vsel %vm1898, %v4222, 0
      %4611 = vmatpush.bf16.msra.mxu0 %v4469
      %4612 = vmatpush.bf16.msra.mxu0 %v4467
      %4613 = vmatpush.bf16.msra.mxu0 %v4465
      %4614 = vmatpush.bf16.msra.mxu0 %v4463
      %4615 = vmatpush.bf16.msra.mxu0 %v4461
      %4616 = vmatpush.bf16.msra.mxu0 %v4459
      %4617 = vmatpush.bf16.msra.mxu0 %v4457
      %4618 = vmatpush.bf16.msra.mxu0 %v4455
      %4619 = vmatmul.bf16.gmra.mxu0 %v4203
      %v4620 = vpop.f32.mrf.mxu0
      %v4621 = vadd.f32 0.0, %v4620
      %v4622 = vpop.f32.mrf.mxu0
      %v4623 = vadd.f32 0.0, %v4622
      %4624 = vmatmul.bf16.gmra.mxu0 %v4208
      %v4625 = vpop.f32.mrf.mxu0
      %v4626 = vadd.f32 0.0, %v4625
      %v4627 = vpop.f32.mrf.mxu0
      %v4628 = vadd.f32 0.0, %v4627
      %4629 = vmatmul.bf16.gmra.mxu0 %v4213
      %v4630 = vpop.f32.mrf.mxu0
      %v4631 = vadd.f32 0.0, %v4630
      %v4632 = vpop.f32.mrf.mxu0
      %v4633 = vadd.f32 0.0, %v4632
      %4634 = vmatmul.bf16.gmra.mxu0 %v4218
      %v4635 = vpop.f32.mrf.mxu0
      %v4636 = vadd.f32 0.0, %v4635
      %v4637 = vpop.f32.mrf.mxu0
      %v4638 = vadd.f32 0.0, %v4637
      %4639 = vdwg.mxu0
      %4640 = vmatpush.bf16.msra.mxu0 %v4485
      %4641 = vmatpush.bf16.msra.mxu0 %v4483
      %4642 = vmatpush.bf16.msra.mxu0 %v4481
      %4643 = vmatpush.bf16.msra.mxu0 %v4479
      %4644 = vmatpush.bf16.msra.mxu0 %v4477
      %4645 = vmatpush.bf16.msra.mxu0 %v4475
      %4646 = vmatpush.bf16.msra.mxu0 %v4473
      %4647 = vmatpush.bf16.msra.mxu0 %v4471
      %4648 = vmatmul.bf16.gmra.mxu0 %v4204
      %v4649 = vpop.f32.mrf.mxu0
      %v4650 = vadd.f32 %v4621, %v4649
      %v4651 = vpop.f32.mrf.mxu0
      %v4652 = vadd.f32 %v4623, %v4651
      %4653 = vmatmul.bf16.gmra.mxu0 %v4209
      %v4654 = vpop.f32.mrf.mxu0
      %v4655 = vadd.f32 %v4626, %v4654
      %v4656 = vpop.f32.mrf.mxu0
      %v4657 = vadd.f32 %v4628, %v4656
      %4658 = vmatmul.bf16.gmra.mxu0 %v4214
      %v4659 = vpop.f32.mrf.mxu0
      %v4660 = vadd.f32 %v4631, %v4659
      %v4661 = vpop.f32.mrf.mxu0
      %v4662 = vadd.f32 %v4633, %v4661
      %4663 = vmatmul.bf16.gmra.mxu0 %v4219
      %v4664 = vpop.f32.mrf.mxu0
      %v4665 = vadd.f32 %v4636, %v4664
      %v4666 = vpop.f32.mrf.mxu0
      %v4667 = vadd.f32 %v4638, %v4666
      %4668 = vdwg.mxu0
      %4669 = vmatpush.bf16.msra.mxu0 %v4501
      %4670 = vmatpush.bf16.msra.mxu0 %v4499
      %4671 = vmatpush.bf16.msra.mxu0 %v4497
      %4672 = vmatpush.bf16.msra.mxu0 %v4495
      %4673 = vmatpush.bf16.msra.mxu0 %v4493
      %4674 = vmatpush.bf16.msra.mxu0 %v4491
      %4675 = vmatpush.bf16.msra.mxu0 %v4489
      %4676 = vmatpush.bf16.msra.mxu0 %v4487
      %4677 = vmatmul.bf16.gmra.mxu0 %v4205
      %v4678 = vpop.f32.mrf.mxu0
      %v4679 = vadd.f32 %v4650, %v4678
      %v4680 = vpop.f32.mrf.mxu0
      %v4681 = vadd.f32 %v4652, %v4680
      %4682 = vmatmul.bf16.gmra.mxu0 %v4210
      %v4683 = vpop.f32.mrf.mxu0
      %v4684 = vadd.f32 %v4655, %v4683
      %v4685 = vpop.f32.mrf.mxu0
      %v4686 = vadd.f32 %v4657, %v4685
      %4687 = vmatmul.bf16.gmra.mxu0 %v4215
      %v4688 = vpop.f32.mrf.mxu0
      %v4689 = vadd.f32 %v4660, %v4688
      %v4690 = vpop.f32.mrf.mxu0
      %v4691 = vadd.f32 %v4662, %v4690
      %4692 = vmatmul.bf16.gmra.mxu0 %v4220
      %v4693 = vpop.f32.mrf.mxu0
      %v4694 = vadd.f32 %v4665, %v4693
      %v4695 = vpop.f32.mrf.mxu0
      %v4696 = vadd.f32 %v4667, %v4695
      %4697 = vdwg.mxu0
      %4698 = vmatpush.bf16.msra.mxu0 %v4517
      %4699 = vmatpush.bf16.msra.mxu0 %v4515
      %4700 = vmatpush.bf16.msra.mxu0 %v4513
      %4701 = vmatpush.bf16.msra.mxu0 %v4511
      %4702 = vmatpush.bf16.msra.mxu0 %v4509
      %4703 = vmatpush.bf16.msra.mxu0 %v4507
      %4704 = vmatpush.bf16.msra.mxu0 %v4505
      %4705 = vmatpush.bf16.msra.mxu0 %v4503
      %4706 = vmatmul.bf16.gmra.mxu0 %v4206
      %v4707 = vpop.f32.mrf.mxu0
      %v4708 = vadd.f32 %v4679, %v4707
      %v4709 = vpop.f32.mrf.mxu0
      %v4710 = vadd.f32 %v4681, %v4709
      %4711 = vmatmul.bf16.gmra.mxu0 %v4211
      %v4712 = vpop.f32.mrf.mxu0
      %v4713 = vadd.f32 %v4684, %v4712
      %v4714 = vpop.f32.mrf.mxu0
      %v4715 = vadd.f32 %v4686, %v4714
      %4716 = vmatmul.bf16.gmra.mxu0 %v4216
      %v4717 = vpop.f32.mrf.mxu0
      %v4718 = vadd.f32 %v4689, %v4717
      %v4719 = vpop.f32.mrf.mxu0
      %v4720 = vadd.f32 %v4691, %v4719
      %4721 = vmatmul.bf16.gmra.mxu0 %v4221
      %v4722 = vpop.f32.mrf.mxu0
      %v4723 = vadd.f32 %v4694, %v4722
      %v4724 = vpop.f32.mrf.mxu0
      %v4725 = vadd.f32 %v4696, %v4724
      %4726 = vdwg.mxu0
      %4727 = vmatpush.bf16.msra.mxu0 0
      %4728 = vmatpush.bf16.msra.mxu0 0
      %4729 = vmatpush.bf16.msra.mxu0 0
      %4730 = vmatpush.bf16.msra.mxu0 0
      %4731 = vmatpush.bf16.msra.mxu0 %v4525
      %4732 = vmatpush.bf16.msra.mxu0 %v4523
      %4733 = vmatpush.bf16.msra.mxu0 %v4521
      %4734 = vmatpush.bf16.msra.mxu0 %v4519
      %4735 = vmatmul.bf16.gmra.mxu0 %v4600
      %v4736 = vpop.f32.mrf.mxu0
      %v4737 = vadd.f32 %v4708, %v4736
      %v4738 = vpop.f32.mrf.mxu0
      %v4739 = vadd.f32 %v4710, %v4738
      %4740 = vmatmul.bf16.gmra.mxu0 %v4603
      %v4741 = vpop.f32.mrf.mxu0
      %v4742 = vadd.f32 %v4713, %v4741
      %v4743 = vpop.f32.mrf.mxu0
      %v4744 = vadd.f32 %v4715, %v4743
      %4745 = vmatmul.bf16.gmra.mxu0 %v4606
      %v4746 = vpop.f32.mrf.mxu0
      %v4747 = vadd.f32 %v4718, %v4746
      %v4748 = vpop.f32.mrf.mxu0
      %v4749 = vadd.f32 %v4720, %v4748
      %4750 = vmatmul.bf16.gmra.mxu0 %v4609
      %v4751 = vpop.f32.mrf.mxu0
      %v4752 = vadd.f32 %v4723, %v4751
      %v4753 = vpop.f32.mrf.mxu0
      %v4754 = vadd.f32 %v4725, %v4753
      %4755 = vdwg.mxu0
      %4756 = vmatpush.bf16.msra.mxu0 %v4470
      %4757 = vmatpush.bf16.msra.mxu0 %v4468
      %4758 = vmatpush.bf16.msra.mxu0 %v4466
      %4759 = vmatpush.bf16.msra.mxu0 %v4464
      %4760 = vmatpush.bf16.msra.mxu0 %v4462
      %4761 = vmatpush.bf16.msra.mxu0 %v4460
      %4762 = vmatpush.bf16.msra.mxu0 %v4458
      %4763 = vmatpush.bf16.msra.mxu0 %v4456
      %4764 = vmatmul.bf16.gmra.mxu0 %v4203
      %v4765 = vpop.f32.mrf.mxu0
      %v4766 = vadd.f32 0.0, %v4765
      %v4767 = vpop.f32.mrf.mxu0
      %v4768 = vadd.f32 0.0, %v4767
      %4769 = vmatmul.bf16.gmra.mxu0 %v4208
      %v4770 = vpop.f32.mrf.mxu0
      %v4771 = vadd.f32 0.0, %v4770
      %v4772 = vpop.f32.mrf.mxu0
      %v4773 = vadd.f32 0.0, %v4772
      %4774 = vmatmul.bf16.gmra.mxu0 %v4213
      %v4775 = vpop.f32.mrf.mxu0
      %v4776 = vadd.f32 0.0, %v4775
      %v4777 = vpop.f32.mrf.mxu0
      %v4778 = vadd.f32 0.0, %v4777
      %4779 = vmatmul.bf16.gmra.mxu0 %v4218
      %v4780 = vpop.f32.mrf.mxu0
      %v4781 = vadd.f32 0.0, %v4780
      %v4782 = vpop.f32.mrf.mxu0
      %v4783 = vadd.f32 0.0, %v4782
      %4784 = vdwg.mxu0
      %4785 = vmatpush.bf16.msra.mxu0 %v4486
      %4786 = vmatpush.bf16.msra.mxu0 %v4484
      %4787 = vmatpush.bf16.msra.mxu0 %v4482
      %4788 = vmatpush.bf16.msra.mxu0 %v4480
      %4789 = vmatpush.bf16.msra.mxu0 %v4478
      %4790 = vmatpush.bf16.msra.mxu0 %v4476
      %4791 = vmatpush.bf16.msra.mxu0 %v4474
      %4792 = vmatpush.bf16.msra.mxu0 %v4472
      %4793 = vmatmul.bf16.gmra.mxu0 %v4204
      %v4794 = vpop.f32.mrf.mxu0
      %v4795 = vadd.f32 %v4766, %v4794
      %v4796 = vpop.f32.mrf.mxu0
      %v4797 = vadd.f32 %v4768, %v4796
      %4798 = vmatmul.bf16.gmra.mxu0 %v4209
      %v4799 = vpop.f32.mrf.mxu0
      %v4800 = vadd.f32 %v4771, %v4799
      %v4801 = vpop.f32.mrf.mxu0
      %v4802 = vadd.f32 %v4773, %v4801
      %4803 = vmatmul.bf16.gmra.mxu0 %v4214
      %v4804 = vpop.f32.mrf.mxu0
      %v4805 = vadd.f32 %v4776, %v4804
      %v4806 = vpop.f32.mrf.mxu0
      %v4807 = vadd.f32 %v4778, %v4806
      %4808 = vmatmul.bf16.gmra.mxu0 %v4219
      %v4809 = vpop.f32.mrf.mxu0
      %v4810 = vadd.f32 %v4781, %v4809
      %v4811 = vpop.f32.mrf.mxu0
      %v4812 = vadd.f32 %v4783, %v4811
      %4813 = vdwg.mxu0
      %4814 = vmatpush.bf16.msra.mxu0 %v4502
      %4815 = vmatpush.bf16.msra.mxu0 %v4500
      %4816 = vmatpush.bf16.msra.mxu0 %v4498
      %4817 = vmatpush.bf16.msra.mxu0 %v4496
      %4818 = vmatpush.bf16.msra.mxu0 %v4494
      %4819 = vmatpush.bf16.msra.mxu0 %v4492
      %4820 = vmatpush.bf16.msra.mxu0 %v4490
      %4821 = vmatpush.bf16.msra.mxu0 %v4488
      %4822 = vmatmul.bf16.gmra.mxu0 %v4205
      %v4823 = vpop.f32.mrf.mxu0
      %v4824 = vadd.f32 %v4795, %v4823
      %v4825 = vpop.f32.mrf.mxu0
      %v4826 = vadd.f32 %v4797, %v4825
      %4827 = vmatmul.bf16.gmra.mxu0 %v4210
      %v4828 = vpop.f32.mrf.mxu0
      %v4829 = vadd.f32 %v4800, %v4828
      %v4830 = vpop.f32.mrf.mxu0
      %v4831 = vadd.f32 %v4802, %v4830
      %4832 = vmatmul.bf16.gmra.mxu0 %v4215
      %v4833 = vpop.f32.mrf.mxu0
      %v4834 = vadd.f32 %v4805, %v4833
      %v4835 = vpop.f32.mrf.mxu0
      %v4836 = vadd.f32 %v4807, %v4835
      %4837 = vmatmul.bf16.gmra.mxu0 %v4220
      %v4838 = vpop.f32.mrf.mxu0
      %v4839 = vadd.f32 %v4810, %v4838
      %v4840 = vpop.f32.mrf.mxu0
      %v4841 = vadd.f32 %v4812, %v4840
      %4842 = vdwg.mxu0
      %4843 = vmatpush.bf16.msra.mxu0 %v4518
      %4844 = vmatpush.bf16.msra.mxu0 %v4516
      %4845 = vmatpush.bf16.msra.mxu0 %v4514
      %4846 = vmatpush.bf16.msra.mxu0 %v4512
      %4847 = vmatpush.bf16.msra.mxu0 %v4510
      %4848 = vmatpush.bf16.msra.mxu0 %v4508
      %4849 = vmatpush.bf16.msra.mxu0 %v4506
      %4850 = vmatpush.bf16.msra.mxu0 %v4504
      %4851 = vmatmul.bf16.gmra.mxu0 %v4206
      %v4852 = vpop.f32.mrf.mxu0
      %v4853 = vadd.f32 %v4824, %v4852
      %v4854 = vpop.f32.mrf.mxu0
      %v4855 = vadd.f32 %v4826, %v4854
      %4856 = vmatmul.bf16.gmra.mxu0 %v4211
      %v4857 = vpop.f32.mrf.mxu0
      %v4858 = vadd.f32 %v4829, %v4857
      %v4859 = vpop.f32.mrf.mxu0
      %v4860 = vadd.f32 %v4831, %v4859
      %4861 = vmatmul.bf16.gmra.mxu0 %v4216
      %v4862 = vpop.f32.mrf.mxu0
      %v4863 = vadd.f32 %v4834, %v4862
      %v4864 = vpop.f32.mrf.mxu0
      %v4865 = vadd.f32 %v4836, %v4864
      %4866 = vmatmul.bf16.gmra.mxu0 %v4221
      %v4867 = vpop.f32.mrf.mxu0
      %v4868 = vadd.f32 %v4839, %v4867
      %v4869 = vpop.f32.mrf.mxu0
      %v4870 = vadd.f32 %v4841, %v4869
      %4871 = vdwg.mxu0
      %4872 = vmatpush.bf16.msra.mxu0 0
      %4873 = vmatpush.bf16.msra.mxu0 0
      %4874 = vmatpush.bf16.msra.mxu0 0
      %4875 = vmatpush.bf16.msra.mxu0 0
      %4876 = vmatpush.bf16.msra.mxu0 %v4526
      %4877 = vmatpush.bf16.msra.mxu0 %v4524
      %4878 = vmatpush.bf16.msra.mxu0 %v4522
      %4879 = vmatpush.bf16.msra.mxu0 %v4520
      %4880 = vmatmul.bf16.gmra.mxu0 %v4600
      %v4881 = vpop.f32.mrf.mxu0
      %v4882 = vadd.f32 %v4853, %v4881
      %v4883 = vpop.f32.mrf.mxu0
      %v4884 = vadd.f32 %v4855, %v4883
      %4885 = vmatmul.bf16.gmra.mxu0 %v4603
      %v4886 = vpop.f32.mrf.mxu0
      %v4887 = vadd.f32 %v4858, %v4886
      %v4888 = vpop.f32.mrf.mxu0
      %v4889 = vadd.f32 %v4860, %v4888
      %4890 = vmatmul.bf16.gmra.mxu0 %v4606
      %v4891 = vpop.f32.mrf.mxu0
      %v4892 = vadd.f32 %v4863, %v4891
      %v4893 = vpop.f32.mrf.mxu0
      %v4894 = vadd.f32 %v4865, %v4893
      %4895 = vmatmul.bf16.gmra.mxu0 %v4609
      %v4896 = vpop.f32.mrf.mxu0
      %v4897 = vadd.f32 %v4868, %v4896
      %v4898 = vpop.f32.mrf.mxu0
      %v4899 = vadd.f32 %v4870, %v4898
      %4900 = vdwg.mxu0
      %v4901 = vadd.f32 %v4737, %v4882
      %4902 = vadd.xlane.f32.xlu0 %v4901
      %v4903 = vpop.xlane.xlu0 %4902
      %v4904 = vadd.f32 %v4739, %v4884
      %4905 = vadd.xlane.f32.xlu0 %v4904
      %v4906 = vpop.xlane.xlu0 %4905
      %v4907 = vadd.f32 %v4742, %v4887
      %4908 = vadd.xlane.f32.xlu0 %v4907
      %v4909 = vpop.xlane.xlu0 %4908
      %v4910 = vadd.f32 %v4744, %v4889
      %4911 = vadd.xlane.f32.xlu0 %v4910
      %v4912 = vpop.xlane.xlu0 %4911
      %v4913 = vadd.f32 %v4747, %v4892
      %4914 = vadd.xlane.f32.xlu0 %v4913
      %v4915 = vpop.xlane.xlu0 %4914
      %v4916 = vadd.f32 %v4749, %v4894
      %4917 = vadd.xlane.f32.xlu0 %v4916
      %v4918 = vpop.xlane.xlu0 %4917
      %v4919 = vadd.f32 %v4752, %v4897
      %4920 = vadd.xlane.f32.xlu0 %v4919
      %v4921 = vpop.xlane.xlu0 %4920
      %v4922 = vadd.f32 %v4754, %v4899
      %4923 = vadd.xlane.f32.xlu0 %v4922
      %v4924 = vpop.xlane.xlu0 %4923
      %v4925 = vmul.f32 %v4903, %v873
      %v4926 = vmul.f32 %v4906, %v873
      %v4927 = vmul.f32 %v4909, %v873
      %v4928 = vmul.f32 %v4912, %v873
      %v4929 = vmul.f32 %v4915, %v873
      %v4930 = vmul.f32 %v4918, %v873
      %v4931 = vmul.f32 %v4921, %v873
      %v4932 = vmul.f32 %v4924, %v873
      %v4933 = vmul.f32 %v4737, %v4737
      %v4934 = vmul.f32 %v4882, %v4882
      %v4935 = vmul.f32 %v4739, %v4739
      %v4936 = vmul.f32 %v4884, %v4884
      %v4937 = vmul.f32 %v4742, %v4742
      %v4938 = vmul.f32 %v4887, %v4887
      %v4939 = vmul.f32 %v4744, %v4744
      %v4940 = vmul.f32 %v4889, %v4889
      %v4941 = vmul.f32 %v4747, %v4747
      %v4942 = vmul.f32 %v4892, %v4892
      %v4943 = vmul.f32 %v4749, %v4749
      %v4944 = vmul.f32 %v4894, %v4894
      %v4945 = vmul.f32 %v4752, %v4752
      %v4946 = vmul.f32 %v4897, %v4897
      %v4947 = vmul.f32 %v4754, %v4754
      %v4948 = vmul.f32 %v4899, %v4899
      %v4949 = vadd.f32 %v4933, %v4934
      %4950 = vadd.xlane.f32.xlu0 %v4949
      %v4951 = vpop.xlane.xlu0 %4950
      %v4952 = vadd.f32 %v4935, %v4936
      %4953 = vadd.xlane.f32.xlu0 %v4952
      %v4954 = vpop.xlane.xlu0 %4953
      %v4955 = vadd.f32 %v4937, %v4938
      %4956 = vadd.xlane.f32.xlu0 %v4955
      %v4957 = vpop.xlane.xlu0 %4956
      %v4958 = vadd.f32 %v4939, %v4940
      %4959 = vadd.xlane.f32.xlu0 %v4958
      %v4960 = vpop.xlane.xlu0 %4959
      %v4961 = vadd.f32 %v4941, %v4942
      %4962 = vadd.xlane.f32.xlu0 %v4961
      %v4963 = vpop.xlane.xlu0 %4962
      %v4964 = vadd.f32 %v4943, %v4944
      %4965 = vadd.xlane.f32.xlu0 %v4964
      %v4966 = vpop.xlane.xlu0 %4965
      %v4967 = vadd.f32 %v4945, %v4946
      %4968 = vadd.xlane.f32.xlu0 %v4967
      %v4969 = vpop.xlane.xlu0 %4968
      %v4970 = vadd.f32 %v4947, %v4948
      %4971 = vadd.xlane.f32.xlu0 %v4970
      %v4972 = vpop.xlane.xlu0 %4971
      %v4973 = vmul.f32 %v4951, %v873
      %v4974 = vmul.f32 %v4954, %v873
      %v4975 = vmul.f32 %v4957, %v873
      %v4976 = vmul.f32 %v4960, %v873
      %v4977 = vmul.f32 %v4963, %v873
      %v4978 = vmul.f32 %v4966, %v873
      %v4979 = vmul.f32 %v4969, %v873
      %v4980 = vmul.f32 %v4972, %v873
      %v4981 = vmul.f32 %v4925, %v4925
      %v4982 = vmul.f32 %v4926, %v4926
      %v4983 = vmul.f32 %v4927, %v4927
      %v4984 = vmul.f32 %v4928, %v4928
      %v4985 = vmul.f32 %v4929, %v4929
      %v4986 = vmul.f32 %v4930, %v4930
      %v4987 = vmul.f32 %v4931, %v4931
      %v4988 = vmul.f32 %v4932, %v4932
      %v4989 = vsub.f32 %v4973, %v4981
      %v4990 = vsub.f32 %v4974, %v4982
      %v4991 = vsub.f32 %v4975, %v4983
      %v4992 = vsub.f32 %v4976, %v4984
      %v4993 = vsub.f32 %v4977, %v4985
      %v4994 = vsub.f32 %v4978, %v4986
      %v4995 = vsub.f32 %v4979, %v4987
      %v4996 = vsub.f32 %v4980, %v4988
      %v4997 = vmax.f32 %v4989, 0.0
      %v4998 = vmax.f32 %v4990, 0.0
      %v4999 = vmax.f32 %v4991, 0.0
      %v5000 = vmax.f32 %v4992, 0.0
      %v5001 = vmax.f32 %v4993, 0.0
      %v5002 = vmax.f32 %v4994, 0.0
      %v5003 = vmax.f32 %v4995, 0.0
      %v5004 = vmax.f32 %v4996, 0.0
      %v5005 = vsub.f32 %v4737, %v4925
      %v5006 = vsub.f32 %v4882, %v4925
      %v5007 = vsub.f32 %v4739, %v4926
      %v5008 = vsub.f32 %v4884, %v4926
      %v5009 = vsub.f32 %v4742, %v4927
      %v5010 = vsub.f32 %v4887, %v4927
      %v5011 = vsub.f32 %v4744, %v4928
      %v5012 = vsub.f32 %v4889, %v4928
      %v5013 = vsub.f32 %v4747, %v4929
      %v5014 = vsub.f32 %v4892, %v4929
      %v5015 = vsub.f32 %v4749, %v4930
      %v5016 = vsub.f32 %v4894, %v4930
      %v5017 = vsub.f32 %v4752, %v4931
      %v5018 = vsub.f32 %v4897, %v4931
      %v5019 = vsub.f32 %v4754, %v4932
      %v5020 = vsub.f32 %v4899, %v4932
      %v5021 = vadd.f32 %v4997, 1e-05
      %v5022 = vadd.f32 %v4998, 1e-05
      %v5023 = vadd.f32 %v4999, 1e-05
      %v5024 = vadd.f32 %v5000, 1e-05
      %v5025 = vadd.f32 %v5001, 1e-05
      %v5026 = vadd.f32 %v5002, 1e-05
      %v5027 = vadd.f32 %v5003, 1e-05
      %v5028 = vadd.f32 %v5004, 1e-05
      %v5029 = vrsqrt.pop %v5021
      %v5030 = vmul.f32 %v5029, %v5021
      %v5031 = vmul.f32 %v5030, %v5029
      %v5032 = vmul.f32 0.5, %v5031
      %v5033 = vsub.f32 1.5, %v5032
      %v5034 = vmul.f32 %v5029, %v5033
      %vm5035 = vweird.f32 %v5021
      %vm5036 = vweird.f32 %v5029
      %vm5037 = vmor %vm5035, %vm5036
      %v5038 = vsel %vm5037, %v5029, %v5034
      %v5039 = vrsqrt.pop %v5022
      %v5040 = vmul.f32 %v5039, %v5022
      %v5041 = vmul.f32 %v5040, %v5039
      %v5042 = vmul.f32 0.5, %v5041
      %v5043 = vsub.f32 1.5, %v5042
      %v5044 = vmul.f32 %v5039, %v5043
      %vm5045 = vweird.f32 %v5022
      %vm5046 = vweird.f32 %v5039
      %vm5047 = vmor %vm5045, %vm5046
      %v5048 = vsel %vm5047, %v5039, %v5044
      %v5049 = vrsqrt.pop %v5023
      %v5050 = vmul.f32 %v5049, %v5023
      %v5051 = vmul.f32 %v5050, %v5049
      %v5052 = vmul.f32 0.5, %v5051
      %v5053 = vsub.f32 1.5, %v5052
      %v5054 = vmul.f32 %v5049, %v5053
      %vm5055 = vweird.f32 %v5023
      %vm5056 = vweird.f32 %v5049
      %vm5057 = vmor %vm5055, %vm5056
      %v5058 = vsel %vm5057, %v5049, %v5054
      %v5059 = vrsqrt.pop %v5024
      %v5060 = vmul.f32 %v5059, %v5024
      %v5061 = vmul.f32 %v5060, %v5059
      %v5062 = vmul.f32 0.5, %v5061
      %v5063 = vsub.f32 1.5, %v5062
      %v5064 = vmul.f32 %v5059, %v5063
      %vm5065 = vweird.f32 %v5024
      %vm5066 = vweird.f32 %v5059
      %vm5067 = vmor %vm5065, %vm5066
      %v5068 = vsel %vm5067, %v5059, %v5064
      %v5069 = vrsqrt.pop %v5025
      %v5070 = vmul.f32 %v5069, %v5025
      %v5071 = vmul.f32 %v5070, %v5069
      %v5072 = vmul.f32 0.5, %v5071
      %v5073 = vsub.f32 1.5, %v5072
      %v5074 = vmul.f32 %v5069, %v5073
      %vm5075 = vweird.f32 %v5025
      %vm5076 = vweird.f32 %v5069
      %vm5077 = vmor %vm5075, %vm5076
      %v5078 = vsel %vm5077, %v5069, %v5074
      %v5079 = vrsqrt.pop %v5026
      %v5080 = vmul.f32 %v5079, %v5026
      %v5081 = vmul.f32 %v5080, %v5079
      %v5082 = vmul.f32 0.5, %v5081
      %v5083 = vsub.f32 1.5, %v5082
      %v5084 = vmul.f32 %v5079, %v5083
      %vm5085 = vweird.f32 %v5026
      %vm5086 = vweird.f32 %v5079
      %vm5087 = vmor %vm5085, %vm5086
      %v5088 = vsel %vm5087, %v5079, %v5084
      %v5089 = vrsqrt.pop %v5027
      %v5090 = vmul.f32 %v5089, %v5027
      %v5091 = vmul.f32 %v5090, %v5089
      %v5092 = vmul.f32 0.5, %v5091
      %v5093 = vsub.f32 1.5, %v5092
      %v5094 = vmul.f32 %v5089, %v5093
      %vm5095 = vweird.f32 %v5027
      %vm5096 = vweird.f32 %v5089
      %vm5097 = vmor %vm5095, %vm5096
      %v5098 = vsel %vm5097, %v5089, %v5094
      %v5099 = vrsqrt.pop %v5028
      %v5100 = vmul.f32 %v5099, %v5028
      %v5101 = vmul.f32 %v5100, %v5099
      %v5102 = vmul.f32 0.5, %v5101
      %v5103 = vsub.f32 1.5, %v5102
      %v5104 = vmul.f32 %v5099, %v5103
      %vm5105 = vweird.f32 %v5028
      %vm5106 = vweird.f32 %v5099
      %vm5107 = vmor %vm5105, %vm5106
      %v5108 = vsel %vm5107, %v5099, %v5104
      %v5109 = vmul.f32 %v5005, %v5038
      %v5110 = vmul.f32 %v5006, %v5038
      %v5111 = vmul.f32 %v5007, %v5048
      %v5112 = vmul.f32 %v5008, %v5048
      %v5113 = vmul.f32 %v5009, %v5058
      %v5114 = vmul.f32 %v5010, %v5058
      %v5115 = vmul.f32 %v5011, %v5068
      %v5116 = vmul.f32 %v5012, %v5068
      %v5117 = vmul.f32 %v5013, %v5078
      %v5118 = vmul.f32 %v5014, %v5078
      %v5119 = vmul.f32 %v5015, %v5088
      %v5120 = vmul.f32 %v5016, %v5088
      %v5121 = vmul.f32 %v5017, %v5098
      %v5122 = vmul.f32 %v5018, %v5098
      %v5123 = vmul.f32 %v5019, %v5108
      %v5124 = vmul.f32 %v5020, %v5108
      %v5125 = vmax.f32 %v5109, 0.0
      %v5126 = vmax.f32 %v5110, 0.0
      %v5127 = vmax.f32 %v5111, 0.0
      %v5128 = vmax.f32 %v5112, 0.0
      %v5129 = vmax.f32 %v5113, 0.0
      %v5130 = vmax.f32 %v5114, 0.0
      %v5131 = vmax.f32 %v5115, 0.0
      %v5132 = vmax.f32 %v5116, 0.0
      %v5133 = vmax.f32 %v5117, 0.0
      %v5134 = vmax.f32 %v5118, 0.0
      %v5135 = vmax.f32 %v5119, 0.0
      %v5136 = vmax.f32 %v5120, 0.0
      %v5137 = vmax.f32 %v5121, 0.0
      %v5138 = vmax.f32 %v5122, 0.0
      %v5139 = vmax.f32 %v5123, 0.0
      %v5140 = vmax.f32 %v5124, 0.0
      %v5141 = vpack.c.bf16 %v5126, %v5125
      %v5142 = vpack.c.bf16 %v5128, %v5127
      %v5143 = vpack.c.bf16 %v5130, %v5129
      %v5144 = vpack.c.bf16 %v5132, %v5131
      %v5145 = vpack.c.bf16 %v5134, %v5133
      %v5146 = vpack.c.bf16 %v5136, %v5135
      %v5147 = vpack.c.bf16 %v5138, %v5137
      %v5148 = vpack.c.bf16 %v5140, %v5139
      %v5149 = vld [vmem:[%s5] sm:$0xf]
      %v5158 = vunpack.c.l.b16 %v5141
      %v5159 = vunpack.c.h.b16 %v5141
      %v5160 = vunpack.c.l.b16 %v5142
      %v5161 = vunpack.c.h.b16 %v5142
      %v5162 = vunpack.c.l.b16 %v5143
      %v5163 = vunpack.c.h.b16 %v5143
      %v5164 = vunpack.c.l.b16 %v5144
      %v5165 = vunpack.c.h.b16 %v5144
      %v5166 = vunpack.c.l.b16 %v5145
      %v5167 = vunpack.c.h.b16 %v5145
      %v5168 = vunpack.c.l.b16 %v5146
      %v5169 = vunpack.c.h.b16 %v5146
      %v5170 = vunpack.c.l.b16 %v5147
      %v5171 = vunpack.c.h.b16 %v5147
      %v5172 = vunpack.c.l.b16 %v5148
      %v5173 = vunpack.c.h.b16 %v5148
      %v5174 = vpack.c.b16 %v5160, %v5158
      %v5175 = vpack.c.b16 %v5161, %v5159
      %v5176 = vpack.c.b16 %v5164, %v5162
      %v5177 = vpack.c.b16 %v5165, %v5163
      %v5178 = vpack.c.b16 %v5168, %v5166
      %v5179 = vpack.c.b16 %v5169, %v5167
      %v5180 = vpack.c.b16 %v5172, %v5170
      %v5181 = vpack.c.b16 %v5173, %v5171
      %v5190 = vsel %vm372, %v5174, 0
      %v5191 = vsel %vm379, %v5175, 0
      %v5192 = vsel %vm372, %v5176, 0
      %v5193 = vsel %vm379, %v5177, 0
      %v5194 = vsel %vm372, %v5178, 0
      %v5195 = vsel %vm379, %v5179, 0
      %v5196 = vsel %vm372, %v5180, 0
      %v5197 = vsel %vm379, %v5181, 0
      %v5198 = vsel %vm402, %v5174, 0
      %v5199 = vsel %vm409, %v5175, 0
      %v5200 = vsel %vm402, %v5176, 0
      %v5201 = vsel %vm409, %v5177, 0
      %v5202 = vsel %vm402, %v5178, 0
      %v5203 = vsel %vm409, %v5179, 0
      %v5204 = vsel %vm402, %v5180, 0
      %v5205 = vsel %vm409, %v5181, 0
      %v5206 = vsel %vm424, %v5174, 0
      %v5207 = vsel %vm431, %v5175, 0
      %v5208 = vsel %vm424, %v5176, 0
      %v5209 = vsel %vm431, %v5177, 0
      %v5210 = vsel %vm424, %v5178, 0
      %v5211 = vsel %vm431, %v5179, 0
      %v5212 = vsel %vm424, %v5180, 0
      %v5213 = vsel %vm431, %v5181, 0
      %v5214 = vsel %vm446, %v5174, 0
      %v5215 = vsel %vm453, %v5175, 0
      %v5216 = vsel %vm446, %v5176, 0
      %v5217 = vsel %vm453, %v5177, 0
      %v5218 = vsel %vm446, %v5178, 0
      %v5219 = vsel %vm453, %v5179, 0
      %v5220 = vsel %vm446, %v5180, 0
      %v5221 = vsel %vm453, %v5181, 0
      %v5222 = vsel %vm468, %v5174, 0
      %v5223 = vsel %vm475, %v5175, 0
      %v5224 = vsel %vm468, %v5176, 0
      %v5225 = vsel %vm475, %v5177, 0
      %v5226 = vsel %vm468, %v5178, 0
      %v5227 = vsel %vm475, %v5179, 0
      %v5228 = vsel %vm468, %v5180, 0
      %v5229 = vsel %vm475, %v5181, 0
      %v5230 = vsel %vm490, %v5174, 0
      %v5231 = vsel %vm497, %v5175, 0
      %v5232 = vsel %vm490, %v5176, 0
      %v5233 = vsel %vm497, %v5177, 0
      %v5234 = vsel %vm490, %v5178, 0
      %v5235 = vsel %vm497, %v5179, 0
      %v5236 = vsel %vm490, %v5180, 0
      %v5237 = vsel %vm497, %v5181, 0
      %5238 = vrot.lane.b32.xlu0 %v5174, 127
      %v5239 = vpop.permute.xlu0 %5238
      %5240 = vrot.lane.b32.xlu0 %v5175, 127
      %v5241 = vpop.permute.xlu0 %5240
      %5242 = vrot.lane.b32.xlu0 %v5176, 127
      %v5243 = vpop.permute.xlu0 %5242
      %5244 = vrot.lane.b32.xlu0 %v5177, 127
      %v5245 = vpop.permute.xlu0 %5244
      %5246 = vrot.lane.b32.xlu0 %v5178, 127
      %v5247 = vpop.permute.xlu0 %5246
      %5248 = vrot.lane.b32.xlu0 %v5179, 127
      %v5249 = vpop.permute.xlu0 %5248
      %5250 = vrot.lane.b32.xlu0 %v5180, 127
      %v5251 = vpop.permute.xlu0 %5250
      %5252 = vrot.lane.b32.xlu0 %v5181, 127
      %v5253 = vpop.permute.xlu0 %5252
      %v5254 = vsel %vm416, %v502, %v5239
      %v5255 = vsel %vm416, %v5239, %v5241
      %v5256 = vsel %vm416, %v502, %v5243
      %v5257 = vsel %vm416, %v5243, %v5245
      %v5258 = vsel %vm416, %v502, %v5247
      %v5259 = vsel %vm416, %v5247, %v5249
      %v5260 = vsel %vm416, %v502, %v5251
      %v5261 = vsel %vm416, %v5251, %v5253
      %5270 = vrot.lane.b32.xlu0 %v5198, 126
      %v5271 = vpop.permute.xlu0 %5270
      %5272 = vrot.lane.b32.xlu0 %v5199, 126
      %v5273 = vpop.permute.xlu0 %5272
      %5274 = vrot.lane.b32.xlu0 %v5200, 126
      %v5275 = vpop.permute.xlu0 %5274
      %5276 = vrot.lane.b32.xlu0 %v5201, 126
      %v5277 = vpop.permute.xlu0 %5276
      %5278 = vrot.lane.b32.xlu0 %v5202, 126
      %v5279 = vpop.permute.xlu0 %5278
      %5280 = vrot.lane.b32.xlu0 %v5203, 126
      %v5281 = vpop.permute.xlu0 %5280
      %5282 = vrot.lane.b32.xlu0 %v5204, 126
      %v5283 = vpop.permute.xlu0 %5282
      %5284 = vrot.lane.b32.xlu0 %v5205, 126
      %v5285 = vpop.permute.xlu0 %5284
      %v5286 = vsel %vm517, %v512, %v5271
      %v5287 = vsel %vm517, %v5271, %v5273
      %v5288 = vsel %vm517, %v512, %v5275
      %v5289 = vsel %vm517, %v5275, %v5277
      %v5290 = vsel %vm517, %v512, %v5279
      %v5291 = vsel %vm517, %v5279, %v5281
      %v5292 = vsel %vm517, %v512, %v5283
      %v5293 = vsel %vm517, %v5283, %v5285
      %5302 = vrot.lane.b32.xlu0 %v5206, 112
      %v5303 = vpop.permute.xlu0 %5302
      %5304 = vrot.lane.b32.xlu0 %v5207, 112
      %v5305 = vpop.permute.xlu0 %5304
      %5306 = vrot.lane.b32.xlu0 %v5208, 112
      %v5307 = vpop.permute.xlu0 %5306
      %5308 = vrot.lane.b32.xlu0 %v5209, 112
      %v5309 = vpop.permute.xlu0 %5308
      %5310 = vrot.lane.b32.xlu0 %v5210, 112
      %v5311 = vpop.permute.xlu0 %5310
      %5312 = vrot.lane.b32.xlu0 %v5211, 112
      %v5313 = vpop.permute.xlu0 %5312
      %5314 = vrot.lane.b32.xlu0 %v5212, 112
      %v5315 = vpop.permute.xlu0 %5314
      %5316 = vrot.lane.b32.xlu0 %v5213, 112
      %v5317 = vpop.permute.xlu0 %5316
      %v5318 = vsel %vm528, %v523, %v5303
      %v5319 = vsel %vm528, %v5303, %v5305
      %v5320 = vsel %vm528, %v523, %v5307
      %v5321 = vsel %vm528, %v5307, %v5309
      %v5322 = vsel %vm528, %v523, %v5311
      %v5323 = vsel %vm528, %v5311, %v5313
      %v5324 = vsel %vm528, %v523, %v5315
      %v5325 = vsel %vm528, %v5315, %v5317
      %5326 = vrot.lane.b32.xlu0 %v5174, 111
      %v5327 = vpop.permute.xlu0 %5326
      %5328 = vrot.lane.b32.xlu0 %v5175, 111
      %v5329 = vpop.permute.xlu0 %5328
      %5330 = vrot.lane.b32.xlu0 %v5176, 111
      %v5331 = vpop.permute.xlu0 %5330
      %5332 = vrot.lane.b32.xlu0 %v5177, 111
      %v5333 = vpop.permute.xlu0 %5332
      %5334 = vrot.lane.b32.xlu0 %v5178, 111
      %v5335 = vpop.permute.xlu0 %5334
      %5336 = vrot.lane.b32.xlu0 %v5179, 111
      %v5337 = vpop.permute.xlu0 %5336
      %5338 = vrot.lane.b32.xlu0 %v5180, 111
      %v5339 = vpop.permute.xlu0 %5338
      %5340 = vrot.lane.b32.xlu0 %v5181, 111
      %v5341 = vpop.permute.xlu0 %5340
      %v5342 = vsel %vm364, %v5327, %v5329
      %v5343 = vsel %vm364, %v5331, %v5333
      %v5344 = vsel %vm364, %v5335, %v5337
      %v5345 = vsel %vm364, %v5339, %v5341
      %5354 = vrot.lane.b32.xlu0 %v5214, 110
      %v5355 = vpop.permute.xlu0 %5354
      %5356 = vrot.lane.b32.xlu0 %v5215, 110
      %v5357 = vpop.permute.xlu0 %5356
      %5358 = vrot.lane.b32.xlu0 %v5216, 110
      %v5359 = vpop.permute.xlu0 %5358
      %5360 = vrot.lane.b32.xlu0 %v5217, 110
      %v5361 = vpop.permute.xlu0 %5360
      %5362 = vrot.lane.b32.xlu0 %v5218, 110
      %v5363 = vpop.permute.xlu0 %5362
      %5364 = vrot.lane.b32.xlu0 %v5219, 110
      %v5365 = vpop.permute.xlu0 %5364
      %5366 = vrot.lane.b32.xlu0 %v5220, 110
      %v5367 = vpop.permute.xlu0 %5366
      %5368 = vrot.lane.b32.xlu0 %v5221, 110
      %v5369 = vpop.permute.xlu0 %5368
      %v5370 = vsel %vm544, %v5355, %v5357
      %v5371 = vsel %vm544, %v5357, %v543
      %v5372 = vsel %vm544, %v5359, %v5361
      %v5373 = vsel %vm544, %v5361, %v543
      %v5374 = vsel %vm544, %v5363, %v5365
      %v5375 = vsel %vm544, %v5365, %v543
      %v5376 = vsel %vm544, %v5367, %v5369
      %v5377 = vsel %vm544, %v5369, %v543
      %5386 = vrot.lane.b32.xlu0 %v5222, 96
      %v5387 = vpop.permute.xlu0 %5386
      %5388 = vrot.lane.b32.xlu0 %v5223, 96
      %v5389 = vpop.permute.xlu0 %5388
      %5390 = vrot.lane.b32.xlu0 %v5224, 96
      %v5391 = vpop.permute.xlu0 %5390
      %5392 = vrot.lane.b32.xlu0 %v5225, 96
      %v5393 = vpop.permute.xlu0 %5392
      %5394 = vrot.lane.b32.xlu0 %v5226, 96
      %v5395 = vpop.permute.xlu0 %5394
      %5396 = vrot.lane.b32.xlu0 %v5227, 96
      %v5397 = vpop.permute.xlu0 %5396
      %5398 = vrot.lane.b32.xlu0 %v5228, 96
      %v5399 = vpop.permute.xlu0 %5398
      %5400 = vrot.lane.b32.xlu0 %v5229, 96
      %v5401 = vpop.permute.xlu0 %5400
      %v5402 = vsel %vm555, %v5387, %v5389
      %v5403 = vsel %vm555, %v5389, %v554
      %v5404 = vsel %vm555, %v5391, %v5393
      %v5405 = vsel %vm555, %v5393, %v554
      %v5406 = vsel %vm555, %v5395, %v5397
      %v5407 = vsel %vm555, %v5397, %v554
      %v5408 = vsel %vm555, %v5399, %v5401
      %v5409 = vsel %vm555, %v5401, %v554
      %5410 = vrot.lane.b32.xlu0 %v5174, 95
      %v5411 = vpop.permute.xlu0 %5410
      %5412 = vrot.lane.b32.xlu0 %v5175, 95
      %v5413 = vpop.permute.xlu0 %5412
      %5414 = vrot.lane.b32.xlu0 %v5176, 95
      %v5415 = vpop.permute.xlu0 %5414
      %5416 = vrot.lane.b32.xlu0 %v5177, 95
      %v5417 = vpop.permute.xlu0 %5416
      %5418 = vrot.lane.b32.xlu0 %v5178, 95
      %v5419 = vpop.permute.xlu0 %5418
      %5420 = vrot.lane.b32.xlu0 %v5179, 95
      %v5421 = vpop.permute.xlu0 %5420
      %5422 = vrot.lane.b32.xlu0 %v5180, 95
      %v5423 = vpop.permute.xlu0 %5422
      %5424 = vrot.lane.b32.xlu0 %v5181, 95
      %v5425 = vpop.permute.xlu0 %5424
      %v5426 = vsel %vm564, %v5411, %v5413
      %v5427 = vsel %vm564, %v5413, %v563
      %v5428 = vsel %vm564, %v5415, %v5417
      %v5429 = vsel %vm564, %v5417, %v563
      %v5430 = vsel %vm564, %v5419, %v5421
      %v5431 = vsel %vm564, %v5421, %v563
      %v5432 = vsel %vm564, %v5423, %v5425
      %v5433 = vsel %vm564, %v5425, %v563
      %5442 = vrot.lane.b32.xlu0 %v5230, 94
      %v5443 = vpop.permute.xlu0 %5442
      %5444 = vrot.lane.b32.xlu0 %v5231, 94
      %v5445 = vpop.permute.xlu0 %5444
      %5446 = vrot.lane.b32.xlu0 %v5232, 94
      %v5447 = vpop.permute.xlu0 %5446
      %5448 = vrot.lane.b32.xlu0 %v5233, 94
      %v5449 = vpop.permute.xlu0 %5448
      %5450 = vrot.lane.b32.xlu0 %v5234, 94
      %v5451 = vpop.permute.xlu0 %5450
      %5452 = vrot.lane.b32.xlu0 %v5235, 94
      %v5453 = vpop.permute.xlu0 %5452
      %5454 = vrot.lane.b32.xlu0 %v5236, 94
      %v5455 = vpop.permute.xlu0 %5454
      %5456 = vrot.lane.b32.xlu0 %v5237, 94
      %v5457 = vpop.permute.xlu0 %5456
      %v5458 = vsel %vm575, %v5443, %v5445
      %v5459 = vsel %vm575, %v5445, %v574
      %v5460 = vsel %vm575, %v5447, %v5449
      %v5461 = vsel %vm575, %v5449, %v574
      %v5462 = vsel %vm575, %v5451, %v5453
      %v5463 = vsel %vm575, %v5453, %v574
      %v5464 = vsel %vm575, %v5455, %v5457
      %v5465 = vsel %vm575, %v5457, %v574
      %v5466 = vld [vmem:[%s6] sm:$0xff]
      %v5467 = vld [vmem:[%s6 + $0x8] sm:$0x3]
      %5469 = vst [vmem:[#allocation1] ss:$4 sm:$0xff] %v5466
      %s5471 = scalar_lea.vmem [#allocation1], 32
      %5472 = vst [vmem:[%s5471] ss:$4 sm:$0xff] %v5467
      %v5473 = vld.sshfl [vmem:[#allocation1] sm:$0xff pattern:$0x73625140]
      %v5474 = vld.sshfl [vmem:[#allocation1 + $0x8] sm:$0xff pattern:$0x73625140]
      %v5475 = vld.sshfl [vmem:[#allocation1 + $0x10] sm:$0xff pattern:$0x73625140]
      %v5476 = vld.sshfl [vmem:[#allocation1 + $0x18] sm:$0xff pattern:$0x73625140]
      %v5477 = vld.sshfl [vmem:[#allocation1 + $0x20] sm:$0xff pattern:$0x73625140]
      %5490 = vrot.lane.b32.xlu0 %v5190, 17
      %v5491 = vpop.permute.xlu0 %5490
      %5492 = vrot.lane.b32.xlu0 %v5191, 17
      %v5493 = vpop.permute.xlu0 %5492
      %5494 = vrot.lane.b32.xlu0 %v5192, 17
      %v5495 = vpop.permute.xlu0 %5494
      %5496 = vrot.lane.b32.xlu0 %v5193, 17
      %v5497 = vpop.permute.xlu0 %5496
      %5498 = vrot.lane.b32.xlu0 %v5194, 17
      %v5499 = vpop.permute.xlu0 %5498
      %5500 = vrot.lane.b32.xlu0 %v5195, 17
      %v5501 = vpop.permute.xlu0 %5500
      %5502 = vrot.lane.b32.xlu0 %v5196, 17
      %v5503 = vpop.permute.xlu0 %5502
      %5504 = vrot.lane.b32.xlu0 %v5197, 17
      %v5505 = vpop.permute.xlu0 %5504
      %5506 = vrot.lane.b32.xlu0 %v5254, 17
      %v5507 = vpop.permute.xlu0 %5506
      %5508 = vrot.lane.b32.xlu0 %v5255, 17
      %v5509 = vpop.permute.xlu0 %5508
      %5510 = vrot.lane.b32.xlu0 %v5241, 17
      %v5511 = vpop.permute.xlu0 %5510
      %5512 = vrot.lane.b32.xlu0 %v5256, 17
      %v5513 = vpop.permute.xlu0 %5512
      %5514 = vrot.lane.b32.xlu0 %v5257, 17
      %v5515 = vpop.permute.xlu0 %5514
      %5516 = vrot.lane.b32.xlu0 %v5245, 17
      %v5517 = vpop.permute.xlu0 %5516
      %5518 = vrot.lane.b32.xlu0 %v5258, 17
      %v5519 = vpop.permute.xlu0 %5518
      %5520 = vrot.lane.b32.xlu0 %v5259, 17
      %v5521 = vpop.permute.xlu0 %5520
      %5522 = vrot.lane.b32.xlu0 %v5249, 17
      %v5523 = vpop.permute.xlu0 %5522
      %5524 = vrot.lane.b32.xlu0 %v5260, 17
      %v5525 = vpop.permute.xlu0 %5524
      %5526 = vrot.lane.b32.xlu0 %v5261, 17
      %v5527 = vpop.permute.xlu0 %5526
      %5528 = vrot.lane.b32.xlu0 %v5253, 17
      %v5529 = vpop.permute.xlu0 %5528
      %5530 = vrot.lane.b32.xlu0 %v5286, 17
      %v5531 = vpop.permute.xlu0 %5530
      %5532 = vrot.lane.b32.xlu0 %v5287, 17
      %v5533 = vpop.permute.xlu0 %5532
      %5534 = vrot.lane.b32.xlu0 %v5273, 17
      %v5535 = vpop.permute.xlu0 %5534
      %5536 = vrot.lane.b32.xlu0 %v5288, 17
      %v5537 = vpop.permute.xlu0 %5536
      %5538 = vrot.lane.b32.xlu0 %v5289, 17
      %v5539 = vpop.permute.xlu0 %5538
      %5540 = vrot.lane.b32.xlu0 %v5277, 17
      %v5541 = vpop.permute.xlu0 %5540
      %5542 = vrot.lane.b32.xlu0 %v5290, 17
      %v5543 = vpop.permute.xlu0 %5542
      %5544 = vrot.lane.b32.xlu0 %v5291, 17
      %v5545 = vpop.permute.xlu0 %5544
      %5546 = vrot.lane.b32.xlu0 %v5281, 17
      %v5547 = vpop.permute.xlu0 %5546
      %5548 = vrot.lane.b32.xlu0 %v5292, 17
      %v5549 = vpop.permute.xlu0 %5548
      %5550 = vrot.lane.b32.xlu0 %v5293, 17
      %v5551 = vpop.permute.xlu0 %5550
      %5552 = vrot.lane.b32.xlu0 %v5285, 17
      %v5553 = vpop.permute.xlu0 %5552
      %5554 = vrot.lane.b32.xlu0 %v5318, 17
      %v5555 = vpop.permute.xlu0 %5554
      %5556 = vrot.lane.b32.xlu0 %v5319, 17
      %v5557 = vpop.permute.xlu0 %5556
      %5558 = vrot.lane.b32.xlu0 %v5305, 17
      %v5559 = vpop.permute.xlu0 %5558
      %5560 = vrot.lane.b32.xlu0 %v5320, 17
      %v5561 = vpop.permute.xlu0 %5560
      %5562 = vrot.lane.b32.xlu0 %v5321, 17
      %v5563 = vpop.permute.xlu0 %5562
      %5564 = vrot.lane.b32.xlu0 %v5309, 17
      %v5565 = vpop.permute.xlu0 %5564
      %5566 = vrot.lane.b32.xlu0 %v5322, 17
      %v5567 = vpop.permute.xlu0 %5566
      %5568 = vrot.lane.b32.xlu0 %v5323, 17
      %v5569 = vpop.permute.xlu0 %5568
      %5570 = vrot.lane.b32.xlu0 %v5313, 17
      %v5571 = vpop.permute.xlu0 %5570
      %5572 = vrot.lane.b32.xlu0 %v5324, 17
      %v5573 = vpop.permute.xlu0 %5572
      %5574 = vrot.lane.b32.xlu0 %v5325, 17
      %v5575 = vpop.permute.xlu0 %5574
      %5576 = vrot.lane.b32.xlu0 %v5317, 17
      %v5577 = vpop.permute.xlu0 %5576
      %5578 = vrot.lane.b32.xlu0 %v5327, 17
      %v5579 = vpop.permute.xlu0 %5578
      %5580 = vrot.lane.b32.xlu0 %v5342, 17
      %v5581 = vpop.permute.xlu0 %5580
      %5582 = vrot.lane.b32.xlu0 %v5329, 17
      %v5583 = vpop.permute.xlu0 %5582
      %5584 = vrot.lane.b32.xlu0 %v5331, 17
      %v5585 = vpop.permute.xlu0 %5584
      %5586 = vrot.lane.b32.xlu0 %v5343, 17
      %v5587 = vpop.permute.xlu0 %5586
      %5588 = vrot.lane.b32.xlu0 %v5333, 17
      %v5589 = vpop.permute.xlu0 %5588
      %5590 = vrot.lane.b32.xlu0 %v5335, 17
      %v5591 = vpop.permute.xlu0 %5590
      %5592 = vrot.lane.b32.xlu0 %v5344, 17
      %v5593 = vpop.permute.xlu0 %5592
      %5594 = vrot.lane.b32.xlu0 %v5337, 17
      %v5595 = vpop.permute.xlu0 %5594
      %5596 = vrot.lane.b32.xlu0 %v5339, 17
      %v5597 = vpop.permute.xlu0 %5596
      %5598 = vrot.lane.b32.xlu0 %v5345, 17
      %v5599 = vpop.permute.xlu0 %5598
      %5600 = vrot.lane.b32.xlu0 %v5341, 17
      %v5601 = vpop.permute.xlu0 %5600
      %5602 = vrot.lane.b32.xlu0 %v5355, 17
      %v5603 = vpop.permute.xlu0 %5602
      %5604 = vrot.lane.b32.xlu0 %v5370, 17
      %v5605 = vpop.permute.xlu0 %5604
      %5606 = vrot.lane.b32.xlu0 %v5371, 17
      %v5607 = vpop.permute.xlu0 %5606
      %5608 = vrot.lane.b32.xlu0 %v5359, 17
      %v5609 = vpop.permute.xlu0 %5608
      %5610 = vrot.lane.b32.xlu0 %v5372, 17
      %v5611 = vpop.permute.xlu0 %5610
      %5612 = vrot.lane.b32.xlu0 %v5373, 17
      %v5613 = vpop.permute.xlu0 %5612
      %5614 = vrot.lane.b32.xlu0 %v5363, 17
      %v5615 = vpop.permute.xlu0 %5614
      %5616 = vrot.lane.b32.xlu0 %v5374, 17
      %v5617 = vpop.permute.xlu0 %5616
      %5618 = vrot.lane.b32.xlu0 %v5375, 17
      %v5619 = vpop.permute.xlu0 %5618
      %5620 = vrot.lane.b32.xlu0 %v5367, 17
      %v5621 = vpop.permute.xlu0 %5620
      %5622 = vrot.lane.b32.xlu0 %v5376, 17
      %v5623 = vpop.permute.xlu0 %5622
      %5624 = vrot.lane.b32.xlu0 %v5377, 17
      %v5625 = vpop.permute.xlu0 %5624
      %5626 = vrot.lane.b32.xlu0 %v5387, 17
      %v5627 = vpop.permute.xlu0 %5626
      %5628 = vrot.lane.b32.xlu0 %v5402, 17
      %v5629 = vpop.permute.xlu0 %5628
      %5630 = vrot.lane.b32.xlu0 %v5403, 17
      %v5631 = vpop.permute.xlu0 %5630
      %5632 = vrot.lane.b32.xlu0 %v5391, 17
      %v5633 = vpop.permute.xlu0 %5632
      %5634 = vrot.lane.b32.xlu0 %v5404, 17
      %v5635 = vpop.permute.xlu0 %5634
      %5636 = vrot.lane.b32.xlu0 %v5405, 17
      %v5637 = vpop.permute.xlu0 %5636
      %5638 = vrot.lane.b32.xlu0 %v5395, 17
      %v5639 = vpop.permute.xlu0 %5638
      %5640 = vrot.lane.b32.xlu0 %v5406, 17
      %v5641 = vpop.permute.xlu0 %5640
      %5642 = vrot.lane.b32.xlu0 %v5407, 17
      %v5643 = vpop.permute.xlu0 %5642
      %5644 = vrot.lane.b32.xlu0 %v5399, 17
      %v5645 = vpop.permute.xlu0 %5644
      %5646 = vrot.lane.b32.xlu0 %v5408, 17
      %v5647 = vpop.permute.xlu0 %5646
      %5648 = vrot.lane.b32.xlu0 %v5409, 17
      %v5649 = vpop.permute.xlu0 %5648
      %5650 = vrot.lane.b32.xlu0 %v5411, 17
      %v5651 = vpop.permute.xlu0 %5650
      %5652 = vrot.lane.b32.xlu0 %v5426, 17
      %v5653 = vpop.permute.xlu0 %5652
      %5654 = vrot.lane.b32.xlu0 %v5427, 17
      %v5655 = vpop.permute.xlu0 %5654
      %5656 = vrot.lane.b32.xlu0 %v5415, 17
      %v5657 = vpop.permute.xlu0 %5656
      %5658 = vrot.lane.b32.xlu0 %v5428, 17
      %v5659 = vpop.permute.xlu0 %5658
      %5660 = vrot.lane.b32.xlu0 %v5429, 17
      %v5661 = vpop.permute.xlu0 %5660
      %5662 = vrot.lane.b32.xlu0 %v5419, 17
      %v5663 = vpop.permute.xlu0 %5662
      %5664 = vrot.lane.b32.xlu0 %v5430, 17
      %v5665 = vpop.permute.xlu0 %5664
      %5666 = vrot.lane.b32.xlu0 %v5431, 17
      %v5667 = vpop.permute.xlu0 %5666
      %5668 = vrot.lane.b32.xlu0 %v5423, 17
      %v5669 = vpop.permute.xlu0 %5668
      %5670 = vrot.lane.b32.xlu0 %v5432, 17
      %v5671 = vpop.permute.xlu0 %5670
      %5672 = vrot.lane.b32.xlu0 %v5433, 17
      %v5673 = vpop.permute.xlu0 %5672
      %5674 = vrot.lane.b32.xlu0 %v5443, 17
      %v5675 = vpop.permute.xlu0 %5674
      %5676 = vrot.lane.b32.xlu0 %v5458, 17
      %v5677 = vpop.permute.xlu0 %5676
      %5678 = vrot.lane.b32.xlu0 %v5459, 17
      %v5679 = vpop.permute.xlu0 %5678
      %5680 = vrot.lane.b32.xlu0 %v5447, 17
      %v5681 = vpop.permute.xlu0 %5680
      %5682 = vrot.lane.b32.xlu0 %v5460, 17
      %v5683 = vpop.permute.xlu0 %5682
      %5684 = vrot.lane.b32.xlu0 %v5461, 17
      %v5685 = vpop.permute.xlu0 %5684
      %5686 = vrot.lane.b32.xlu0 %v5451, 17
      %v5687 = vpop.permute.xlu0 %5686
      %5688 = vrot.lane.b32.xlu0 %v5462, 17
      %v5689 = vpop.permute.xlu0 %5688
      %5690 = vrot.lane.b32.xlu0 %v5463, 17
      %v5691 = vpop.permute.xlu0 %5690
      %5692 = vrot.lane.b32.xlu0 %v5455, 17
      %v5693 = vpop.permute.xlu0 %5692
      %5694 = vrot.lane.b32.xlu0 %v5464, 17
      %v5695 = vpop.permute.xlu0 %5694
      %5696 = vrot.lane.b32.xlu0 %v5465, 17
      %v5697 = vpop.permute.xlu0 %5696
      %v5698 = vsel %vm482, %v625, %v5491
      %v5699 = vsel %vm482, %v5491, %v5493
      %v5700 = vsel %vm482, %v625, %v5495
      %v5701 = vsel %vm482, %v5495, %v5497
      %v5702 = vsel %vm482, %v625, %v5499
      %v5703 = vsel %vm482, %v5499, %v5501
      %v5704 = vsel %vm482, %v625, %v5503
      %v5705 = vsel %vm482, %v5503, %v5505
      %v5706 = vsel %vm482, %v5507, %v5509
      %v5707 = vsel %vm482, %v5509, %v5511
      %v5708 = vsel %vm482, %v5513, %v5515
      %v5709 = vsel %vm482, %v5515, %v5517
      %v5710 = vsel %vm482, %v5519, %v5521
      %v5711 = vsel %vm482, %v5521, %v5523
      %v5712 = vsel %vm482, %v5525, %v5527
      %v5713 = vsel %vm482, %v5527, %v5529
      %v5714 = vsel %vm482, %v5531, %v5533
      %v5715 = vsel %vm482, %v5533, %v5535
      %v5716 = vsel %vm482, %v5537, %v5539
      %v5717 = vsel %vm482, %v5539, %v5541
      %v5718 = vsel %vm482, %v5543, %v5545
      %v5719 = vsel %vm482, %v5545, %v5547
      %v5720 = vsel %vm482, %v5549, %v5551
      %v5721 = vsel %vm482, %v5551, %v5553
      %v5722 = vsel %vm482, %v5555, %v5557
      %v5723 = vsel %vm482, %v5557, %v5559
      %v5724 = vsel %vm482, %v5561, %v5563
      %v5725 = vsel %vm482, %v5563, %v5565
      %v5726 = vsel %vm482, %v5567, %v5569
      %v5727 = vsel %vm482, %v5569, %v5571
      %v5728 = vsel %vm482, %v5573, %v5575
      %v5729 = vsel %vm482, %v5575, %v5577
      %v5730 = vsel %vm482, %v5579, %v5581
      %v5731 = vsel %vm482, %v5581, %v5583
      %v5732 = vsel %vm482, %v5585, %v5587
      %v5733 = vsel %vm482, %v5587, %v5589
      %v5734 = vsel %vm482, %v5591, %v5593
      %v5735 = vsel %vm482, %v5593, %v5595
      %v5736 = vsel %vm482, %v5597, %v5599
      %v5737 = vsel %vm482, %v5599, %v5601
      %v5738 = vsel %vm482, %v5603, %v5605
      %v5739 = vsel %vm482, %v5605, %v5607
      %v5740 = vsel %vm482, %v5609, %v5611
      %v5741 = vsel %vm482, %v5611, %v5613
      %v5742 = vsel %vm482, %v5615, %v5617
      %v5743 = vsel %vm482, %v5617, %v5619
      %v5744 = vsel %vm482, %v5621, %v5623
      %v5745 = vsel %vm482, %v5623, %v5625
      %v5746 = vsel %vm482, %v5627, %v5629
      %v5747 = vsel %vm482, %v5629, %v5631
      %v5748 = vsel %vm482, %v5633, %v5635
      %v5749 = vsel %vm482, %v5635, %v5637
      %v5750 = vsel %vm482, %v5639, %v5641
      %v5751 = vsel %vm482, %v5641, %v5643
      %v5752 = vsel %vm482, %v5645, %v5647
      %v5753 = vsel %vm482, %v5647, %v5649
      %v5754 = vsel %vm482, %v5651, %v5653
      %v5755 = vsel %vm482, %v5653, %v5655
      %v5756 = vsel %vm482, %v5657, %v5659
      %v5757 = vsel %vm482, %v5659, %v5661
      %v5758 = vsel %vm482, %v5663, %v5665
      %v5759 = vsel %vm482, %v5665, %v5667
      %v5760 = vsel %vm482, %v5669, %v5671
      %v5761 = vsel %vm482, %v5671, %v5673
      %v5762 = vsel %vm482, %v5675, %v5677
      %v5763 = vsel %vm482, %v5677, %v5679
      %v5764 = vsel %vm482, %v5681, %v5683
      %v5765 = vsel %vm482, %v5683, %v5685
      %v5766 = vsel %vm482, %v5687, %v5689
      %v5767 = vsel %vm482, %v5689, %v5691
      %v5768 = vsel %vm482, %v5693, %v5695
      %v5769 = vsel %vm482, %v5695, %v5697
      %v5842 = vsel %vm1898, %v5477, 0
      %5844 = vmatpush.bf16.msra.mxu0 %v5712
      %5845 = vmatpush.bf16.msra.mxu0 %v5710
      %5846 = vmatpush.bf16.msra.mxu0 %v5708
      %5847 = vmatpush.bf16.msra.mxu0 %v5706
      %5848 = vmatpush.bf16.msra.mxu0 %v5704
      %5849 = vmatpush.bf16.msra.mxu0 %v5702
      %5850 = vmatpush.bf16.msra.mxu0 %v5700
      %5851 = vmatpush.bf16.msra.mxu0 %v5698
      %5852 = vmatmul.bf16.gmra.mxu0 %v5473
      %v5853 = vpop.f32.mrf.mxu0
      %v5854 = vadd.f32 0.0, %v5853
      %v5855 = vpop.f32.mrf.mxu0
      %5856 = vdwg.mxu0
      %5857 = vmatpush.bf16.msra.mxu0 %v5728
      %5858 = vmatpush.bf16.msra.mxu0 %v5726
      %5859 = vmatpush.bf16.msra.mxu0 %v5724
      %5860 = vmatpush.bf16.msra.mxu0 %v5722
      %5861 = vmatpush.bf16.msra.mxu0 %v5720
      %5862 = vmatpush.bf16.msra.mxu0 %v5718
      %5863 = vmatpush.bf16.msra.mxu0 %v5716
      %5864 = vmatpush.bf16.msra.mxu0 %v5714
      %5865 = vmatmul.bf16.gmra.mxu0 %v5474
      %v5866 = vpop.f32.mrf.mxu0
      %v5867 = vadd.f32 %v5854, %v5866
      %v5868 = vpop.f32.mrf.mxu0
      %5869 = vdwg.mxu0
      %5870 = vmatpush.bf16.msra.mxu0 %v5744
      %5871 = vmatpush.bf16.msra.mxu0 %v5742
      %5872 = vmatpush.bf16.msra.mxu0 %v5740
      %5873 = vmatpush.bf16.msra.mxu0 %v5738
      %5874 = vmatpush.bf16.msra.mxu0 %v5736
      %5875 = vmatpush.bf16.msra.mxu0 %v5734
      %5876 = vmatpush.bf16.msra.mxu0 %v5732
      %5877 = vmatpush.bf16.msra.mxu0 %v5730
      %5878 = vmatmul.bf16.gmra.mxu0 %v5475
      %v5879 = vpop.f32.mrf.mxu0
      %v5880 = vadd.f32 %v5867, %v5879
      %v5881 = vpop.f32.mrf.mxu0
      %5882 = vdwg.mxu0
      %5883 = vmatpush.bf16.msra.mxu0 %v5760
      %5884 = vmatpush.bf16.msra.mxu0 %v5758
      %5885 = vmatpush.bf16.msra.mxu0 %v5756
      %5886 = vmatpush.bf16.msra.mxu0 %v5754
      %5887 = vmatpush.bf16.msra.mxu0 %v5752
      %5888 = vmatpush.bf16.msra.mxu0 %v5750
      %5889 = vmatpush.bf16.msra.mxu0 %v5748
      %5890 = vmatpush.bf16.msra.mxu0 %v5746
      %5891 = vmatmul.bf16.gmra.mxu0 %v5476
      %v5892 = vpop.f32.mrf.mxu0
      %v5893 = vadd.f32 %v5880, %v5892
      %v5894 = vpop.f32.mrf.mxu0
      %5895 = vdwg.mxu0
      %5896 = vmatpush.bf16.msra.mxu0 0
      %5897 = vmatpush.bf16.msra.mxu0 0
      %5898 = vmatpush.bf16.msra.mxu0 0
      %5899 = vmatpush.bf16.msra.mxu0 0
      %5900 = vmatpush.bf16.msra.mxu0 %v5768
      %5901 = vmatpush.bf16.msra.mxu0 %v5766
      %5902 = vmatpush.bf16.msra.mxu0 %v5764
      %5903 = vmatpush.bf16.msra.mxu0 %v5762
      %5904 = vmatmul.bf16.gmra.mxu0 %v5842
      %v5905 = vpop.f32.mrf.mxu0
      %v5906 = vadd.f32 %v5893, %v5905
      %v5907 = vpop.f32.mrf.mxu0
      %5908 = vdwg.mxu0
      %5909 = vmatpush.bf16.msra.mxu0 %v5713
      %5910 = vmatpush.bf16.msra.mxu0 %v5711
      %5911 = vmatpush.bf16.msra.mxu0 %v5709
      %5912 = vmatpush.bf16.msra.mxu0 %v5707
      %5913 = vmatpush.bf16.msra.mxu0 %v5705
      %5914 = vmatpush.bf16.msra.mxu0 %v5703
      %5915 = vmatpush.bf16.msra.mxu0 %v5701
      %5916 = vmatpush.bf16.msra.mxu0 %v5699
      %5917 = vmatmul.bf16.gmra.mxu0 %v5473
      %v5918 = vpop.f32.mrf.mxu0
      %v5919 = vadd.f32 0.0, %v5918
      %v5920 = vpop.f32.mrf.mxu0
      %5921 = vdwg.mxu0
      %5922 = vmatpush.bf16.msra.mxu0 %v5729
      %5923 = vmatpush.bf16.msra.mxu0 %v5727
      %5924 = vmatpush.bf16.msra.mxu0 %v5725
      %5925 = vmatpush.bf16.msra.mxu0 %v5723
      %5926 = vmatpush.bf16.msra.mxu0 %v5721
      %5927 = vmatpush.bf16.msra.mxu0 %v5719
      %5928 = vmatpush.bf16.msra.mxu0 %v5717
      %5929 = vmatpush.bf16.msra.mxu0 %v5715
      %5930 = vmatmul.bf16.gmra.mxu0 %v5474
      %v5931 = vpop.f32.mrf.mxu0
      %v5932 = vadd.f32 %v5919, %v5931
      %v5933 = vpop.f32.mrf.mxu0
      %5934 = vdwg.mxu0
      %5935 = vmatpush.bf16.msra.mxu0 %v5745
      %5936 = vmatpush.bf16.msra.mxu0 %v5743
      %5937 = vmatpush.bf16.msra.mxu0 %v5741
      %5938 = vmatpush.bf16.msra.mxu0 %v5739
      %5939 = vmatpush.bf16.msra.mxu0 %v5737
      %5940 = vmatpush.bf16.msra.mxu0 %v5735
      %5941 = vmatpush.bf16.msra.mxu0 %v5733
      %5942 = vmatpush.bf16.msra.mxu0 %v5731
      %5943 = vmatmul.bf16.gmra.mxu0 %v5475
      %v5944 = vpop.f32.mrf.mxu0
      %v5945 = vadd.f32 %v5932, %v5944
      %v5946 = vpop.f32.mrf.mxu0
      %5947 = vdwg.mxu0
      %5948 = vmatpush.bf16.msra.mxu0 %v5761
      %5949 = vmatpush.bf16.msra.mxu0 %v5759
      %5950 = vmatpush.bf16.msra.mxu0 %v5757
      %5951 = vmatpush.bf16.msra.mxu0 %v5755
      %5952 = vmatpush.bf16.msra.mxu0 %v5753
      %5953 = vmatpush.bf16.msra.mxu0 %v5751
      %5954 = vmatpush.bf16.msra.mxu0 %v5749
      %5955 = vmatpush.bf16.msra.mxu0 %v5747
      %5956 = vmatmul.bf16.gmra.mxu0 %v5476
      %v5957 = vpop.f32.mrf.mxu0
      %v5958 = vadd.f32 %v5945, %v5957
      %v5959 = vpop.f32.mrf.mxu0
      %5960 = vdwg.mxu0
      %5961 = vmatpush.bf16.msra.mxu0 0
      %5962 = vmatpush.bf16.msra.mxu0 0
      %5963 = vmatpush.bf16.msra.mxu0 0
      %5964 = vmatpush.bf16.msra.mxu0 0
      %5965 = vmatpush.bf16.msra.mxu0 %v5769
      %5966 = vmatpush.bf16.msra.mxu0 %v5767
      %5967 = vmatpush.bf16.msra.mxu0 %v5765
      %5968 = vmatpush.bf16.msra.mxu0 %v5763
      %5969 = vmatmul.bf16.gmra.mxu0 %v5842
      %v5970 = vpop.f32.mrf.mxu0
      %v5971 = vadd.f32 %v5958, %v5970
      %v5972 = vpop.f32.mrf.mxu0
      %5973 = vdwg.mxu0
      %5975 = vst [vmem:[#allocation1] ss:$4 sm:$0xff] %v5149
      %v5976 = vld.sshfl [vmem:[#allocation1] sm:$0xff pattern:$0x73625140]
      %v5977 = vld.sshfl [vmem:[#allocation1 + $0x8] sm:$0xff pattern:$0x73625140]
      %v5979 = vsel %vm714, %v5977, 0
      %5981 = vmatpush.bf16.msra.mxu0 %v692
      %5982 = vmatpush.bf16.msra.mxu0 %v690
      %5983 = vmatpush.bf16.msra.mxu0 %v688
      %5984 = vmatpush.bf16.msra.mxu0 %v686
      %5985 = vmatpush.bf16.msra.mxu0 %v684
      %5986 = vmatpush.bf16.msra.mxu0 %v682
      %5987 = vmatpush.bf16.msra.mxu0 %v680
      %5988 = vmatpush.bf16.msra.mxu0 %v678
      %5989 = vmatmul.bf16.gmra.mxu0 %v5976
      %v5990 = vpop.f32.mrf.mxu0
      %v5991 = vadd.f32 %v5906, %v5990
      %v5992 = vpop.f32.mrf.mxu0
      %5993 = vdwg.mxu0
      %5994 = vmatpush.bf16.msra.mxu0 0
      %5995 = vmatpush.bf16.msra.mxu0 0
      %5996 = vmatpush.bf16.msra.mxu0 0
      %5997 = vmatpush.bf16.msra.mxu0 0
      %5998 = vmatpush.bf16.msra.mxu0 0
      %5999 = vmatpush.bf16.msra.mxu0 0
      %6000 = vmatpush.bf16.msra.mxu0 0
      %6001 = vmatpush.bf16.msra.mxu0 %v694
      %6002 = vmatmul.bf16.gmra.mxu0 %v5979
      %v6003 = vpop.f32.mrf.mxu0
      %v6004 = vadd.f32 %v5991, %v6003
      %v6005 = vpop.f32.mrf.mxu0
      %6006 = vdwg.mxu0
      %6007 = vmatpush.bf16.msra.mxu0 %v693
      %6008 = vmatpush.bf16.msra.mxu0 %v691
      %6009 = vmatpush.bf16.msra.mxu0 %v689
      %6010 = vmatpush.bf16.msra.mxu0 %v687
      %6011 = vmatpush.bf16.msra.mxu0 %v685
      %6012 = vmatpush.bf16.msra.mxu0 %v683
      %6013 = vmatpush.bf16.msra.mxu0 %v681
      %6014 = vmatpush.bf16.msra.mxu0 %v679
      %6015 = vmatmul.bf16.gmra.mxu0 %v5976
      %v6016 = vpop.f32.mrf.mxu0
      %v6017 = vadd.f32 %v5971, %v6016
      %v6018 = vpop.f32.mrf.mxu0
      %6019 = vdwg.mxu0
      %6020 = vmatpush.bf16.msra.mxu0 0
      %6021 = vmatpush.bf16.msra.mxu0 0
      %6022 = vmatpush.bf16.msra.mxu0 0
      %6023 = vmatpush.bf16.msra.mxu0 0
      %6024 = vmatpush.bf16.msra.mxu0 0
      %6025 = vmatpush.bf16.msra.mxu0 0
      %6026 = vmatpush.bf16.msra.mxu0 0
      %6027 = vmatpush.bf16.msra.mxu0 %v695
      %6028 = vmatmul.bf16.gmra.mxu0 %v5979
      %v6029 = vpop.f32.mrf.mxu0
      %v6030 = vadd.f32 %v6017, %v6029
      %v6031 = vpop.f32.mrf.mxu0
      %6032 = vdwg.mxu0
      %v6033 = vld [vmem:[%s7] sm:$0xf]
      %6035 = vset.pattern.permute.xlu0 0
      %6036 = vperm.xlu0 %6035, %v6033
      %v6037 = vpop.permute.xlu0 %6036
      %v6039 = vadd.f32 %v6004, %v6037
      %v6040 = vadd.f32 %v6030, %v6037
      %v6043 = vrot.slane %v6040, 4
      %vm6044 = vcmask 1043456
      %v6045 = vsel %vm6044, %v6039, %v6043
      %6047 = vst [vmem:[%s305] sm:$0xff] %v6045
      %p6048 = scmp.lt.s32.totalorder %s19, 1
      %s6049 = scalar_select %p6048, %s19, 1
      %s6050 = smul.addr %s6049, 2
      %s6051 = smul.addr %s6050, 4
      %s6052 = scalar_lea.vmem %s8, %s6051
      // Predicated region
      $region53: #{resblock_forward.1} parent=51 // pred_check
        %p6053 = pneg %p210
      $region54: #{resblock_forward.1} parent=51 // pred_check_branch
        %6055 = sbr.rel (%p6053) target = $region56
      $region55: #{resblock_forward.1} parent=51 // pred_region
        _
      $region56: #{resblock_forward.1} parent=51 // pred_fallthru
        _
    $region52: #{resblock_forward.1} parent=5 // pred_fallthru
      _
    %p6056 = scmp.le.s32.totalorder 2, %s14
    // Predicated region
    $region57: #{resblock_forward.1} parent=5 // pred_check
      %p6057 = pneg %p6056
    $region58: #{resblock_forward.1} parent=5 // pred_check_branch
      %6059 = sbr.rel (%p6057) target = $region60
    $region59: #{resblock_forward.1} parent=5 // pred_region
      %s6060 = ssub.s32 %s14, 2
      // Predicated region
      $region61: #{resblock_forward.1} parent=59 // pred_check
        %p6061 = pneg %p216
      $region62: #{resblock_forward.1} parent=59 // pred_check_branch
        %6063 = sbr.rel (%p6061) target = $region64
      $region63: #{resblock_forward.1} parent=59 // pred_region
        %p6064 = scmp.lt.s32.totalorder %s20, 1
        %s6065 = scalar_select %p6064, %s20, 1
        %s6066 = smul.addr %s6065, 2
        %s6067 = smul.addr %s6066, 4
        %s6068 = scalar_lea.vmem %s8, %s6067
      $region64: #{resblock_forward.1} parent=59 // pred_fallthru
        _
    $region60: #{resblock_forward.1} parent=5 // pred_fallthru
      _
  $region6: #{resblock_forward.1} parent=0 // loop_footer
    %s18 = sadd.s32 1, %s14
  $region7: #{resblock_forward.1} parent=0 // loop_footer_branch
    %13 = sbr.rel target = $region3
  $region8: #{resblock_forward.1} parent=0 // loop_exit
    _

</llo_original>
